<compile_context>
chip_gen: v7x
topology: tpu7x:2x2x1
jax: 0.10.0
libtpu: 0.0.40
codegen_flags: <defaults>
</compile_context>

<pallas_src>
import functools

import jax
import jax.numpy as jnp
from jax import lax
from jax.experimental import pallas as pl
from jax.experimental.pallas import tpu as pltpu

# ----- model hyper-parameters (small, consistent with the module) -----
EMBD_DIM = 32          # embd_dim
CONTEXT_SIZE = 8       # context_size
VOCAB_SIZE = 64
VOCAB_PAD = 128        # lane-dense padding for the logits store
N_LAYER = 2
N_HEAD = 4
HEAD_DIM = EMBD_DIM // N_HEAD
HIDDEN_DIM = 4 * EMBD_DIM
LN_EPS = 1e-5          # PyTorch nn.LayerNorm default eps


def _layernorm(x, g, b):
    # x: (..., C); g, b: (1, C). Biased variance like torch.nn.LayerNorm.
    mean = jnp.mean(x, axis=-1, keepdims=True)
    var = jnp.mean((x - mean) ** 2, axis=-1, keepdims=True)
    return (x - mean) * lax.rsqrt(var + LN_EPS) * g + b


# ---------------------------------------------------------------------------
# Fused kernel: embeddings + N_LAYER transformer blocks + final LN + LM head.
# One grid step = one batch BLOCK of BB sequences folded into sublanes
# (N = BB*T rows).  Every weight lives fully in VMEM (constant index_maps).
# ---------------------------------------------------------------------------
def gpt_kernel(idx_ref, tok_ref, pos_ref,
               wqkv_ref, wproj_ref, bproj_ref,
               ln1g_ref, ln1b_ref, ln2g_ref, ln2b_ref,
               fc1w_ref, fc1b_ref, fc2w_ref, fc2b_ref,
               lng_ref, lnb_ref, headw_ref, headb_ref,
               out_ref, *, seq_len):
    N = idx_ref.shape[0]               # BB * T rows (batch folded into sublanes)
    V, C = tok_ref.shape
    T = seq_len
    BB = N // T
    H, D = N_HEAD, HEAD_DIM

    # --- token embedding as one-hot matmul + pre-tiled position embedding ---
    ids = idx_ref[...]                                        # (N, 1) int32
    vocab_iota = lax.broadcasted_iota(jnp.int32, (N, V), 1)   # (N, V)
    onehot = (ids == vocab_iota).astype(jnp.float32)          # (N, V)
    x = jnp.dot(onehot, tok_ref[...],
                preferred_element_type=jnp.float32)           # (N, C)
    x = x + pos_ref[...]                                      # pos pre-tiled to (N, C)

    # --- causal mask, built once for all layers / sequences ---
    row = lax.broadcasted_iota(jnp.int32, (T, T), 0)
    col = lax.broadcasted_iota(jnp.int32, (T, T), 1)
    causal = (row >= col)[None, :, :]                         # (1, T, T)
    neg_inf = jnp.float32(-jnp.inf)
    scale = float(C) ** -0.5           # reference scales by embd_dim (C)

    for l in range(N_LAYER):
        # ---- attention: ONE fused (N, C) @ (C, 3C) QKV matmul ----
        h = _layernorm(x, ln1g_ref[l], ln1b_ref[l])           # (N, C)
        qkv = jnp.dot(h, wqkv_ref[l],
                      preferred_element_type=jnp.float32)     # (N, 3C)
        q = qkv[:, 0 * C:1 * C]
        k = qkv[:, 1 * C:2 * C]
        v = qkv[:, 2 * C:3 * C]

        def split_heads(z):
            # (N, C) -> (BB*H, T, D); rows stay grouped per sequence so the
            # causal mask is applied per (batch, head) slice.
            return jnp.stack(
                [z[b * T:(b + 1) * T, hh * D:(hh + 1) * D]
                 for b in range(BB) for hh in range(H)], axis=0)

        q3, k3, v3 = split_heads(q), split_heads(k), split_heads(v)

        # batched scores / softmax / PV over the (BB*H) leading axis
        s = jnp.einsum('ntd,nsd->nts', q3, k3,
                       preferred_element_type=jnp.float32) * scale
        s = jnp.where(causal, s, neg_inf)
        s = s - jnp.max(s, axis=-1, keepdims=True)
        e = jnp.exp(s)
        p = e / jnp.sum(e, axis=-1, keepdims=True)            # (BB*H, T, T)
        o3 = jnp.einsum('nts,nsd->ntd', p, v3,
                        preferred_element_type=jnp.float32)   # (BB*H, T, D)

        # concat heads along lanes, then ONE (N, C) @ (C, C) output projection
        o = jnp.concatenate(
            [jnp.concatenate([o3[b * H + hh] for hh in range(H)], axis=-1)
             for b in range(BB)], axis=0)                     # (N, C)
        x = x + jnp.dot(o, wproj_ref[l],
                        preferred_element_type=jnp.float32) + bproj_ref[l]

        # ---- feed-forward on LN2(x) ----
        h2 = _layernorm(x, ln2g_ref[l], ln2b_ref[l])
        f = jnp.dot(h2, fc1w_ref[l],
                    preferred_element_type=jnp.float32) + fc1b_ref[l]
        f = jnp.maximum(f, 0.0)
        x = x + jnp.dot(f, fc2w_ref[l],
                        preferred_element_type=jnp.float32) + fc2b_ref[l]

    # ---- final LayerNorm + LM head (lane-padded to 128 -> dense store) ----
    h = _layernorm(x, lng_ref[...], lnb_ref[...])
    out_ref[...] = (jnp.dot(h, headw_ref[...],
                            preferred_element_type=jnp.float32)
                    + headb_ref[...])


def _full_spec(shape):
    n = len(shape)
    return pl.BlockSpec(shape, lambda i, _n=n: (0,) * _n)


def _num_batch_blocks(batch):
    # v7x has 2 TensorCores per chip: a 2-way "parallel" grid keeps both busy.
    # v5e/v6e have a single TC, where one big step is strictly faster.
    try:
        kind = jax.devices()[0].device_kind.lower()
    except Exception:
        kind = ""
    if "v7" in kind and batch % 2 == 0:
        return 2
    return 1


@functools.partial(jax.jit, static_argnames=("num_batch_blocks",))
def gpt_forward_pallas(idx, params, num_batch_blocks=1):
    B, T = idx.shape
    BB = B // num_batch_blocks            # batch elements per grid step
    N = BB * T                            # rows (sublanes) per grid step
    idx_flat = idx.astype(jnp.int32).reshape(B * T, 1)
    pos_block = jnp.tile(params["pos_table"][:T], (BB, 1))    # (N, C)

    weight_args = [params["tok_table"], pos_block,
                   params["wqkv"], params["wproj"], params["bproj"],
                   params["ln1g"], params["ln1b"], params["ln2g"], params["ln2b"],
                   params["fc1w"], params["fc1b"], params["fc2w"], params["fc2b"],
                   params["lng"], params["lnb"],
                   params["head_w_pad"], params["head_b_pad"]]

    in_specs = [pl.BlockSpec((N, 1), lambda i: (i, 0))]
    in_specs += [_full_spec(w.shape) for w in weight_args]

    out = pl.pallas_call(
        functools.partial(gpt_kernel, seq_len=T),
        out_shape=jax.ShapeDtypeStruct((B * T, VOCAB_PAD), jnp.float32),
        grid=(num_batch_blocks,),
        in_specs=in_specs,
        out_specs=pl.BlockSpec((N, VOCAB_PAD), lambda i: (i, 0)),
        compiler_params=pltpu.CompilerParams(
            dimension_semantics=("parallel",)),
    )(idx_flat, *weight_args)
    # Return padded (…,128) logits (no extra XLA slice op); pad columns are 0.
    return out.reshape(B, T, VOCAB_PAD)


# ---------------------------------------------------------------------------
# Parameter init (deterministic, synthetic) and a pure-JAX reference that
# mirrors the PyTorch module structure (per-head Q/K/V, concat, project).
# ---------------------------------------------------------------------------
def init_params(key):
    ks = jax.random.split(key, 17)
    C, D = EMBD_DIM, HEAD_DIM
    p = {}
    p["tok_table"] = 0.02 * jax.random.normal(ks[0], (VOCAB_SIZE, C), jnp.float32)
    p["pos_table"] = 0.02 * jax.random.normal(ks[1], (CONTEXT_SIZE, C), jnp.float32)
    # Fused QKV weight, (in=C, out=3C): Q cols [0,C), K cols [C,2C), V cols
    # [2C,3C); each C-wide block is head-major (head h -> columns h*D:(h+1)*D).
    p["wqkv"] = 0.05 * jax.random.normal(ks[2], (N_LAYER, C, 3 * C), jnp.float32)
    # Output projection in (in, out) layout; rows are the head-concat order.
    p["wproj"] = 0.05 * jax.random.normal(ks[3], (N_LAYER, C, C), jnp.float32)
    p["bproj"] = 0.01 * jax.random.normal(ks[4], (N_LAYER, 1, C), jnp.float32)
    p["ln1g"] = 1.0 + 0.1 * jax.random.normal(ks[5], (N_LAYER, 1, C), jnp.float32)
    p["ln1b"] = 0.1 * jax.random.normal(ks[6], (N_LAYER, 1, C), jnp.float32)
    p["ln2g"] = 1.0 + 0.1 * jax.random.normal(ks[7], (N_LAYER, 1, C), jnp.float32)
    p["ln2b"] = 0.1 * jax.random.normal(ks[8], (N_LAYER, 1, C), jnp.float32)
    p["fc1w"] = 0.05 * jax.random.normal(ks[9], (N_LAYER, C, HIDDEN_DIM), jnp.float32)
    p["fc1b"] = 0.01 * jax.random.normal(ks[10], (N_LAYER, 1, HIDDEN_DIM), jnp.float32)
    p["fc2w"] = 0.05 * jax.random.normal(ks[11], (N_LAYER, HIDDEN_DIM, C), jnp.float32)
    p["fc2b"] = 0.01 * jax.random.normal(ks[12], (N_LAYER, 1, C), jnp.float32)
    p["lng"] = 1.0 + 0.1 * jax.random.normal(ks[13], (1, C), jnp.float32)
    p["lnb"] = 0.1 * jax.random.normal(ks[14], (1, C), jnp.float32)
    head_w = 0.05 * jax.random.normal(ks[15], (C, VOCAB_SIZE), jnp.float32)
    head_b = 0.01 * jax.random.normal(ks[16], (1, VOCAB_SIZE), jnp.float32)
    p["head_w_pad"] = jnp.pad(head_w, ((0, 0), (0, VOCAB_PAD - VOCAB_SIZE)))
    p["head_b_pad"] = jnp.pad(head_b, ((0, 0), (0, VOCAB_PAD - VOCAB_SIZE)))
    return p


def gpt_forward_ref(idx, p):
    # Pure-JAX reference mirroring the PyTorch module (eval-mode dropout).
    B, T = idx.shape
    C, H, D = EMBD_DIM, N_HEAD, HEAD_DIM
    x = p["tok_table"][idx] + p["pos_table"][:T][None]
    mask = jnp.tril(jnp.ones((T, T), jnp.float32))
    for l in range(N_LAYER):
        h = _layernorm(x, p["ln1g"][l], p["ln1b"][l])
        outs = []
        for hd in range(H):
            wq = p["wqkv"][l][:, 0 * C + hd * D:0 * C + (hd + 1) * D]
            wk = p["wqkv"][l][:, 1 * C + hd * D:1 * C + (hd + 1) * D]
            wv = p["wqkv"][l][:, 2 * C + hd * D:2 * C + (hd + 1) * D]
            q, k, v = h @ wq, h @ wk, h @ wv
            s = (q @ jnp.swapaxes(k, -1, -2)) * (C ** -0.5)
            s = jnp.where(mask == 0, -jnp.inf, s)
            outs.append(jax.nn.softmax(s, axis=-1) @ v)
        cat = jnp.concatenate(outs, axis=-1)                  # (B, T, C)
        x = x + cat @ p["wproj"][l] + p["bproj"][l]
        h2 = _layernorm(x, p["ln2g"][l], p["ln2b"][l])
        f = jnp.maximum(h2 @ p["fc1w"][l] + p["fc1b"][l], 0.0)
        x = x + f @ p["fc2w"][l] + p["fc2b"][l]
    h = _layernorm(x, p["lng"], p["lnb"])
    return h @ p["head_w_pad"][:, :VOCAB_SIZE] + p["head_b_pad"][:, :VOCAB_SIZE]


if __name__ == "__main__":
    key = jax.random.PRNGKey(0)
    k_idx, k_params = jax.random.split(key)
    params = init_params(k_params)

    B, T = 2, CONTEXT_SIZE
    idx = jax.random.randint(k_idx, (B, T), 0, VOCAB_SIZE, dtype=jnp.int32)

    nb = _num_batch_blocks(B)
    logits_pad = gpt_forward_pallas(idx, params, num_batch_blocks=nb)
    jax.block_until_ready(logits_pad)

    assert logits_pad.shape == (B, T, VOCAB_PAD), logits_pad.shape
    logits = logits_pad[..., :VOCAB_SIZE]     # pad columns are exact zeros
    assert bool(jnp.all(jnp.isfinite(logits)))

    ref = gpt_forward_ref(idx, params)
    err = float(jnp.max(jnp.abs(logits - ref)))
    assert err < 1e-3, err

    print("KERNEL_OK")
</pallas_src>

<mosaic_0001>
module attributes {stable_mosaic.version = 11 : i64} {
  func.func @gpt_kernel(%arg0: i32, %arg1: memref<16x1xi32, #tpu.memory_space<vmem>>, %arg2: memref<64x32xf32, #tpu.memory_space<vmem>>, %arg3: memref<16x32xf32, #tpu.memory_space<vmem>>, %arg4: memref<2x32x96xf32, #tpu.memory_space<vmem>>, %arg5: memref<2x32x32xf32, #tpu.memory_space<vmem>>, %arg6: memref<2x1x32xf32, #tpu.memory_space<vmem>>, %arg7: memref<2x1x32xf32, #tpu.memory_space<vmem>>, %arg8: memref<2x1x32xf32, #tpu.memory_space<vmem>>, %arg9: memref<2x1x32xf32, #tpu.memory_space<vmem>>, %arg10: memref<2x1x32xf32, #tpu.memory_space<vmem>>, %arg11: memref<2x32x128xf32, #tpu.memory_space<vmem>>, %arg12: memref<2x1x128xf32, #tpu.memory_space<vmem>>, %arg13: memref<2x128x32xf32, #tpu.memory_space<vmem>>, %arg14: memref<2x1x32xf32, #tpu.memory_space<vmem>>, %arg15: memref<1x32xf32, #tpu.memory_space<vmem>>, %arg16: memref<1x32xf32, #tpu.memory_space<vmem>>, %arg17: memref<32x128xf32, #tpu.memory_space<vmem>>, %arg18: memref<1x128xf32, #tpu.memory_space<vmem>>, %arg19: memref<16x128xf32, #tpu.memory_space<vmem>>) attributes {dimension_semantics = [#tpu.dimension_semantics<parallel>], iteration_bounds = array<i64: 1>, scalar_prefetch = 0 : i64, scratch_operands = 0 : i64, tpu.core_type = #tpu.core_type<tc>, window_params = [{transform_indices = @transform_0, window_bounds = array<i64: 16, 1>}, {pipeline_mode = #tpu.pipeline_mode<synchronous>, transform_indices = @transform_1, window_bounds = array<i64: 64, 32>}, {pipeline_mode = #tpu.pipeline_mode<synchronous>, transform_indices = @transform_2, window_bounds = array<i64: 16, 32>}, {pipeline_mode = #tpu.pipeline_mode<synchronous>, transform_indices = @transform_3, window_bounds = array<i64: 2, 32, 96>}, {pipeline_mode = #tpu.pipeline_mode<synchronous>, transform_indices = @transform_4, window_bounds = array<i64: 2, 32, 32>}, {pipeline_mode = #tpu.pipeline_mode<synchronous>, transform_indices = @transform_5, window_bounds = array<i64: 2, 1, 32>}, {pipeline_mode = #tpu.pipeline_mode<synchronous>, transform_indices = @transform_6, window_bounds = array<i64: 2, 1, 32>}, {pipeline_mode = #tpu.pipeline_mode<synchronous>, transform_indices = @transform_7, window_bounds = array<i64: 2, 1, 32>}, {pipeline_mode = #tpu.pipeline_mode<synchronous>, transform_indices = @transform_8, window_bounds = array<i64: 2, 1, 32>}, {pipeline_mode = #tpu.pipeline_mode<synchronous>, transform_indices = @transform_9, window_bounds = array<i64: 2, 1, 32>}, {pipeline_mode = #tpu.pipeline_mode<synchronous>, transform_indices = @transform_10, window_bounds = array<i64: 2, 32, 128>}, {pipeline_mode = #tpu.pipeline_mode<synchronous>, transform_indices = @transform_11, window_bounds = array<i64: 2, 1, 128>}, {pipeline_mode = #tpu.pipeline_mode<synchronous>, transform_indices = @transform_12, window_bounds = array<i64: 2, 128, 32>}, {pipeline_mode = #tpu.pipeline_mode<synchronous>, transform_indices = @transform_13, window_bounds = array<i64: 2, 1, 32>}, {pipeline_mode = #tpu.pipeline_mode<synchronous>, transform_indices = @transform_14, window_bounds = array<i64: 1, 32>}, {pipeline_mode = #tpu.pipeline_mode<synchronous>, transform_indices = @transform_15, window_bounds = array<i64: 1, 32>}, {pipeline_mode = #tpu.pipeline_mode<synchronous>, transform_indices = @transform_16, window_bounds = array<i64: 32, 128>}, {pipeline_mode = #tpu.pipeline_mode<synchronous>, transform_indices = @transform_17, window_bounds = array<i64: 1, 128>}, {transform_indices = @transform_18, window_bounds = array<i64: 16, 128>}]} {
    %c0 = arith.constant 0 : index
    %c0_0 = arith.constant 0 : index
    %0 = vector.load %arg1[%c0, %c0_0] : memref<16x1xi32, #tpu.memory_space<vmem>>, vector<16x1xi32>
    %1 = tpu.iota {dimensions = array<i32: 1>} : vector<16x64xi32>
    %2 = vector.broadcast %0 : vector<16x1xi32> to vector<16x64xi32>
    %3 = arith.cmpi eq, %2, %1 : vector<16x64xi32>
    %4 = arith.extui %3 : vector<16x64xi1> to vector<16x64xi32>
    %5 = arith.sitofp %4 : vector<16x64xi32> to vector<16x64xf32>
    %c0_1 = arith.constant 0 : index
    %c0_2 = arith.constant 0 : index
    %6 = vector.load %arg2[%c0_1, %c0_2] : memref<64x32xf32, #tpu.memory_space<vmem>>, vector<64x32xf32>
    %cst = arith.constant dense<0.000000e+00> : vector<16x32xf32>
    %7 = tpu.matmul %5, %6, %cst {dimension_numbers = #tpu.dot_dimension_numbers<[1], [0], [0], [1], [0, 0, 1, 1], [], []>} : vector<16x64xf32>, vector<64x32xf32>, vector<16x32xf32> -> vector<16x32xf32>
    %c0_3 = arith.constant 0 : index
    %c0_4 = arith.constant 0 : index
    %8 = vector.load %arg3[%c0_3, %c0_4] : memref<16x32xf32, #tpu.memory_space<vmem>>, vector<16x32xf32>
    %9 = arith.addf %7, %8 : vector<16x32xf32>
    %10 = tpu.iota {dimensions = array<i32: 0>} : vector<8x8xi32>
    %11 = tpu.iota {dimensions = array<i32: 1>} : vector<8x8xi32>
    %12 = arith.cmpi sge, %10, %11 : vector<8x8xi32>
    %13 = vector.shape_cast %12 : vector<8x8xi1> to vector<1x8x8xi1>
    %c0_5 = arith.constant 0 : index
    %c0_6 = arith.constant 0 : index
    %c0_7 = arith.constant 0 : index
    %14 = vector.load %arg7[%c0_5, %c0_6, %c0_7] : memref<2x1x32xf32, #tpu.memory_space<vmem>>, vector<1x1x32xf32>
    %15 = vector.shape_cast %14 : vector<1x1x32xf32> to vector<1x32xf32>
    %c0_8 = arith.constant 0 : index
    %c0_9 = arith.constant 0 : index
    %c0_10 = arith.constant 0 : index
    %16 = vector.load %arg8[%c0_8, %c0_9, %c0_10] : memref<2x1x32xf32, #tpu.memory_space<vmem>>, vector<1x1x32xf32>
    %17 = vector.shape_cast %16 : vector<1x1x32xf32> to vector<1x32xf32>
    %cst_11 = arith.constant dense<0.000000e+00> : vector<16xf32>
    %18 = vector.multi_reduction <add>, %9, %cst_11 [1] : vector<16x32xf32> to vector<16xf32>
    %19 = vector.shape_cast %18 : vector<16xf32> to vector<16x1xf32>
    %cst_12 = arith.constant 3.200000e+01 : f32
    %20 = vector.broadcast %cst_12 : f32 to vector<16x1xf32>
    %21 = arith.divf %19, %20 : vector<16x1xf32>
    %22 = vector.broadcast %21 : vector<16x1xf32> to vector<16x32xf32>
    %23 = arith.subf %9, %22 : vector<16x32xf32>
    %24 = arith.mulf %23, %23 : vector<16x32xf32>
    %cst_13 = arith.constant dense<0.000000e+00> : vector<16xf32>
    %25 = vector.multi_reduction <add>, %24, %cst_13 [1] : vector<16x32xf32> to vector<16xf32>
    %26 = vector.shape_cast %25 : vector<16xf32> to vector<16x1xf32>
    %cst_14 = arith.constant 3.200000e+01 : f32
    %27 = vector.broadcast %cst_14 : f32 to vector<16x1xf32>
    %28 = arith.divf %26, %27 : vector<16x1xf32>
    %29 = vector.broadcast %21 : vector<16x1xf32> to vector<16x32xf32>
    %30 = arith.subf %9, %29 : vector<16x32xf32>
    %cst_15 = arith.constant 9.99999974E-6 : f32
    %31 = vector.broadcast %cst_15 : f32 to vector<16x1xf32>
    %32 = arith.addf %28, %31 : vector<16x1xf32>
    %33 = math.rsqrt %32 : vector<16x1xf32>
    %34 = vector.broadcast %33 : vector<16x1xf32> to vector<16x32xf32>
    %35 = arith.mulf %30, %34 : vector<16x32xf32>
    %36 = vector.broadcast %15 : vector<1x32xf32> to vector<16x32xf32>
    %37 = arith.mulf %35, %36 : vector<16x32xf32>
    %38 = vector.broadcast %17 : vector<1x32xf32> to vector<16x32xf32>
    %39 = arith.addf %37, %38 : vector<16x32xf32>
    %c0_16 = arith.constant 0 : index
    %c0_17 = arith.constant 0 : index
    %c0_18 = arith.constant 0 : index
    %40 = vector.load %arg4[%c0_16, %c0_17, %c0_18] : memref<2x32x96xf32, #tpu.memory_space<vmem>>, vector<1x32x96xf32>
    %41 = vector.shape_cast %40 : vector<1x32x96xf32> to vector<32x96xf32>
    %cst_19 = arith.constant dense<0.000000e+00> : vector<16x96xf32>
    %42 = tpu.matmul %39, %41, %cst_19 {dimension_numbers = #tpu.dot_dimension_numbers<[1], [0], [0], [1], [0, 0, 1, 1], [], []>} : vector<16x32xf32>, vector<32x96xf32>, vector<16x96xf32> -> vector<16x96xf32>
    %43 = vector.extract_strided_slice %42 {offsets = [0, 0], sizes = [16, 32], strides = [1, 1]} : vector<16x96xf32> to vector<16x32xf32>
    %44 = vector.extract_strided_slice %42 {offsets = [0, 32], sizes = [16, 32], strides = [1, 1]} : vector<16x96xf32> to vector<16x32xf32>
    %45 = vector.extract_strided_slice %42 {offsets = [0, 64], sizes = [16, 32], strides = [1, 1]} : vector<16x96xf32> to vector<16x32xf32>
    %46 = vector.extract_strided_slice %43 {offsets = [0, 0], sizes = [8, 8], strides = [1, 1]} : vector<16x32xf32> to vector<8x8xf32>
    %47 = vector.extract_strided_slice %43 {offsets = [0, 8], sizes = [8, 8], strides = [1, 1]} : vector<16x32xf32> to vector<8x8xf32>
    %48 = vector.extract_strided_slice %43 {offsets = [0, 16], sizes = [8, 8], strides = [1, 1]} : vector<16x32xf32> to vector<8x8xf32>
    %49 = vector.extract_strided_slice %43 {offsets = [0, 24], sizes = [8, 8], strides = [1, 1]} : vector<16x32xf32> to vector<8x8xf32>
    %50 = vector.extract_strided_slice %43 {offsets = [8, 0], sizes = [8, 8], strides = [1, 1]} : vector<16x32xf32> to vector<8x8xf32>
    %51 = vector.extract_strided_slice %43 {offsets = [8, 8], sizes = [8, 8], strides = [1, 1]} : vector<16x32xf32> to vector<8x8xf32>
    %52 = vector.extract_strided_slice %43 {offsets = [8, 16], sizes = [8, 8], strides = [1, 1]} : vector<16x32xf32> to vector<8x8xf32>
    %53 = vector.extract_strided_slice %43 {offsets = [8, 24], sizes = [8, 8], strides = [1, 1]} : vector<16x32xf32> to vector<8x8xf32>
    %54 = vector.shape_cast %46 : vector<8x8xf32> to vector<1x8x8xf32>
    %55 = vector.shape_cast %47 : vector<8x8xf32> to vector<1x8x8xf32>
    %56 = vector.shape_cast %48 : vector<8x8xf32> to vector<1x8x8xf32>
    %57 = vector.shape_cast %49 : vector<8x8xf32> to vector<1x8x8xf32>
    %58 = vector.shape_cast %50 : vector<8x8xf32> to vector<1x8x8xf32>
    %59 = vector.shape_cast %51 : vector<8x8xf32> to vector<1x8x8xf32>
    %60 = vector.shape_cast %52 : vector<8x8xf32> to vector<1x8x8xf32>
    %61 = vector.shape_cast %53 : vector<8x8xf32> to vector<1x8x8xf32>
    %62 = tpu.concatenate %54, %55, %56, %57, %58, %59, %60, %61 in 0 : vector<1x8x8xf32>, vector<1x8x8xf32>, vector<1x8x8xf32>, vector<1x8x8xf32>, vector<1x8x8xf32>, vector<1x8x8xf32>, vector<1x8x8xf32>, vector<1x8x8xf32> -> vector<8x8x8xf32>
    %63 = vector.extract_strided_slice %44 {offsets = [0, 0], sizes = [8, 8], strides = [1, 1]} : vector<16x32xf32> to vector<8x8xf32>
    %64 = vector.extract_strided_slice %44 {offsets = [0, 8], sizes = [8, 8], strides = [1, 1]} : vector<16x32xf32> to vector<8x8xf32>
    %65 = vector.extract_strided_slice %44 {offsets = [0, 16], sizes = [8, 8], strides = [1, 1]} : vector<16x32xf32> to vector<8x8xf32>
    %66 = vector.extract_strided_slice %44 {offsets = [0, 24], sizes = [8, 8], strides = [1, 1]} : vector<16x32xf32> to vector<8x8xf32>
    %67 = vector.extract_strided_slice %44 {offsets = [8, 0], sizes = [8, 8], strides = [1, 1]} : vector<16x32xf32> to vector<8x8xf32>
    %68 = vector.extract_strided_slice %44 {offsets = [8, 8], sizes = [8, 8], strides = [1, 1]} : vector<16x32xf32> to vector<8x8xf32>
    %69 = vector.extract_strided_slice %44 {offsets = [8, 16], sizes = [8, 8], strides = [1, 1]} : vector<16x32xf32> to vector<8x8xf32>
    %70 = vector.extract_strided_slice %44 {offsets = [8, 24], sizes = [8, 8], strides = [1, 1]} : vector<16x32xf32> to vector<8x8xf32>
    %71 = vector.shape_cast %63 : vector<8x8xf32> to vector<1x8x8xf32>
    %72 = vector.shape_cast %64 : vector<8x8xf32> to vector<1x8x8xf32>
    %73 = vector.shape_cast %65 : vector<8x8xf32> to vector<1x8x8xf32>
    %74 = vector.shape_cast %66 : vector<8x8xf32> to vector<1x8x8xf32>
    %75 = vector.shape_cast %67 : vector<8x8xf32> to vector<1x8x8xf32>
    %76 = vector.shape_cast %68 : vector<8x8xf32> to vector<1x8x8xf32>
    %77 = vector.shape_cast %69 : vector<8x8xf32> to vector<1x8x8xf32>
    %78 = vector.shape_cast %70 : vector<8x8xf32> to vector<1x8x8xf32>
    %79 = tpu.concatenate %71, %72, %73, %74, %75, %76, %77, %78 in 0 : vector<1x8x8xf32>, vector<1x8x8xf32>, vector<1x8x8xf32>, vector<1x8x8xf32>, vector<1x8x8xf32>, vector<1x8x8xf32>, vector<1x8x8xf32>, vector<1x8x8xf32> -> vector<8x8x8xf32>
    %80 = vector.extract_strided_slice %45 {offsets = [0, 0], sizes = [8, 8], strides = [1, 1]} : vector<16x32xf32> to vector<8x8xf32>
    %81 = vector.extract_strided_slice %45 {offsets = [0, 8], sizes = [8, 8], strides = [1, 1]} : vector<16x32xf32> to vector<8x8xf32>
    %82 = vector.extract_strided_slice %45 {offsets = [0, 16], sizes = [8, 8], strides = [1, 1]} : vector<16x32xf32> to vector<8x8xf32>
    %83 = vector.extract_strided_slice %45 {offsets = [0, 24], sizes = [8, 8], strides = [1, 1]} : vector<16x32xf32> to vector<8x8xf32>
    %84 = vector.extract_strided_slice %45 {offsets = [8, 0], sizes = [8, 8], strides = [1, 1]} : vector<16x32xf32> to vector<8x8xf32>
    %85 = vector.extract_strided_slice %45 {offsets = [8, 8], sizes = [8, 8], strides = [1, 1]} : vector<16x32xf32> to vector<8x8xf32>
    %86 = vector.extract_strided_slice %45 {offsets = [8, 16], sizes = [8, 8], strides = [1, 1]} : vector<16x32xf32> to vector<8x8xf32>
    %87 = vector.extract_strided_slice %45 {offsets = [8, 24], sizes = [8, 8], strides = [1, 1]} : vector<16x32xf32> to vector<8x8xf32>
    %88 = vector.shape_cast %80 : vector<8x8xf32> to vector<1x8x8xf32>
    %89 = vector.shape_cast %81 : vector<8x8xf32> to vector<1x8x8xf32>
    %90 = vector.shape_cast %82 : vector<8x8xf32> to vector<1x8x8xf32>
    %91 = vector.shape_cast %83 : vector<8x8xf32> to vector<1x8x8xf32>
    %92 = vector.shape_cast %84 : vector<8x8xf32> to vector<1x8x8xf32>
    %93 = vector.shape_cast %85 : vector<8x8xf32> to vector<1x8x8xf32>
    %94 = vector.shape_cast %86 : vector<8x8xf32> to vector<1x8x8xf32>
    %95 = vector.shape_cast %87 : vector<8x8xf32> to vector<1x8x8xf32>
    %96 = tpu.concatenate %88, %89, %90, %91, %92, %93, %94, %95 in 0 : vector<1x8x8xf32>, vector<1x8x8xf32>, vector<1x8x8xf32>, vector<1x8x8xf32>, vector<1x8x8xf32>, vector<1x8x8xf32>, vector<1x8x8xf32>, vector<1x8x8xf32> -> vector<8x8x8xf32>
    "tpu.trace_start"() <{level = 10 : i32, message = "ntd,nsd->nts"}> : () -> ()
    %cst_20 = arith.constant dense<0.000000e+00> : vector<8x8x8xf32>
    %97 = tpu.matmul %62, %79, %cst_20 {dimension_numbers = #tpu.dot_dimension_numbers<[2], [2], [1], [1], [0, 0, 0, 1, 1, 1], [0], [0]>} : vector<8x8x8xf32>, vector<8x8x8xf32>, vector<8x8x8xf32> -> vector<8x8x8xf32>
    "tpu.trace_stop"() : () -> ()
    %cst_21 = arith.constant 0.176776692 : f32
    %98 = vector.broadcast %cst_21 : f32 to vector<8x8x8xf32>
    %99 = arith.mulf %97, %98 : vector<8x8x8xf32>
    %cst_22 = arith.constant 0xFF800000 : f32
    %100 = vector.shape_cast %13 : vector<1x8x8xi1> to vector<1x8x8xi1>
    %101 = vector.broadcast %100 : vector<1x8x8xi1> to vector<8x8x8xi1>
    %102 = vector.broadcast %cst_22 : f32 to vector<8x8x8xf32>
    %103 = arith.select %101, %99, %102 : vector<8x8x8xi1>, vector<8x8x8xf32>
    %cst_23 = arith.constant dense<0xFF800000> : vector<8x8xf32>
    %104 = vector.multi_reduction <maximumf>, %103, %cst_23 [2] : vector<8x8x8xf32> to vector<8x8xf32>
    %105 = vector.shape_cast %104 : vector<8x8xf32> to vector<8x8x1xf32>
    %106 = vector.broadcast %105 : vector<8x8x1xf32> to vector<8x8x8xf32>
    %107 = arith.subf %103, %106 : vector<8x8x8xf32>
    %108 = math.exp %107 : vector<8x8x8xf32>
    %cst_24 = arith.constant dense<0.000000e+00> : vector<8x8xf32>
    %109 = vector.multi_reduction <add>, %108, %cst_24 [2] : vector<8x8x8xf32> to vector<8x8xf32>
    %110 = vector.shape_cast %109 : vector<8x8xf32> to vector<8x8x1xf32>
    %111 = vector.broadcast %110 : vector<8x8x1xf32> to vector<8x8x8xf32>
    %112 = arith.divf %108, %111 : vector<8x8x8xf32>
    "tpu.trace_start"() <{level = 10 : i32, message = "nts,nsd->ntd"}> : () -> ()
    %cst_25 = arith.constant dense<0.000000e+00> : vector<8x8x8xf32>
    %113 = tpu.matmul %112, %96, %cst_25 {dimension_numbers = #tpu.dot_dimension_numbers<[2], [1], [1], [2], [0, 0, 0, 1, 1, 2], [0], [0]>} : vector<8x8x8xf32>, vector<8x8x8xf32>, vector<8x8x8xf32> -> vector<8x8x8xf32>
    "tpu.trace_stop"() : () -> ()
    %114 = vector.extract_strided_slice %113 {offsets = [0, 0, 0], sizes = [1, 8, 8], strides = [1, 1, 1]} : vector<8x8x8xf32> to vector<1x8x8xf32>
    %115 = vector.shape_cast %114 : vector<1x8x8xf32> to vector<8x8xf32>
    %116 = vector.extract_strided_slice %113 {offsets = [1, 0, 0], sizes = [1, 8, 8], strides = [1, 1, 1]} : vector<8x8x8xf32> to vector<1x8x8xf32>
    %117 = vector.shape_cast %116 : vector<1x8x8xf32> to vector<8x8xf32>
    %118 = vector.extract_strided_slice %113 {offsets = [2, 0, 0], sizes = [1, 8, 8], strides = [1, 1, 1]} : vector<8x8x8xf32> to vector<1x8x8xf32>
    %119 = vector.shape_cast %118 : vector<1x8x8xf32> to vector<8x8xf32>
    %120 = vector.extract_strided_slice %113 {offsets = [3, 0, 0], sizes = [1, 8, 8], strides = [1, 1, 1]} : vector<8x8x8xf32> to vector<1x8x8xf32>
    %121 = vector.shape_cast %120 : vector<1x8x8xf32> to vector<8x8xf32>
    %122 = tpu.concatenate %115, %117, %119, %121 in 1 : vector<8x8xf32>, vector<8x8xf32>, vector<8x8xf32>, vector<8x8xf32> -> vector<8x32xf32>
    %123 = vector.extract_strided_slice %113 {offsets = [4, 0, 0], sizes = [1, 8, 8], strides = [1, 1, 1]} : vector<8x8x8xf32> to vector<1x8x8xf32>
    %124 = vector.shape_cast %123 : vector<1x8x8xf32> to vector<8x8xf32>
    %125 = vector.extract_strided_slice %113 {offsets = [5, 0, 0], sizes = [1, 8, 8], strides = [1, 1, 1]} : vector<8x8x8xf32> to vector<1x8x8xf32>
    %126 = vector.shape_cast %125 : vector<1x8x8xf32> to vector<8x8xf32>
    %127 = vector.extract_strided_slice %113 {offsets = [6, 0, 0], sizes = [1, 8, 8], strides = [1, 1, 1]} : vector<8x8x8xf32> to vector<1x8x8xf32>
    %128 = vector.shape_cast %127 : vector<1x8x8xf32> to vector<8x8xf32>
    %129 = vector.extract_strided_slice %113 {offsets = [7, 0, 0], sizes = [1, 8, 8], strides = [1, 1, 1]} : vector<8x8x8xf32> to vector<1x8x8xf32>
    %130 = vector.shape_cast %129 : vector<1x8x8xf32> to vector<8x8xf32>
    %131 = tpu.concatenate %124, %126, %128, %130 in 1 : vector<8x8xf32>, vector<8x8xf32>, vector<8x8xf32>, vector<8x8xf32> -> vector<8x32xf32>
    %132 = tpu.concatenate %122, %131 in 0 : vector<8x32xf32>, vector<8x32xf32> -> vector<16x32xf32>
    %c0_26 = arith.constant 0 : index
    %c0_27 = arith.constant 0 : index
    %c0_28 = arith.constant 0 : index
    %133 = vector.load %arg5[%c0_26, %c0_27, %c0_28] : memref<2x32x32xf32, #tpu.memory_space<vmem>>, vector<1x32x32xf32>
    %134 = vector.shape_cast %133 : vector<1x32x32xf32> to vector<32x32xf32>
    %cst_29 = arith.constant dense<0.000000e+00> : vector<16x32xf32>
    %135 = tpu.matmul %132, %134, %cst_29 {dimension_numbers = #tpu.dot_dimension_numbers<[1], [0], [0], [1], [0, 0, 1, 1], [], []>} : vector<16x32xf32>, vector<32x32xf32>, vector<16x32xf32> -> vector<16x32xf32>
    %136 = arith.addf %9, %135 : vector<16x32xf32>
    %c0_30 = arith.constant 0 : index
    %c0_31 = arith.constant 0 : index
    %c0_32 = arith.constant 0 : index
    %137 = vector.load %arg6[%c0_30, %c0_31, %c0_32] : memref<2x1x32xf32, #tpu.memory_space<vmem>>, vector<1x1x32xf32>
    %138 = vector.shape_cast %137 : vector<1x1x32xf32> to vector<1x32xf32>
    %139 = vector.broadcast %138 : vector<1x32xf32> to vector<16x32xf32>
    %140 = arith.addf %136, %139 : vector<16x32xf32>
    %c0_33 = arith.constant 0 : index
    %c0_34 = arith.constant 0 : index
    %c0_35 = arith.constant 0 : index
    %141 = vector.load %arg9[%c0_33, %c0_34, %c0_35] : memref<2x1x32xf32, #tpu.memory_space<vmem>>, vector<1x1x32xf32>
    %142 = vector.shape_cast %141 : vector<1x1x32xf32> to vector<1x32xf32>
    %c0_36 = arith.constant 0 : index
    %c0_37 = arith.constant 0 : index
    %c0_38 = arith.constant 0 : index
    %143 = vector.load %arg10[%c0_36, %c0_37, %c0_38] : memref<2x1x32xf32, #tpu.memory_space<vmem>>, vector<1x1x32xf32>
    %144 = vector.shape_cast %143 : vector<1x1x32xf32> to vector<1x32xf32>
    %cst_39 = arith.constant dense<0.000000e+00> : vector<16xf32>
    %145 = vector.multi_reduction <add>, %140, %cst_39 [1] : vector<16x32xf32> to vector<16xf32>
    %146 = vector.shape_cast %145 : vector<16xf32> to vector<16x1xf32>
    %cst_40 = arith.constant 3.200000e+01 : f32
    %147 = vector.broadcast %cst_40 : f32 to vector<16x1xf32>
    %148 = arith.divf %146, %147 : vector<16x1xf32>
    %149 = vector.broadcast %148 : vector<16x1xf32> to vector<16x32xf32>
    %150 = arith.subf %140, %149 : vector<16x32xf32>
    %151 = arith.mulf %150, %150 : vector<16x32xf32>
    %cst_41 = arith.constant dense<0.000000e+00> : vector<16xf32>
    %152 = vector.multi_reduction <add>, %151, %cst_41 [1] : vector<16x32xf32> to vector<16xf32>
    %153 = vector.shape_cast %152 : vector<16xf32> to vector<16x1xf32>
    %cst_42 = arith.constant 3.200000e+01 : f32
    %154 = vector.broadcast %cst_42 : f32 to vector<16x1xf32>
    %155 = arith.divf %153, %154 : vector<16x1xf32>
    %156 = vector.broadcast %148 : vector<16x1xf32> to vector<16x32xf32>
    %157 = arith.subf %140, %156 : vector<16x32xf32>
    %cst_43 = arith.constant 9.99999974E-6 : f32
    %158 = vector.broadcast %cst_43 : f32 to vector<16x1xf32>
    %159 = arith.addf %155, %158 : vector<16x1xf32>
    %160 = math.rsqrt %159 : vector<16x1xf32>
    %161 = vector.broadcast %160 : vector<16x1xf32> to vector<16x32xf32>
    %162 = arith.mulf %157, %161 : vector<16x32xf32>
    %163 = vector.broadcast %142 : vector<1x32xf32> to vector<16x32xf32>
    %164 = arith.mulf %162, %163 : vector<16x32xf32>
    %165 = vector.broadcast %144 : vector<1x32xf32> to vector<16x32xf32>
    %166 = arith.addf %164, %165 : vector<16x32xf32>
    %c0_44 = arith.constant 0 : index
    %c0_45 = arith.constant 0 : index
    %c0_46 = arith.constant 0 : index
    %167 = vector.load %arg11[%c0_44, %c0_45, %c0_46] : memref<2x32x128xf32, #tpu.memory_space<vmem>>, vector<1x32x128xf32>
    %168 = vector.shape_cast %167 : vector<1x32x128xf32> to vector<32x128xf32>
    %cst_47 = arith.constant dense<0.000000e+00> : vector<16x128xf32>
    %169 = tpu.matmul %166, %168, %cst_47 {dimension_numbers = #tpu.dot_dimension_numbers<[1], [0], [0], [1], [0, 0, 1, 1], [], []>} : vector<16x32xf32>, vector<32x128xf32>, vector<16x128xf32> -> vector<16x128xf32>
    %c0_48 = arith.constant 0 : index
    %c0_49 = arith.constant 0 : index
    %c0_50 = arith.constant 0 : index
    %170 = vector.load %arg12[%c0_48, %c0_49, %c0_50] : memref<2x1x128xf32, #tpu.memory_space<vmem>>, vector<1x1x128xf32>
    %171 = vector.shape_cast %170 : vector<1x1x128xf32> to vector<1x128xf32>
    %172 = vector.broadcast %171 : vector<1x128xf32> to vector<16x128xf32>
    %173 = arith.addf %169, %172 : vector<16x128xf32>
    %cst_51 = arith.constant 0.000000e+00 : f32
    %174 = vector.broadcast %cst_51 : f32 to vector<16x128xf32>
    %175 = arith.maximumf %173, %174 : vector<16x128xf32>
    %c0_52 = arith.constant 0 : index
    %c0_53 = arith.constant 0 : index
    %c0_54 = arith.constant 0 : index
    %176 = vector.load %arg13[%c0_52, %c0_53, %c0_54] : memref<2x128x32xf32, #tpu.memory_space<vmem>>, vector<1x128x32xf32>
    %177 = vector.shape_cast %176 : vector<1x128x32xf32> to vector<128x32xf32>
    %cst_55 = arith.constant dense<0.000000e+00> : vector<16x32xf32>
    %178 = tpu.matmul %175, %177, %cst_55 {dimension_numbers = #tpu.dot_dimension_numbers<[1], [0], [0], [1], [0, 0, 1, 1], [], []>} : vector<16x128xf32>, vector<128x32xf32>, vector<16x32xf32> -> vector<16x32xf32>
    %179 = arith.addf %140, %178 : vector<16x32xf32>
    %c0_56 = arith.constant 0 : index
    %c0_57 = arith.constant 0 : index
    %c0_58 = arith.constant 0 : index
    %180 = vector.load %arg14[%c0_56, %c0_57, %c0_58] : memref<2x1x32xf32, #tpu.memory_space<vmem>>, vector<1x1x32xf32>
    %181 = vector.shape_cast %180 : vector<1x1x32xf32> to vector<1x32xf32>
    %182 = vector.broadcast %181 : vector<1x32xf32> to vector<16x32xf32>
    %183 = arith.addf %179, %182 : vector<16x32xf32>
    %c1 = arith.constant 1 : index
    %c0_59 = arith.constant 0 : index
    %c0_60 = arith.constant 0 : index
    %184 = vector.load %arg7[%c1, %c0_59, %c0_60] : memref<2x1x32xf32, #tpu.memory_space<vmem>>, vector<1x1x32xf32>
    %185 = vector.shape_cast %184 : vector<1x1x32xf32> to vector<1x32xf32>
    %c1_61 = arith.constant 1 : index
    %c0_62 = arith.constant 0 : index
    %c0_63 = arith.constant 0 : index
    %186 = vector.load %arg8[%c1_61, %c0_62, %c0_63] : memref<2x1x32xf32, #tpu.memory_space<vmem>>, vector<1x1x32xf32>
    %187 = vector.shape_cast %186 : vector<1x1x32xf32> to vector<1x32xf32>
    %cst_64 = arith.constant dense<0.000000e+00> : vector<16xf32>
    %188 = vector.multi_reduction <add>, %183, %cst_64 [1] : vector<16x32xf32> to vector<16xf32>
    %189 = vector.shape_cast %188 : vector<16xf32> to vector<16x1xf32>
    %cst_65 = arith.constant 3.200000e+01 : f32
    %190 = vector.broadcast %cst_65 : f32 to vector<16x1xf32>
    %191 = arith.divf %189, %190 : vector<16x1xf32>
    %192 = vector.broadcast %191 : vector<16x1xf32> to vector<16x32xf32>
    %193 = arith.subf %183, %192 : vector<16x32xf32>
    %194 = arith.mulf %193, %193 : vector<16x32xf32>
    %cst_66 = arith.constant dense<0.000000e+00> : vector<16xf32>
    %195 = vector.multi_reduction <add>, %194, %cst_66 [1] : vector<16x32xf32> to vector<16xf32>
    %196 = vector.shape_cast %195 : vector<16xf32> to vector<16x1xf32>
    %cst_67 = arith.constant 3.200000e+01 : f32
    %197 = vector.broadcast %cst_67 : f32 to vector<16x1xf32>
    %198 = arith.divf %196, %197 : vector<16x1xf32>
    %199 = vector.broadcast %191 : vector<16x1xf32> to vector<16x32xf32>
    %200 = arith.subf %183, %199 : vector<16x32xf32>
    %cst_68 = arith.constant 9.99999974E-6 : f32
    %201 = vector.broadcast %cst_68 : f32 to vector<16x1xf32>
    %202 = arith.addf %198, %201 : vector<16x1xf32>
    %203 = math.rsqrt %202 : vector<16x1xf32>
    %204 = vector.broadcast %203 : vector<16x1xf32> to vector<16x32xf32>
    %205 = arith.mulf %200, %204 : vector<16x32xf32>
    %206 = vector.broadcast %185 : vector<1x32xf32> to vector<16x32xf32>
    %207 = arith.mulf %205, %206 : vector<16x32xf32>
    %208 = vector.broadcast %187 : vector<1x32xf32> to vector<16x32xf32>
    %209 = arith.addf %207, %208 : vector<16x32xf32>
    %c1_69 = arith.constant 1 : index
    %c0_70 = arith.constant 0 : index
    %c0_71 = arith.constant 0 : index
    %210 = vector.load %arg4[%c1_69, %c0_70, %c0_71] : memref<2x32x96xf32, #tpu.memory_space<vmem>>, vector<1x32x96xf32>
    %211 = vector.shape_cast %210 : vector<1x32x96xf32> to vector<32x96xf32>
    %cst_72 = arith.constant dense<0.000000e+00> : vector<16x96xf32>
    %212 = tpu.matmul %209, %211, %cst_72 {dimension_numbers = #tpu.dot_dimension_numbers<[1], [0], [0], [1], [0, 0, 1, 1], [], []>} : vector<16x32xf32>, vector<32x96xf32>, vector<16x96xf32> -> vector<16x96xf32>
    %213 = vector.extract_strided_slice %212 {offsets = [0, 0], sizes = [16, 32], strides = [1, 1]} : vector<16x96xf32> to vector<16x32xf32>
    %214 = vector.extract_strided_slice %212 {offsets = [0, 32], sizes = [16, 32], strides = [1, 1]} : vector<16x96xf32> to vector<16x32xf32>
    %215 = vector.extract_strided_slice %212 {offsets = [0, 64], sizes = [16, 32], strides = [1, 1]} : vector<16x96xf32> to vector<16x32xf32>
    %216 = vector.extract_strided_slice %213 {offsets = [0, 0], sizes = [8, 8], strides = [1, 1]} : vector<16x32xf32> to vector<8x8xf32>
    %217 = vector.extract_strided_slice %213 {offsets = [0, 8], sizes = [8, 8], strides = [1, 1]} : vector<16x32xf32> to vector<8x8xf32>
    %218 = vector.extract_strided_slice %213 {offsets = [0, 16], sizes = [8, 8], strides = [1, 1]} : vector<16x32xf32> to vector<8x8xf32>
    %219 = vector.extract_strided_slice %213 {offsets = [0, 24], sizes = [8, 8], strides = [1, 1]} : vector<16x32xf32> to vector<8x8xf32>
    %220 = vector.extract_strided_slice %213 {offsets = [8, 0], sizes = [8, 8], strides = [1, 1]} : vector<16x32xf32> to vector<8x8xf32>
    %221 = vector.extract_strided_slice %213 {offsets = [8, 8], sizes = [8, 8], strides = [1, 1]} : vector<16x32xf32> to vector<8x8xf32>
    %222 = vector.extract_strided_slice %213 {offsets = [8, 16], sizes = [8, 8], strides = [1, 1]} : vector<16x32xf32> to vector<8x8xf32>
    %223 = vector.extract_strided_slice %213 {offsets = [8, 24], sizes = [8, 8], strides = [1, 1]} : vector<16x32xf32> to vector<8x8xf32>
    %224 = vector.shape_cast %216 : vector<8x8xf32> to vector<1x8x8xf32>
    %225 = vector.shape_cast %217 : vector<8x8xf32> to vector<1x8x8xf32>
    %226 = vector.shape_cast %218 : vector<8x8xf32> to vector<1x8x8xf32>
    %227 = vector.shape_cast %219 : vector<8x8xf32> to vector<1x8x8xf32>
    %228 = vector.shape_cast %220 : vector<8x8xf32> to vector<1x8x8xf32>
    %229 = vector.shape_cast %221 : vector<8x8xf32> to vector<1x8x8xf32>
    %230 = vector.shape_cast %222 : vector<8x8xf32> to vector<1x8x8xf32>
    %231 = vector.shape_cast %223 : vector<8x8xf32> to vector<1x8x8xf32>
    %232 = tpu.concatenate %224, %225, %226, %227, %228, %229, %230, %231 in 0 : vector<1x8x8xf32>, vector<1x8x8xf32>, vector<1x8x8xf32>, vector<1x8x8xf32>, vector<1x8x8xf32>, vector<1x8x8xf32>, vector<1x8x8xf32>, vector<1x8x8xf32> -> vector<8x8x8xf32>
    %233 = vector.extract_strided_slice %214 {offsets = [0, 0], sizes = [8, 8], strides = [1, 1]} : vector<16x32xf32> to vector<8x8xf32>
    %234 = vector.extract_strided_slice %214 {offsets = [0, 8], sizes = [8, 8], strides = [1, 1]} : vector<16x32xf32> to vector<8x8xf32>
    %235 = vector.extract_strided_slice %214 {offsets = [0, 16], sizes = [8, 8], strides = [1, 1]} : vector<16x32xf32> to vector<8x8xf32>
    %236 = vector.extract_strided_slice %214 {offsets = [0, 24], sizes = [8, 8], strides = [1, 1]} : vector<16x32xf32> to vector<8x8xf32>
    %237 = vector.extract_strided_slice %214 {offsets = [8, 0], sizes = [8, 8], strides = [1, 1]} : vector<16x32xf32> to vector<8x8xf32>
    %238 = vector.extract_strided_slice %214 {offsets = [8, 8], sizes = [8, 8], strides = [1, 1]} : vector<16x32xf32> to vector<8x8xf32>
    %239 = vector.extract_strided_slice %214 {offsets = [8, 16], sizes = [8, 8], strides = [1, 1]} : vector<16x32xf32> to vector<8x8xf32>
    %240 = vector.extract_strided_slice %214 {offsets = [8, 24], sizes = [8, 8], strides = [1, 1]} : vector<16x32xf32> to vector<8x8xf32>
    %241 = vector.shape_cast %233 : vector<8x8xf32> to vector<1x8x8xf32>
    %242 = vector.shape_cast %234 : vector<8x8xf32> to vector<1x8x8xf32>
    %243 = vector.shape_cast %235 : vector<8x8xf32> to vector<1x8x8xf32>
    %244 = vector.shape_cast %236 : vector<8x8xf32> to vector<1x8x8xf32>
    %245 = vector.shape_cast %237 : vector<8x8xf32> to vector<1x8x8xf32>
    %246 = vector.shape_cast %238 : vector<8x8xf32> to vector<1x8x8xf32>
    %247 = vector.shape_cast %239 : vector<8x8xf32> to vector<1x8x8xf32>
    %248 = vector.shape_cast %240 : vector<8x8xf32> to vector<1x8x8xf32>
    %249 = tpu.concatenate %241, %242, %243, %244, %245, %246, %247, %248 in 0 : vector<1x8x8xf32>, vector<1x8x8xf32>, vector<1x8x8xf32>, vector<1x8x8xf32>, vector<1x8x8xf32>, vector<1x8x8xf32>, vector<1x8x8xf32>, vector<1x8x8xf32> -> vector<8x8x8xf32>
    %250 = vector.extract_strided_slice %215 {offsets = [0, 0], sizes = [8, 8], strides = [1, 1]} : vector<16x32xf32> to vector<8x8xf32>
    %251 = vector.extract_strided_slice %215 {offsets = [0, 8], sizes = [8, 8], strides = [1, 1]} : vector<16x32xf32> to vector<8x8xf32>
    %252 = vector.extract_strided_slice %215 {offsets = [0, 16], sizes = [8, 8], strides = [1, 1]} : vector<16x32xf32> to vector<8x8xf32>
    %253 = vector.extract_strided_slice %215 {offsets = [0, 24], sizes = [8, 8], strides = [1, 1]} : vector<16x32xf32> to vector<8x8xf32>
    %254 = vector.extract_strided_slice %215 {offsets = [8, 0], sizes = [8, 8], strides = [1, 1]} : vector<16x32xf32> to vector<8x8xf32>
    %255 = vector.extract_strided_slice %215 {offsets = [8, 8], sizes = [8, 8], strides = [1, 1]} : vector<16x32xf32> to vector<8x8xf32>
    %256 = vector.extract_strided_slice %215 {offsets = [8, 16], sizes = [8, 8], strides = [1, 1]} : vector<16x32xf32> to vector<8x8xf32>
    %257 = vector.extract_strided_slice %215 {offsets = [8, 24], sizes = [8, 8], strides = [1, 1]} : vector<16x32xf32> to vector<8x8xf32>
    %258 = vector.shape_cast %250 : vector<8x8xf32> to vector<1x8x8xf32>
    %259 = vector.shape_cast %251 : vector<8x8xf32> to vector<1x8x8xf32>
    %260 = vector.shape_cast %252 : vector<8x8xf32> to vector<1x8x8xf32>
    %261 = vector.shape_cast %253 : vector<8x8xf32> to vector<1x8x8xf32>
    %262 = vector.shape_cast %254 : vector<8x8xf32> to vector<1x8x8xf32>
    %263 = vector.shape_cast %255 : vector<8x8xf32> to vector<1x8x8xf32>
    %264 = vector.shape_cast %256 : vector<8x8xf32> to vector<1x8x8xf32>
    %265 = vector.shape_cast %257 : vector<8x8xf32> to vector<1x8x8xf32>
    %266 = tpu.concatenate %258, %259, %260, %261, %262, %263, %264, %265 in 0 : vector<1x8x8xf32>, vector<1x8x8xf32>, vector<1x8x8xf32>, vector<1x8x8xf32>, vector<1x8x8xf32>, vector<1x8x8xf32>, vector<1x8x8xf32>, vector<1x8x8xf32> -> vector<8x8x8xf32>
    "tpu.trace_start"() <{level = 10 : i32, message = "ntd,nsd->nts"}> : () -> ()
    %cst_73 = arith.constant dense<0.000000e+00> : vector<8x8x8xf32>
    %267 = tpu.matmul %232, %249, %cst_73 {dimension_numbers = #tpu.dot_dimension_numbers<[2], [2], [1], [1], [0, 0, 0, 1, 1, 1], [0], [0]>} : vector<8x8x8xf32>, vector<8x8x8xf32>, vector<8x8x8xf32> -> vector<8x8x8xf32>
    "tpu.trace_stop"() : () -> ()
    %cst_74 = arith.constant 0.176776692 : f32
    %268 = vector.broadcast %cst_74 : f32 to vector<8x8x8xf32>
    %269 = arith.mulf %267, %268 : vector<8x8x8xf32>
    %cst_75 = arith.constant 0xFF800000 : f32
    %270 = vector.shape_cast %13 : vector<1x8x8xi1> to vector<1x8x8xi1>
    %271 = vector.broadcast %270 : vector<1x8x8xi1> to vector<8x8x8xi1>
    %272 = vector.broadcast %cst_75 : f32 to vector<8x8x8xf32>
    %273 = arith.select %271, %269, %272 : vector<8x8x8xi1>, vector<8x8x8xf32>
    %cst_76 = arith.constant dense<0xFF800000> : vector<8x8xf32>
    %274 = vector.multi_reduction <maximumf>, %273, %cst_76 [2] : vector<8x8x8xf32> to vector<8x8xf32>
    %275 = vector.shape_cast %274 : vector<8x8xf32> to vector<8x8x1xf32>
    %276 = vector.broadcast %275 : vector<8x8x1xf32> to vector<8x8x8xf32>
    %277 = arith.subf %273, %276 : vector<8x8x8xf32>
    %278 = math.exp %277 : vector<8x8x8xf32>
    %cst_77 = arith.constant dense<0.000000e+00> : vector<8x8xf32>
    %279 = vector.multi_reduction <add>, %278, %cst_77 [2] : vector<8x8x8xf32> to vector<8x8xf32>
    %280 = vector.shape_cast %279 : vector<8x8xf32> to vector<8x8x1xf32>
    %281 = vector.broadcast %280 : vector<8x8x1xf32> to vector<8x8x8xf32>
    %282 = arith.divf %278, %281 : vector<8x8x8xf32>
    "tpu.trace_start"() <{level = 10 : i32, message = "nts,nsd->ntd"}> : () -> ()
    %cst_78 = arith.constant dense<0.000000e+00> : vector<8x8x8xf32>
    %283 = tpu.matmul %282, %266, %cst_78 {dimension_numbers = #tpu.dot_dimension_numbers<[2], [1], [1], [2], [0, 0, 0, 1, 1, 2], [0], [0]>} : vector<8x8x8xf32>, vector<8x8x8xf32>, vector<8x8x8xf32> -> vector<8x8x8xf32>
    "tpu.trace_stop"() : () -> ()
    %284 = vector.extract_strided_slice %283 {offsets = [0, 0, 0], sizes = [1, 8, 8], strides = [1, 1, 1]} : vector<8x8x8xf32> to vector<1x8x8xf32>
    %285 = vector.shape_cast %284 : vector<1x8x8xf32> to vector<8x8xf32>
    %286 = vector.extract_strided_slice %283 {offsets = [1, 0, 0], sizes = [1, 8, 8], strides = [1, 1, 1]} : vector<8x8x8xf32> to vector<1x8x8xf32>
    %287 = vector.shape_cast %286 : vector<1x8x8xf32> to vector<8x8xf32>
    %288 = vector.extract_strided_slice %283 {offsets = [2, 0, 0], sizes = [1, 8, 8], strides = [1, 1, 1]} : vector<8x8x8xf32> to vector<1x8x8xf32>
    %289 = vector.shape_cast %288 : vector<1x8x8xf32> to vector<8x8xf32>
    %290 = vector.extract_strided_slice %283 {offsets = [3, 0, 0], sizes = [1, 8, 8], strides = [1, 1, 1]} : vector<8x8x8xf32> to vector<1x8x8xf32>
    %291 = vector.shape_cast %290 : vector<1x8x8xf32> to vector<8x8xf32>
    %292 = tpu.concatenate %285, %287, %289, %291 in 1 : vector<8x8xf32>, vector<8x8xf32>, vector<8x8xf32>, vector<8x8xf32> -> vector<8x32xf32>
    %293 = vector.extract_strided_slice %283 {offsets = [4, 0, 0], sizes = [1, 8, 8], strides = [1, 1, 1]} : vector<8x8x8xf32> to vector<1x8x8xf32>
    %294 = vector.shape_cast %293 : vector<1x8x8xf32> to vector<8x8xf32>
    %295 = vector.extract_strided_slice %283 {offsets = [5, 0, 0], sizes = [1, 8, 8], strides = [1, 1, 1]} : vector<8x8x8xf32> to vector<1x8x8xf32>
    %296 = vector.shape_cast %295 : vector<1x8x8xf32> to vector<8x8xf32>
    %297 = vector.extract_strided_slice %283 {offsets = [6, 0, 0], sizes = [1, 8, 8], strides = [1, 1, 1]} : vector<8x8x8xf32> to vector<1x8x8xf32>
    %298 = vector.shape_cast %297 : vector<1x8x8xf32> to vector<8x8xf32>
    %299 = vector.extract_strided_slice %283 {offsets = [7, 0, 0], sizes = [1, 8, 8], strides = [1, 1, 1]} : vector<8x8x8xf32> to vector<1x8x8xf32>
    %300 = vector.shape_cast %299 : vector<1x8x8xf32> to vector<8x8xf32>
    %301 = tpu.concatenate %294, %296, %298, %300 in 1 : vector<8x8xf32>, vector<8x8xf32>, vector<8x8xf32>, vector<8x8xf32> -> vector<8x32xf32>
    %302 = tpu.concatenate %292, %301 in 0 : vector<8x32xf32>, vector<8x32xf32> -> vector<16x32xf32>
    %c1_79 = arith.constant 1 : index
    %c0_80 = arith.constant 0 : index
    %c0_81 = arith.constant 0 : index
    %303 = vector.load %arg5[%c1_79, %c0_80, %c0_81] : memref<2x32x32xf32, #tpu.memory_space<vmem>>, vector<1x32x32xf32>
    %304 = vector.shape_cast %303 : vector<1x32x32xf32> to vector<32x32xf32>
    %cst_82 = arith.constant dense<0.000000e+00> : vector<16x32xf32>
    %305 = tpu.matmul %302, %304, %cst_82 {dimension_numbers = #tpu.dot_dimension_numbers<[1], [0], [0], [1], [0, 0, 1, 1], [], []>} : vector<16x32xf32>, vector<32x32xf32>, vector<16x32xf32> -> vector<16x32xf32>
    %306 = arith.addf %183, %305 : vector<16x32xf32>
    %c1_83 = arith.constant 1 : index
    %c0_84 = arith.constant 0 : index
    %c0_85 = arith.constant 0 : index
    %307 = vector.load %arg6[%c1_83, %c0_84, %c0_85] : memref<2x1x32xf32, #tpu.memory_space<vmem>>, vector<1x1x32xf32>
    %308 = vector.shape_cast %307 : vector<1x1x32xf32> to vector<1x32xf32>
    %309 = vector.broadcast %308 : vector<1x32xf32> to vector<16x32xf32>
    %310 = arith.addf %306, %309 : vector<16x32xf32>
    %c1_86 = arith.constant 1 : index
    %c0_87 = arith.constant 0 : index
    %c0_88 = arith.constant 0 : index
    %311 = vector.load %arg9[%c1_86, %c0_87, %c0_88] : memref<2x1x32xf32, #tpu.memory_space<vmem>>, vector<1x1x32xf32>
    %312 = vector.shape_cast %311 : vector<1x1x32xf32> to vector<1x32xf32>
    %c1_89 = arith.constant 1 : index
    %c0_90 = arith.constant 0 : index
    %c0_91 = arith.constant 0 : index
    %313 = vector.load %arg10[%c1_89, %c0_90, %c0_91] : memref<2x1x32xf32, #tpu.memory_space<vmem>>, vector<1x1x32xf32>
    %314 = vector.shape_cast %313 : vector<1x1x32xf32> to vector<1x32xf32>
    %cst_92 = arith.constant dense<0.000000e+00> : vector<16xf32>
    %315 = vector.multi_reduction <add>, %310, %cst_92 [1] : vector<16x32xf32> to vector<16xf32>
    %316 = vector.shape_cast %315 : vector<16xf32> to vector<16x1xf32>
    %cst_93 = arith.constant 3.200000e+01 : f32
    %317 = vector.broadcast %cst_93 : f32 to vector<16x1xf32>
    %318 = arith.divf %316, %317 : vector<16x1xf32>
    %319 = vector.broadcast %318 : vector<16x1xf32> to vector<16x32xf32>
    %320 = arith.subf %310, %319 : vector<16x32xf32>
    %321 = arith.mulf %320, %320 : vector<16x32xf32>
    %cst_94 = arith.constant dense<0.000000e+00> : vector<16xf32>
    %322 = vector.multi_reduction <add>, %321, %cst_94 [1] : vector<16x32xf32> to vector<16xf32>
    %323 = vector.shape_cast %322 : vector<16xf32> to vector<16x1xf32>
    %cst_95 = arith.constant 3.200000e+01 : f32
    %324 = vector.broadcast %cst_95 : f32 to vector<16x1xf32>
    %325 = arith.divf %323, %324 : vector<16x1xf32>
    %326 = vector.broadcast %318 : vector<16x1xf32> to vector<16x32xf32>
    %327 = arith.subf %310, %326 : vector<16x32xf32>
    %cst_96 = arith.constant 9.99999974E-6 : f32
    %328 = vector.broadcast %cst_96 : f32 to vector<16x1xf32>
    %329 = arith.addf %325, %328 : vector<16x1xf32>
    %330 = math.rsqrt %329 : vector<16x1xf32>
    %331 = vector.broadcast %330 : vector<16x1xf32> to vector<16x32xf32>
    %332 = arith.mulf %327, %331 : vector<16x32xf32>
    %333 = vector.broadcast %312 : vector<1x32xf32> to vector<16x32xf32>
    %334 = arith.mulf %332, %333 : vector<16x32xf32>
    %335 = vector.broadcast %314 : vector<1x32xf32> to vector<16x32xf32>
    %336 = arith.addf %334, %335 : vector<16x32xf32>
    %c1_97 = arith.constant 1 : index
    %c0_98 = arith.constant 0 : index
    %c0_99 = arith.constant 0 : index
    %337 = vector.load %arg11[%c1_97, %c0_98, %c0_99] : memref<2x32x128xf32, #tpu.memory_space<vmem>>, vector<1x32x128xf32>
    %338 = vector.shape_cast %337 : vector<1x32x128xf32> to vector<32x128xf32>
    %cst_100 = arith.constant dense<0.000000e+00> : vector<16x128xf32>
    %339 = tpu.matmul %336, %338, %cst_100 {dimension_numbers = #tpu.dot_dimension_numbers<[1], [0], [0], [1], [0, 0, 1, 1], [], []>} : vector<16x32xf32>, vector<32x128xf32>, vector<16x128xf32> -> vector<16x128xf32>
    %c1_101 = arith.constant 1 : index
    %c0_102 = arith.constant 0 : index
    %c0_103 = arith.constant 0 : index
    %340 = vector.load %arg12[%c1_101, %c0_102, %c0_103] : memref<2x1x128xf32, #tpu.memory_space<vmem>>, vector<1x1x128xf32>
    %341 = vector.shape_cast %340 : vector<1x1x128xf32> to vector<1x128xf32>
    %342 = vector.broadcast %341 : vector<1x128xf32> to vector<16x128xf32>
    %343 = arith.addf %339, %342 : vector<16x128xf32>
    %cst_104 = arith.constant 0.000000e+00 : f32
    %344 = vector.broadcast %cst_104 : f32 to vector<16x128xf32>
    %345 = arith.maximumf %343, %344 : vector<16x128xf32>
    %c1_105 = arith.constant 1 : index
    %c0_106 = arith.constant 0 : index
    %c0_107 = arith.constant 0 : index
    %346 = vector.load %arg13[%c1_105, %c0_106, %c0_107] : memref<2x128x32xf32, #tpu.memory_space<vmem>>, vector<1x128x32xf32>
    %347 = vector.shape_cast %346 : vector<1x128x32xf32> to vector<128x32xf32>
    %cst_108 = arith.constant dense<0.000000e+00> : vector<16x32xf32>
    %348 = tpu.matmul %345, %347, %cst_108 {dimension_numbers = #tpu.dot_dimension_numbers<[1], [0], [0], [1], [0, 0, 1, 1], [], []>} : vector<16x128xf32>, vector<128x32xf32>, vector<16x32xf32> -> vector<16x32xf32>
    %349 = arith.addf %310, %348 : vector<16x32xf32>
    %c1_109 = arith.constant 1 : index
    %c0_110 = arith.constant 0 : index
    %c0_111 = arith.constant 0 : index
    %350 = vector.load %arg14[%c1_109, %c0_110, %c0_111] : memref<2x1x32xf32, #tpu.memory_space<vmem>>, vector<1x1x32xf32>
    %351 = vector.shape_cast %350 : vector<1x1x32xf32> to vector<1x32xf32>
    %352 = vector.broadcast %351 : vector<1x32xf32> to vector<16x32xf32>
    %353 = arith.addf %349, %352 : vector<16x32xf32>
    %c0_112 = arith.constant 0 : index
    %c0_113 = arith.constant 0 : index
    %354 = vector.load %arg15[%c0_112, %c0_113] : memref<1x32xf32, #tpu.memory_space<vmem>>, vector<1x32xf32>
    %c0_114 = arith.constant 0 : index
    %c0_115 = arith.constant 0 : index
    %355 = vector.load %arg16[%c0_114, %c0_115] : memref<1x32xf32, #tpu.memory_space<vmem>>, vector<1x32xf32>
    %cst_116 = arith.constant dense<0.000000e+00> : vector<16xf32>
    %356 = vector.multi_reduction <add>, %353, %cst_116 [1] : vector<16x32xf32> to vector<16xf32>
    %357 = vector.shape_cast %356 : vector<16xf32> to vector<16x1xf32>
    %cst_117 = arith.constant 3.200000e+01 : f32
    %358 = vector.broadcast %cst_117 : f32 to vector<16x1xf32>
    %359 = arith.divf %357, %358 : vector<16x1xf32>
    %360 = vector.broadcast %359 : vector<16x1xf32> to vector<16x32xf32>
    %361 = arith.subf %353, %360 : vector<16x32xf32>
    %362 = arith.mulf %361, %361 : vector<16x32xf32>
    %cst_118 = arith.constant dense<0.000000e+00> : vector<16xf32>
    %363 = vector.multi_reduction <add>, %362, %cst_118 [1] : vector<16x32xf32> to vector<16xf32>
    %364 = vector.shape_cast %363 : vector<16xf32> to vector<16x1xf32>
    %cst_119 = arith.constant 3.200000e+01 : f32
    %365 = vector.broadcast %cst_119 : f32 to vector<16x1xf32>
    %366 = arith.divf %364, %365 : vector<16x1xf32>
    %367 = vector.broadcast %359 : vector<16x1xf32> to vector<16x32xf32>
    %368 = arith.subf %353, %367 : vector<16x32xf32>
    %cst_120 = arith.constant 9.99999974E-6 : f32
    %369 = vector.broadcast %cst_120 : f32 to vector<16x1xf32>
    %370 = arith.addf %366, %369 : vector<16x1xf32>
    %371 = math.rsqrt %370 : vector<16x1xf32>
    %372 = vector.broadcast %371 : vector<16x1xf32> to vector<16x32xf32>
    %373 = arith.mulf %368, %372 : vector<16x32xf32>
    %374 = vector.broadcast %354 : vector<1x32xf32> to vector<16x32xf32>
    %375 = arith.mulf %373, %374 : vector<16x32xf32>
    %376 = vector.broadcast %355 : vector<1x32xf32> to vector<16x32xf32>
    %377 = arith.addf %375, %376 : vector<16x32xf32>
    %c0_121 = arith.constant 0 : index
    %c0_122 = arith.constant 0 : index
    %378 = vector.load %arg17[%c0_121, %c0_122] : memref<32x128xf32, #tpu.memory_space<vmem>>, vector<32x128xf32>
    %cst_123 = arith.constant dense<0.000000e+00> : vector<16x128xf32>
    %379 = tpu.matmul %377, %378, %cst_123 {dimension_numbers = #tpu.dot_dimension_numbers<[1], [0], [0], [1], [0, 0, 1, 1], [], []>} : vector<16x32xf32>, vector<32x128xf32>, vector<16x128xf32> -> vector<16x128xf32>
    %c0_124 = arith.constant 0 : index
    %c0_125 = arith.constant 0 : index
    %380 = vector.load %arg18[%c0_124, %c0_125] : memref<1x128xf32, #tpu.memory_space<vmem>>, vector<1x128xf32>
    %381 = vector.broadcast %380 : vector<1x128xf32> to vector<16x128xf32>
    %382 = arith.addf %379, %381 : vector<16x128xf32>
    %c0_126 = arith.constant 0 : index
    %c0_127 = arith.constant 0 : index
    %383 = vector.load %arg19[%c0_126, %c0_127] : memref<16x128xf32, #tpu.memory_space<vmem>>, vector<16x128xf32>
    tpu.vector_store %arg19[%c0_126, %c0_127], %382 {strides = array<i32>} : memref<16x128xf32, #tpu.memory_space<vmem>>, vector<16x128xf32>,
    return
  }
  func.func @transform_0(%arg0: i32) -> (i32, i32) {
    %c0_i32 = arith.constant 0 : i32
    %c0_i32_0 = arith.constant 0 : i32
    return %arg0, %c0_i32 : i32, i32
  }
  func.func @transform_1(%arg0: i32) -> (i32, i32) {
    %c0_i32 = arith.constant 0 : i32
    %c0_i32_0 = arith.constant 0 : i32
    %c0_i32_1 = arith.constant 0 : i32
    return %c0_i32, %c0_i32_0 : i32, i32
  }
  func.func @transform_2(%arg0: i32) -> (i32, i32) {
    %c0_i32 = arith.constant 0 : i32
    %c0_i32_0 = arith.constant 0 : i32
    %c0_i32_1 = arith.constant 0 : i32
    return %c0_i32, %c0_i32_0 : i32, i32
  }
  func.func @transform_3(%arg0: i32) -> (i32, i32, i32) {
    %c0_i32 = arith.constant 0 : i32
    %c0_i32_0 = arith.constant 0 : i32
    %c0_i32_1 = arith.constant 0 : i32
    %c0_i32_2 = arith.constant 0 : i32
    return %c0_i32, %c0_i32_0, %c0_i32_1 : i32, i32, i32
  }
  func.func @transform_4(%arg0: i32) -> (i32, i32, i32) {
    %c0_i32 = arith.constant 0 : i32
    %c0_i32_0 = arith.constant 0 : i32
    %c0_i32_1 = arith.constant 0 : i32
    %c0_i32_2 = arith.constant 0 : i32
    return %c0_i32, %c0_i32_0, %c0_i32_1 : i32, i32, i32
  }
  func.func @transform_5(%arg0: i32) -> (i32, i32, i32) {
    %c0_i32 = arith.constant 0 : i32
    %c0_i32_0 = arith.constant 0 : i32
    %c0_i32_1 = arith.constant 0 : i32
    %c0_i32_2 = arith.constant 0 : i32
    return %c0_i32, %c0_i32_0, %c0_i32_1 : i32, i32, i32
  }
  func.func @transform_6(%arg0: i32) -> (i32, i32, i32) {
    %c0_i32 = arith.constant 0 : i32
    %c0_i32_0 = arith.constant 0 : i32
    %c0_i32_1 = arith.constant 0 : i32
    %c0_i32_2 = arith.constant 0 : i32
    return %c0_i32, %c0_i32_0, %c0_i32_1 : i32, i32, i32
  }
  func.func @transform_7(%arg0: i32) -> (i32, i32, i32) {
    %c0_i32 = arith.constant 0 : i32
    %c0_i32_0 = arith.constant 0 : i32
    %c0_i32_1 = arith.constant 0 : i32
    %c0_i32_2 = arith.constant 0 : i32
    return %c0_i32, %c0_i32_0, %c0_i32_1 : i32, i32, i32
  }
  func.func @transform_8(%arg0: i32) -> (i32, i32, i32) {
    %c0_i32 = arith.constant 0 : i32
    %c0_i32_0 = arith.constant 0 : i32
    %c0_i32_1 = arith.constant 0 : i32
    %c0_i32_2 = arith.constant 0 : i32
    return %c0_i32, %c0_i32_0, %c0_i32_1 : i32, i32, i32
  }
  func.func @transform_9(%arg0: i32) -> (i32, i32, i32) {
    %c0_i32 = arith.constant 0 : i32
    %c0_i32_0 = arith.constant 0 : i32
    %c0_i32_1 = arith.constant 0 : i32
    %c0_i32_2 = arith.constant 0 : i32
    return %c0_i32, %c0_i32_0, %c0_i32_1 : i32, i32, i32
  }
  func.func @transform_10(%arg0: i32) -> (i32, i32, i32) {
    %c0_i32 = arith.constant 0 : i32
    %c0_i32_0 = arith.constant 0 : i32
    %c0_i32_1 = arith.constant 0 : i32
    %c0_i32_2 = arith.constant 0 : i32
    return %c0_i32, %c0_i32_0, %c0_i32_1 : i32, i32, i32
  }
  func.func @transform_11(%arg0: i32) -> (i32, i32, i32) {
    %c0_i32 = arith.constant 0 : i32
    %c0_i32_0 = arith.constant 0 : i32
    %c0_i32_1 = arith.constant 0 : i32
    %c0_i32_2 = arith.constant 0 : i32
    return %c0_i32, %c0_i32_0, %c0_i32_1 : i32, i32, i32
  }
  func.func @transform_12(%arg0: i32) -> (i32, i32, i32) {
    %c0_i32 = arith.constant 0 : i32
    %c0_i32_0 = arith.constant 0 : i32
    %c0_i32_1 = arith.constant 0 : i32
    %c0_i32_2 = arith.constant 0 : i32
    return %c0_i32, %c0_i32_0, %c0_i32_1 : i32, i32, i32
  }
  func.func @transform_13(%arg0: i32) -> (i32, i32, i32) {
    %c0_i32 = arith.constant 0 : i32
    %c0_i32_0 = arith.constant 0 : i32
    %c0_i32_1 = arith.constant 0 : i32
    %c0_i32_2 = arith.constant 0 : i32
    return %c0_i32, %c0_i32_0, %c0_i32_1 : i32, i32, i32
  }
  func.func @transform_14(%arg0: i32) -> (i32, i32) {
    %c0_i32 = arith.constant 0 : i32
    %c0_i32_0 = arith.constant 0 : i32
    %c0_i32_1 = arith.constant 0 : i32
    return %c0_i32, %c0_i32_0 : i32, i32
  }
  func.func @transform_15(%arg0: i32) -> (i32, i32) {
    %c0_i32 = arith.constant 0 : i32
    %c0_i32_0 = arith.constant 0 : i32
    %c0_i32_1 = arith.constant 0 : i32
    return %c0_i32, %c0_i32_0 : i32, i32
  }
  func.func @transform_16(%arg0: i32) -> (i32, i32) {
    %c0_i32 = arith.constant 0 : i32
    %c0_i32_0 = arith.constant 0 : i32
    %c0_i32_1 = arith.constant 0 : i32
    return %c0_i32, %c0_i32_0 : i32, i32
  }
  func.func @transform_17(%arg0: i32) -> (i32, i32) {
    %c0_i32 = arith.constant 0 : i32
    %c0_i32_0 = arith.constant 0 : i32
    %c0_i32_1 = arith.constant 0 : i32
    return %c0_i32, %c0_i32_0 : i32, i32
  }
  func.func @transform_18(%arg0: i32) -> (i32, i32) {
    %c0_i32 = arith.constant 0 : i32
    %c0_i32_0 = arith.constant 0 : i32
    return %arg0, %c0_i32 : i32, i32
  }
}

</mosaic_0001>

<llo_original>
// kernel: gpt_forward_pallas.1
$region0: #{gpt_forward_pallas.1}
  #allocation0 [shape = 'u32[]', space=smem, size = 0x4, offset = 0x4, fixed_abs, tag = 'smem constant byte address 0x4 - core index']
  #allocation1 [shape = 'u32[144,128]{1,0:T(1,128)}', space=vmem, size = 0x12000, scoped, tag = 'internal scratch']
  %s0 = inlined_call_operand.vmem [shape: s32[16,1], index: 0, kind: input, shape index: {}]
  %s1 = inlined_call_operand.vmem [shape: f32[64,32], index: 1, kind: input, shape index: {}]
  %s2 = inlined_call_operand.vmem [shape: f32[16,32], index: 2, kind: input, shape index: {}]
  %s3 = inlined_call_operand.vmem [shape: f32[2,32,96], index: 3, kind: input, shape index: {}]
  %s4 = inlined_call_operand.vmem [shape: f32[2,32,32], index: 4, kind: input, shape index: {}]
  %s5 = inlined_call_operand.vmem [shape: f32[2,1,32], index: 5, kind: input, shape index: {}]
  %s6 = inlined_call_operand.vmem [shape: f32[2,1,32], index: 6, kind: input, shape index: {}]
  %s7 = inlined_call_operand.vmem [shape: f32[2,1,32], index: 7, kind: input, shape index: {}]
  %s8 = inlined_call_operand.vmem [shape: f32[2,1,32], index: 8, kind: input, shape index: {}]
  %s9 = inlined_call_operand.vmem [shape: f32[2,1,32], index: 9, kind: input, shape index: {}]
  %s10 = inlined_call_operand.vmem [shape: f32[2,32,128], index: 10, kind: input, shape index: {}]
  %s11 = inlined_call_operand.vmem [shape: f32[2,1,128], index: 11, kind: input, shape index: {}]
  %s12 = inlined_call_operand.vmem [shape: f32[2,128,32], index: 12, kind: input, shape index: {}]
  %s13 = inlined_call_operand.vmem [shape: f32[2,1,32], index: 13, kind: input, shape index: {}]
  %s14 = inlined_call_operand.vmem [shape: f32[1,32], index: 14, kind: input, shape index: {}]
  %s15 = inlined_call_operand.vmem [shape: f32[1,32], index: 15, kind: input, shape index: {}]
  %s16 = inlined_call_operand.vmem [shape: f32[32,128], index: 16, kind: input, shape index: {}]
  %s17 = inlined_call_operand.vmem [shape: f32[1,128], index: 17, kind: input, shape index: {}]
  %s18 = inlined_call_operand.hbm [shape: f32[16,128], index: 18, kind: output, shape index: {}]
  %s19 = sld [smem:[#allocation0]]
  $region82: #{gpt_forward_pallas.1} parent=0
    _
  %s21 = ssub.s32 1, %s19
  %s22 = scalar_select 0, %s21, %s19
  $region1: #{gpt_forward_pallas.1} parent=0
    #allocation2 [shape = 'u8[8192]{0}', space=vmem, size = 0x2000, scoped, tag = 'output window, operand 0, single buffered']
    #allocation3 [shape = 's32[1]{0}', space=sflag, size = 0x4, scoped, tag = 'scoped memory for gpt_forward_pallas.1']
    %23 = vsyncpa [#allocation3], 0
    // Predicated region
    $region2: #{gpt_forward_pallas.1} parent=1 // pred_check
      _
    $region3: #{gpt_forward_pallas.1} parent=1 // pred_check_branch
      %25 = sbr.rel (0) target = $region5
    $region4: #{gpt_forward_pallas.1} parent=1 // pred_region
      _
    $region5: #{gpt_forward_pallas.1} parent=1 // pred_fallthru
      _
    // Predicated region
    $region6: #{gpt_forward_pallas.1} parent=1 // pred_check
      _
    $region7: #{gpt_forward_pallas.1} parent=1 // pred_check_branch
      %27 = sbr.rel (0) target = $region9
    $region8: #{gpt_forward_pallas.1} parent=1 // pred_region
      _
    $region9: #{gpt_forward_pallas.1} parent=1 // pred_fallthru
      _
    // Predicated region
    $region10: #{gpt_forward_pallas.1} parent=1 // pred_check
      _
    $region11: #{gpt_forward_pallas.1} parent=1 // pred_check_branch
      %29 = sbr.rel (0) target = $region13
    $region12: #{gpt_forward_pallas.1} parent=1 // pred_region
      _
    $region13: #{gpt_forward_pallas.1} parent=1 // pred_fallthru
      _
    // Predicated region
    $region14: #{gpt_forward_pallas.1} parent=1 // pred_check
      _
    $region15: #{gpt_forward_pallas.1} parent=1 // pred_check_branch
      %31 = sbr.rel (0) target = $region17
    $region16: #{gpt_forward_pallas.1} parent=1 // pred_region
      _
    $region17: #{gpt_forward_pallas.1} parent=1 // pred_fallthru
      _
    // Predicated region
    $region18: #{gpt_forward_pallas.1} parent=1 // pred_check
      _
    $region19: #{gpt_forward_pallas.1} parent=1 // pred_check_branch
      %33 = sbr.rel (0) target = $region21
    $region20: #{gpt_forward_pallas.1} parent=1 // pred_region
      _
    $region21: #{gpt_forward_pallas.1} parent=1 // pred_fallthru
      _
    // Predicated region
    $region22: #{gpt_forward_pallas.1} parent=1 // pred_check
      _
    $region23: #{gpt_forward_pallas.1} parent=1 // pred_check_branch
      %35 = sbr.rel (0) target = $region25
    $region24: #{gpt_forward_pallas.1} parent=1 // pred_region
      _
    $region25: #{gpt_forward_pallas.1} parent=1 // pred_fallthru
      _
    // Predicated region
    $region26: #{gpt_forward_pallas.1} parent=1 // pred_check
      _
    $region27: #{gpt_forward_pallas.1} parent=1 // pred_check_branch
      %37 = sbr.rel (0) target = $region29
    $region28: #{gpt_forward_pallas.1} parent=1 // pred_region
      _
    $region29: #{gpt_forward_pallas.1} parent=1 // pred_fallthru
      _
    // Predicated region
    $region30: #{gpt_forward_pallas.1} parent=1 // pred_check
      _
    $region31: #{gpt_forward_pallas.1} parent=1 // pred_check_branch
      %39 = sbr.rel (0) target = $region33
    $region32: #{gpt_forward_pallas.1} parent=1 // pred_region
      _
    $region33: #{gpt_forward_pallas.1} parent=1 // pred_fallthru
      _
    // Predicated region
    $region34: #{gpt_forward_pallas.1} parent=1 // pred_check
      _
    $region35: #{gpt_forward_pallas.1} parent=1 // pred_check_branch
      %41 = sbr.rel (0) target = $region37
    $region36: #{gpt_forward_pallas.1} parent=1 // pred_region
      _
    $region37: #{gpt_forward_pallas.1} parent=1 // pred_fallthru
      _
    // Predicated region
    $region38: #{gpt_forward_pallas.1} parent=1 // pred_check
      _
    $region39: #{gpt_forward_pallas.1} parent=1 // pred_check_branch
      %43 = sbr.rel (0) target = $region41
    $region40: #{gpt_forward_pallas.1} parent=1 // pred_region
      _
    $region41: #{gpt_forward_pallas.1} parent=1 // pred_fallthru
      _
    // Predicated region
    $region42: #{gpt_forward_pallas.1} parent=1 // pred_check
      _
    $region43: #{gpt_forward_pallas.1} parent=1 // pred_check_branch
      %45 = sbr.rel (0) target = $region45
    $region44: #{gpt_forward_pallas.1} parent=1 // pred_region
      _
    $region45: #{gpt_forward_pallas.1} parent=1 // pred_fallthru
      _
    // Predicated region
    $region46: #{gpt_forward_pallas.1} parent=1 // pred_check
      _
    $region47: #{gpt_forward_pallas.1} parent=1 // pred_check_branch
      %47 = sbr.rel (0) target = $region49
    $region48: #{gpt_forward_pallas.1} parent=1 // pred_region
      _
    $region49: #{gpt_forward_pallas.1} parent=1 // pred_fallthru
      _
    // Predicated region
    $region50: #{gpt_forward_pallas.1} parent=1 // pred_check
      _
    $region51: #{gpt_forward_pallas.1} parent=1 // pred_check_branch
      %49 = sbr.rel (0) target = $region53
    $region52: #{gpt_forward_pallas.1} parent=1 // pred_region
      _
    $region53: #{gpt_forward_pallas.1} parent=1 // pred_fallthru
      _
    // Predicated region
    $region54: #{gpt_forward_pallas.1} parent=1 // pred_check
      _
    $region55: #{gpt_forward_pallas.1} parent=1 // pred_check_branch
      %51 = sbr.rel (0) target = $region57
    $region56: #{gpt_forward_pallas.1} parent=1 // pred_region
      _
    $region57: #{gpt_forward_pallas.1} parent=1 // pred_fallthru
      _
    // Predicated region
    $region58: #{gpt_forward_pallas.1} parent=1 // pred_check
      _
    $region59: #{gpt_forward_pallas.1} parent=1 // pred_check_branch
      %53 = sbr.rel (0) target = $region61
    $region60: #{gpt_forward_pallas.1} parent=1 // pred_region
      _
    $region61: #{gpt_forward_pallas.1} parent=1 // pred_fallthru
      _
    // Predicated region
    $region62: #{gpt_forward_pallas.1} parent=1 // pred_check
      _
    $region63: #{gpt_forward_pallas.1} parent=1 // pred_check_branch
      %55 = sbr.rel (0) target = $region65
    $region64: #{gpt_forward_pallas.1} parent=1 // pred_region
      _
    $region65: #{gpt_forward_pallas.1} parent=1 // pred_fallthru
      _
    // Predicated region
    $region66: #{gpt_forward_pallas.1} parent=1 // pred_check
      _
    $region67: #{gpt_forward_pallas.1} parent=1 // pred_check_branch
      %57 = sbr.rel (0) target = $region69
    $region68: #{gpt_forward_pallas.1} parent=1 // pred_region
      _
    $region69: #{gpt_forward_pallas.1} parent=1 // pred_fallthru
      _
    // Predicated region
    $region70: #{gpt_forward_pallas.1} parent=1 // pred_check
      _
    $region71: #{gpt_forward_pallas.1} parent=1 // pred_check_branch
      %59 = sbr.rel (0) target = $region73
    $region72: #{gpt_forward_pallas.1} parent=1 // pred_region
      _
    $region73: #{gpt_forward_pallas.1} parent=1 // pred_fallthru
      _
    %v60 = vld [vmem:[%s0] sm:$0xff]
    %v61 = vld [vmem:[%s0 + $0x8] sm:$0xff]
    %v62 = vlaneseq
    %v63 = vand.u32 %v62, 127
    %64 = vset.pattern.permute.xlu0 0
    %65 = vperm.xlu0 %64, %v60
    %v66 = vpop.permute.xlu0 %65
    %67 = vset.pattern.permute.xlu0 0
    %68 = vperm.xlu0 %67, %v61
    %v69 = vpop.permute.xlu0 %68
    %vm70 = vcmp.eq.s32.totalorder %v66, %v63
    %vm71 = vcmp.eq.s32.totalorder %v69, %v63
    %v72 = vsel %vm70, 1, 0
    %v73 = vsel %vm71, 1, 0
    %v74 = vcvt.s32.f32 %v72
    %v75 = vcvt.s32.f32 %v73
    %v76 = vld [vmem:[%s1] sm:$0xff]
    %v77 = vld [vmem:[%s1 + $0x8] sm:$0xff]
    %v78 = vld [vmem:[%s1 + $0x10] sm:$0xff]
    %v79 = vld [vmem:[%s1 + $0x18] sm:$0xff]
    %v80 = vld [vmem:[%s1 + $0x20] sm:$0xff]
    %v81 = vld [vmem:[%s1 + $0x28] sm:$0xff]
    %v82 = vld [vmem:[%s1 + $0x30] sm:$0xff]
    %v83 = vld [vmem:[%s1 + $0x38] sm:$0xff]
    %v84 = vld [vmem:[%s2] sm:$0xff]
    %v85 = vld [vmem:[%s2 + $0x8] sm:$0xff]
    %vm86 = vcmask 523264
    %v88 = vsel %vm86, %v74, 0
    %v91 = vsel %vm86, %v75, 0
    %93 = vmatprep.subr.mxu0 0.0
    %94 = vmatpush1.msra.mxu0 %v76
    %95 = vmatprep.subr.mxu0 0.0
    %96 = vmatpush1.msra.mxu0 %v77
    %97 = vmatprep.subr.mxu0 0.0
    %98 = vmatpush1.msra.mxu0 %v78
    %99 = vmatprep.subr.mxu0 0.0
    %100 = vmatpush1.msra.mxu0 %v79
    %101 = vmatprep.subr.mxu0 0.0
    %102 = vmatpush1.msra.mxu0 %v80
    %103 = vmatprep.subr.mxu0 0.0
    %104 = vmatpush1.msra.mxu0 %v81
    %105 = vmatprep.subr.mxu0 0.0
    %106 = vmatpush1.msra.mxu0 %v82
    %107 = vmatprep.subr.mxu0 0.0
    %108 = vmatpush1.msra.mxu0 %v83
    %109 = vmatprep.subr.mxu0 0.0
    %110 = vmatpush1.msra.mxu0 0.0
    %111 = vmatprep.subr.mxu0 0.0
    %112 = vmatpush1.msra.mxu0 0.0
    %113 = vmatprep.subr.mxu0 0.0
    %114 = vmatpush1.msra.mxu0 0.0
    %115 = vmatprep.subr.mxu0 0.0
    %116 = vmatpush1.msra.mxu0 0.0
    %117 = vmatprep.subr.mxu0 0.0
    %118 = vmatpush1.msra.mxu0 0.0
    %119 = vmatprep.subr.mxu0 0.0
    %120 = vmatpush1.msra.mxu0 0.0
    %121 = vmatprep.subr.mxu0 0.0
    %122 = vmatpush1.msra.mxu0 0.0
    %123 = vmatprep.subr.mxu0 0.0
    %124 = vmatpush1.msra.mxu0 0.0
    %125 = vmatprep.subr.mxu0 0.0
    %126 = vmatpush1.msra.mxu0 0.0
    %127 = vmatprep.subr.mxu0 0.0
    %128 = vmatpush1.msra.mxu0 0.0
    %129 = vmatprep.subr.mxu0 0.0
    %130 = vmatpush1.msra.mxu0 0.0
    %131 = vmatprep.subr.mxu0 0.0
    %132 = vmatpush1.msra.mxu0 0.0
    %133 = vmatprep.subr.mxu0 0.0
    %134 = vmatpush1.msra.mxu0 0.0
    %135 = vmatprep.subr.mxu0 0.0
    %136 = vmatpush1.msra.mxu0 0.0
    %137 = vmatprep.subr.mxu0 0.0
    %138 = vmatpush1.msra.mxu0 0.0
    %139 = vmatprep.subr.mxu0 0.0
    %140 = vmatpush1.msra.mxu0 0.0
    %141 = vmatprep.subr.mxu0 0.0
    %142 = vmatpush1.msra.mxu0 0.0
    %143 = vmatprep.subr.mxu0 0.0
    %144 = vmatpush1.msra.mxu0 0.0
    %145 = vmatprep.subr.mxu0 0.0
    %146 = vmatpush1.msra.mxu0 0.0
    %147 = vmatprep.subr.mxu0 0.0
    %148 = vmatpush1.msra.mxu0 0.0
    %149 = vmatprep.subr.mxu0 0.0
    %150 = vmatpush1.msra.mxu0 0.0
    %151 = vmatprep.subr.mxu0 0.0
    %152 = vmatpush1.msra.mxu0 0.0
    %153 = vmatprep.subr.mxu0 0.0
    %154 = vmatpush1.msra.mxu0 0.0
    %155 = vmatprep.subr.mxu0 0.0
    %156 = vmatpush1.msra.mxu0 0.0
    %157 = vmatprep.mubr.f32.mxu0 0.0
    %158 = vmatmul.mubr.f32.gmra.mrb[0].mxu0 %v88
    %v159 = vpop.f32.mrb[0].mxu0
    %v160 = vadd.f32 %v84, %v159
    %v161 = vpop.f32.mrb[0].mxu0
    %162 = vmatprep.mubr.f32.mxu0 0.0
    %163 = vmatmul.mubr.f32.gmra.mrb[0].mxu0 %v91
    %v164 = vpop.f32.mrb[0].mxu0
    %v165 = vadd.f32 %v85, %v164
    %v166 = vpop.f32.mrb[0].mxu0
    %167 = vdwg.mxu0
    %v168 = vlaneseq
    %v169 = vshrl.u32 %v168, 7
    %vm170 = vcmp.ge.s32.totalorder %v169, %v63
    %v171 = vld [vmem:[%s6] sm:$0x1]
    %v172 = vld [vmem:[%s7] sm:$0x1]
    %vm173 = vcmask 261120
    %v174 = vsel %vm173, %v160, 0.0
    %175 = vadd.xlane.f32.xlu0 %v174
    %v176 = vpop.xlane.xlu0 %175
    %v177 = vsel %vm173, %v165, 0.0
    %178 = vadd.xlane.f32.xlu0 %v177
    %v179 = vpop.xlane.xlu0 %178
    %v180 = vrcp.pop 32.0
    %v181 = vmul.f32 %v176, %v180
    %v182 = vmul.f32 %v179, %v180
    %v183 = vsub.f32 %v160, %v181
    %v184 = vsub.f32 %v165, %v182
    %v185 = vmul.f32 %v183, %v183
    %v186 = vmul.f32 %v184, %v184
    %v187 = vsel %vm173, %v185, 0.0
    %188 = vadd.xlane.f32.xlu0 %v187
    %v189 = vpop.xlane.xlu0 %188
    %v190 = vsel %vm173, %v186, 0.0
    %191 = vadd.xlane.f32.xlu0 %v190
    %v192 = vpop.xlane.xlu0 %191
    %v193 = vmul.f32 %v189, %v180
    %v194 = vmul.f32 %v192, %v180
    %v195 = vadd.f32 %v193, 1e-05
    %v196 = vadd.f32 %v194, 1e-05
    %v197 = vrsqrt.pop %v195
    %v198 = vrsqrt.pop %v196
    %v199 = vmul.f32 %v183, %v197
    %v200 = vmul.f32 %v184, %v198
    %v202 = vlaneseq
    %v203 = vshrl.u32 %v202, 7
    %v204 = vsub.s32 0, %v203
    %v205 = vrot.slane %v171, %v204
    %v207 = vmul.f32 %v199, %v205
    %v208 = vmul.f32 %v200, %v205
    %v210 = vlaneseq
    %v211 = vshrl.u32 %v210, 7
    %v212 = vsub.s32 0, %v211
    %v213 = vrot.slane %v172, %v212
    %v215 = vadd.f32 %v207, %v213
    %v216 = vadd.f32 %v208, %v213
    %v217 = vld [vmem:[%s3] sm:$0xff]
    %v218 = vld [vmem:[%s3 + $0x8] sm:$0xff]
    %v219 = vld [vmem:[%s3 + $0x10] sm:$0xff]
    %v220 = vld [vmem:[%s3 + $0x18] sm:$0xff]
    %v222 = vsel %vm173, %v215, 0
    %v225 = vsel %vm173, %v216, 0
    %227 = vmatprep.subr.mxu0 0.0
    %228 = vmatpush1.msra.mxu0 %v217
    %229 = vmatprep.subr.mxu0 0.0
    %230 = vmatpush1.msra.mxu0 %v218
    %231 = vmatprep.subr.mxu0 0.0
    %232 = vmatpush1.msra.mxu0 %v219
    %233 = vmatprep.subr.mxu0 0.0
    %234 = vmatpush1.msra.mxu0 %v220
    %235 = vmatprep.subr.mxu0 0.0
    %236 = vmatpush1.msra.mxu0 0.0
    %237 = vmatprep.subr.mxu0 0.0
    %238 = vmatpush1.msra.mxu0 0.0
    %239 = vmatprep.subr.mxu0 0.0
    %240 = vmatpush1.msra.mxu0 0.0
    %241 = vmatprep.subr.mxu0 0.0
    %242 = vmatpush1.msra.mxu0 0.0
    %243 = vmatprep.subr.mxu0 0.0
    %244 = vmatpush1.msra.mxu0 0.0
    %245 = vmatprep.subr.mxu0 0.0
    %246 = vmatpush1.msra.mxu0 0.0
    %247 = vmatprep.subr.mxu0 0.0
    %248 = vmatpush1.msra.mxu0 0.0
    %249 = vmatprep.subr.mxu0 0.0
    %250 = vmatpush1.msra.mxu0 0.0
    %251 = vmatprep.subr.mxu0 0.0
    %252 = vmatpush1.msra.mxu0 0.0
    %253 = vmatprep.subr.mxu0 0.0
    %254 = vmatpush1.msra.mxu0 0.0
    %255 = vmatprep.subr.mxu0 0.0
    %256 = vmatpush1.msra.mxu0 0.0
    %257 = vmatprep.subr.mxu0 0.0
    %258 = vmatpush1.msra.mxu0 0.0
    %259 = vmatprep.subr.mxu0 0.0
    %260 = vmatpush1.msra.mxu0 0.0
    %261 = vmatprep.subr.mxu0 0.0
    %262 = vmatpush1.msra.mxu0 0.0
    %263 = vmatprep.subr.mxu0 0.0
    %264 = vmatpush1.msra.mxu0 0.0
    %265 = vmatprep.subr.mxu0 0.0
    %266 = vmatpush1.msra.mxu0 0.0
    %267 = vmatprep.subr.mxu0 0.0
    %268 = vmatpush1.msra.mxu0 0.0
    %269 = vmatprep.subr.mxu0 0.0
    %270 = vmatpush1.msra.mxu0 0.0
    %271 = vmatprep.subr.mxu0 0.0
    %272 = vmatpush1.msra.mxu0 0.0
    %273 = vmatprep.subr.mxu0 0.0
    %274 = vmatpush1.msra.mxu0 0.0
    %275 = vmatprep.subr.mxu0 0.0
    %276 = vmatpush1.msra.mxu0 0.0
    %277 = vmatprep.subr.mxu0 0.0
    %278 = vmatpush1.msra.mxu0 0.0
    %279 = vmatprep.subr.mxu0 0.0
    %280 = vmatpush1.msra.mxu0 0.0
    %281 = vmatprep.subr.mxu0 0.0
    %282 = vmatpush1.msra.mxu0 0.0
    %283 = vmatprep.subr.mxu0 0.0
    %284 = vmatpush1.msra.mxu0 0.0
    %285 = vmatprep.subr.mxu0 0.0
    %286 = vmatpush1.msra.mxu0 0.0
    %287 = vmatprep.subr.mxu0 0.0
    %288 = vmatpush1.msra.mxu0 0.0
    %289 = vmatprep.subr.mxu0 0.0
    %290 = vmatpush1.msra.mxu0 0.0
    %291 = vmatprep.mubr.f32.mxu0 0.0
    %292 = vmatmul.mubr.f32.gmra.mrb[0].mxu0 %v222
    %v293 = vpop.f32.mrb[0].mxu0
    %v294 = vadd.f32 0.0, %v293
    %v295 = vpop.f32.mrb[0].mxu0
    %296 = vmatprep.mubr.f32.mxu0 0.0
    %297 = vmatmul.mubr.f32.gmra.mrb[0].mxu0 %v225
    %v298 = vpop.f32.mrb[0].mxu0
    %v299 = vadd.f32 0.0, %v298
    %v300 = vpop.f32.mrb[0].mxu0
    %301 = vdwg.mxu0
    %303 = vrot.lane.b32.xlu0 %v294, 120
    %v304 = vpop.permute.xlu0 %303
    %305 = vrot.lane.b32.xlu0 %v294, 112
    %v306 = vpop.permute.xlu0 %305
    %307 = vrot.lane.b32.xlu0 %v294, 104
    %v308 = vpop.permute.xlu0 %307
    %310 = vrot.lane.b32.xlu0 %v299, 120
    %v311 = vpop.permute.xlu0 %310
    %312 = vrot.lane.b32.xlu0 %v299, 112
    %v313 = vpop.permute.xlu0 %312
    %314 = vrot.lane.b32.xlu0 %v299, 104
    %v315 = vpop.permute.xlu0 %314
    %316 = vrot.lane.b32.xlu0 %v294, 96
    %v317 = vpop.permute.xlu0 %316
    %vm318 = vcmask 64512
    %v319 = vsel %vm318, %v294, 0
    %v321 = vsel %vm318, %v317, 0
    %323 = vmatprep.subr.mxu0 0.0
    %324 = vmatpush1.xpose.msra.mxu0 %v321
    %325 = vmatprep.subr.mxu0 0.0
    %326 = vmatpush1.xpose.msra.mxu0 0.0
    %327 = vmatprep.subr.mxu0 0.0
    %328 = vmatpush1.xpose.msra.mxu0 0.0
    %329 = vmatprep.subr.mxu0 0.0
    %330 = vmatpush1.xpose.msra.mxu0 0.0
    %331 = vmatprep.subr.mxu0 0.0
    %332 = vmatpush1.xpose.msra.mxu0 0.0
    %333 = vmatprep.subr.mxu0 0.0
    %334 = vmatpush1.xpose.msra.mxu0 0.0
    %335 = vmatprep.subr.mxu0 0.0
    %336 = vmatpush1.xpose.msra.mxu0 0.0
    %337 = vmatprep.subr.mxu0 0.0
    %338 = vmatpush1.xpose.msra.mxu0 0.0
    %339 = vmatprep.subr.mxu0 0.0
    %340 = vmatpush1.xpose.msra.mxu0 0.0
    %341 = vmatprep.subr.mxu0 0.0
    %342 = vmatpush1.xpose.msra.mxu0 0.0
    %343 = vmatprep.subr.mxu0 0.0
    %344 = vmatpush1.xpose.msra.mxu0 0.0
    %345 = vmatprep.subr.mxu0 0.0
    %346 = vmatpush1.xpose.msra.mxu0 0.0
    %347 = vmatprep.subr.mxu0 0.0
    %348 = vmatpush1.xpose.msra.mxu0 0.0
    %349 = vmatprep.subr.mxu0 0.0
    %350 = vmatpush1.xpose.msra.mxu0 0.0
    %351 = vmatprep.subr.mxu0 0.0
    %352 = vmatpush1.xpose.msra.mxu0 0.0
    %353 = vmatprep.subr.mxu0 0.0
    %354 = vmatpush1.xpose.msra.mxu0 0.0
    %355 = vmatprep.subr.mxu0 0.0
    %356 = vmatpush1.xpose.msra.mxu0 0.0
    %357 = vmatprep.subr.mxu0 0.0
    %358 = vmatpush1.xpose.msra.mxu0 0.0
    %359 = vmatprep.subr.mxu0 0.0
    %360 = vmatpush1.xpose.msra.mxu0 0.0
    %361 = vmatprep.subr.mxu0 0.0
    %362 = vmatpush1.xpose.msra.mxu0 0.0
    %363 = vmatprep.subr.mxu0 0.0
    %364 = vmatpush1.xpose.msra.mxu0 0.0
    %365 = vmatprep.subr.mxu0 0.0
    %366 = vmatpush1.xpose.msra.mxu0 0.0
    %367 = vmatprep.subr.mxu0 0.0
    %368 = vmatpush1.xpose.msra.mxu0 0.0
    %369 = vmatprep.subr.mxu0 0.0
    %370 = vmatpush1.xpose.msra.mxu0 0.0
    %371 = vmatprep.subr.mxu0 0.0
    %372 = vmatpush1.xpose.msra.mxu0 0.0
    %373 = vmatprep.subr.mxu0 0.0
    %374 = vmatpush1.xpose.msra.mxu0 0.0
    %375 = vmatprep.subr.mxu0 0.0
    %376 = vmatpush1.xpose.msra.mxu0 0.0
    %377 = vmatprep.subr.mxu0 0.0
    %378 = vmatpush1.xpose.msra.mxu0 0.0
    %379 = vmatprep.subr.mxu0 0.0
    %380 = vmatpush1.xpose.msra.mxu0 0.0
    %381 = vmatprep.subr.mxu0 0.0
    %382 = vmatpush1.xpose.msra.mxu0 0.0
    %383 = vmatprep.subr.mxu0 0.0
    %384 = vmatpush1.xpose.msra.mxu0 0.0
    %385 = vmatprep.subr.mxu0 0.0
    %386 = vmatpush1.xpose.msra.mxu0 0.0
    %387 = vmatprep.mubr.f32.mxu0 0.0
    %388 = vmatmul.mubr.f32.gmra.mrb[0].mxu0 %v319
    %v389 = vpop.f32.mrb[0].mxu0
    %v390 = vadd.f32 0.0, %v389
    %v391 = vpop.f32.mrb[0].mxu0
    %392 = vdwg.mxu0
    %393 = vrot.lane.b32.xlu0 %v304, 96
    %v394 = vpop.permute.xlu0 %393
    %v395 = vsel %vm318, %v304, 0
    %v397 = vsel %vm318, %v394, 0
    %399 = vmatprep.subr.mxu0 0.0
    %400 = vmatpush1.xpose.msra.mxu0 %v397
    %401 = vmatprep.subr.mxu0 0.0
    %402 = vmatpush1.xpose.msra.mxu0 0.0
    %403 = vmatprep.subr.mxu0 0.0
    %404 = vmatpush1.xpose.msra.mxu0 0.0
    %405 = vmatprep.subr.mxu0 0.0
    %406 = vmatpush1.xpose.msra.mxu0 0.0
    %407 = vmatprep.subr.mxu0 0.0
    %408 = vmatpush1.xpose.msra.mxu0 0.0
    %409 = vmatprep.subr.mxu0 0.0
    %410 = vmatpush1.xpose.msra.mxu0 0.0
    %411 = vmatprep.subr.mxu0 0.0
    %412 = vmatpush1.xpose.msra.mxu0 0.0
    %413 = vmatprep.subr.mxu0 0.0
    %414 = vmatpush1.xpose.msra.mxu0 0.0
    %415 = vmatprep.subr.mxu0 0.0
    %416 = vmatpush1.xpose.msra.mxu0 0.0
    %417 = vmatprep.subr.mxu0 0.0
    %418 = vmatpush1.xpose.msra.mxu0 0.0
    %419 = vmatprep.subr.mxu0 0.0
    %420 = vmatpush1.xpose.msra.mxu0 0.0
    %421 = vmatprep.subr.mxu0 0.0
    %422 = vmatpush1.xpose.msra.mxu0 0.0
    %423 = vmatprep.subr.mxu0 0.0
    %424 = vmatpush1.xpose.msra.mxu0 0.0
    %425 = vmatprep.subr.mxu0 0.0
    %426 = vmatpush1.xpose.msra.mxu0 0.0
    %427 = vmatprep.subr.mxu0 0.0
    %428 = vmatpush1.xpose.msra.mxu0 0.0
    %429 = vmatprep.subr.mxu0 0.0
    %430 = vmatpush1.xpose.msra.mxu0 0.0
    %431 = vmatprep.subr.mxu0 0.0
    %432 = vmatpush1.xpose.msra.mxu0 0.0
    %433 = vmatprep.subr.mxu0 0.0
    %434 = vmatpush1.xpose.msra.mxu0 0.0
    %435 = vmatprep.subr.mxu0 0.0
    %436 = vmatpush1.xpose.msra.mxu0 0.0
    %437 = vmatprep.subr.mxu0 0.0
    %438 = vmatpush1.xpose.msra.mxu0 0.0
    %439 = vmatprep.subr.mxu0 0.0
    %440 = vmatpush1.xpose.msra.mxu0 0.0
    %441 = vmatprep.subr.mxu0 0.0
    %442 = vmatpush1.xpose.msra.mxu0 0.0
    %443 = vmatprep.subr.mxu0 0.0
    %444 = vmatpush1.xpose.msra.mxu0 0.0
    %445 = vmatprep.subr.mxu0 0.0
    %446 = vmatpush1.xpose.msra.mxu0 0.0
    %447 = vmatprep.subr.mxu0 0.0
    %448 = vmatpush1.xpose.msra.mxu0 0.0
    %449 = vmatprep.subr.mxu0 0.0
    %450 = vmatpush1.xpose.msra.mxu0 0.0
    %451 = vmatprep.subr.mxu0 0.0
    %452 = vmatpush1.xpose.msra.mxu0 0.0
    %453 = vmatprep.subr.mxu0 0.0
    %454 = vmatpush1.xpose.msra.mxu0 0.0
    %455 = vmatprep.subr.mxu0 0.0
    %456 = vmatpush1.xpose.msra.mxu0 0.0
    %457 = vmatprep.subr.mxu0 0.0
    %458 = vmatpush1.xpose.msra.mxu0 0.0
    %459 = vmatprep.subr.mxu0 0.0
    %460 = vmatpush1.xpose.msra.mxu0 0.0
    %461 = vmatprep.subr.mxu0 0.0
    %462 = vmatpush1.xpose.msra.mxu0 0.0
    %463 = vmatprep.mubr.f32.mxu0 0.0
    %464 = vmatmul.mubr.f32.gmra.mrb[0].mxu0 %v395
    %v465 = vpop.f32.mrb[0].mxu0
    %v466 = vadd.f32 0.0, %v465
    %v467 = vpop.f32.mrb[0].mxu0
    %468 = vdwg.mxu0
    %469 = vrot.lane.b32.xlu0 %v306, 96
    %v470 = vpop.permute.xlu0 %469
    %v471 = vsel %vm318, %v306, 0
    %v473 = vsel %vm318, %v470, 0
    %475 = vmatprep.subr.mxu0 0.0
    %476 = vmatpush1.xpose.msra.mxu0 %v473
    %477 = vmatprep.subr.mxu0 0.0
    %478 = vmatpush1.xpose.msra.mxu0 0.0
    %479 = vmatprep.subr.mxu0 0.0
    %480 = vmatpush1.xpose.msra.mxu0 0.0
    %481 = vmatprep.subr.mxu0 0.0
    %482 = vmatpush1.xpose.msra.mxu0 0.0
    %483 = vmatprep.subr.mxu0 0.0
    %484 = vmatpush1.xpose.msra.mxu0 0.0
    %485 = vmatprep.subr.mxu0 0.0
    %486 = vmatpush1.xpose.msra.mxu0 0.0
    %487 = vmatprep.subr.mxu0 0.0
    %488 = vmatpush1.xpose.msra.mxu0 0.0
    %489 = vmatprep.subr.mxu0 0.0
    %490 = vmatpush1.xpose.msra.mxu0 0.0
    %491 = vmatprep.subr.mxu0 0.0
    %492 = vmatpush1.xpose.msra.mxu0 0.0
    %493 = vmatprep.subr.mxu0 0.0
    %494 = vmatpush1.xpose.msra.mxu0 0.0
    %495 = vmatprep.subr.mxu0 0.0
    %496 = vmatpush1.xpose.msra.mxu0 0.0
    %497 = vmatprep.subr.mxu0 0.0
    %498 = vmatpush1.xpose.msra.mxu0 0.0
    %499 = vmatprep.subr.mxu0 0.0
    %500 = vmatpush1.xpose.msra.mxu0 0.0
    %501 = vmatprep.subr.mxu0 0.0
    %502 = vmatpush1.xpose.msra.mxu0 0.0
    %503 = vmatprep.subr.mxu0 0.0
    %504 = vmatpush1.xpose.msra.mxu0 0.0
    %505 = vmatprep.subr.mxu0 0.0
    %506 = vmatpush1.xpose.msra.mxu0 0.0
    %507 = vmatprep.subr.mxu0 0.0
    %508 = vmatpush1.xpose.msra.mxu0 0.0
    %509 = vmatprep.subr.mxu0 0.0
    %510 = vmatpush1.xpose.msra.mxu0 0.0
    %511 = vmatprep.subr.mxu0 0.0
    %512 = vmatpush1.xpose.msra.mxu0 0.0
    %513 = vmatprep.subr.mxu0 0.0
    %514 = vmatpush1.xpose.msra.mxu0 0.0
    %515 = vmatprep.subr.mxu0 0.0
    %516 = vmatpush1.xpose.msra.mxu0 0.0
    %517 = vmatprep.subr.mxu0 0.0
    %518 = vmatpush1.xpose.msra.mxu0 0.0
    %519 = vmatprep.subr.mxu0 0.0
    %520 = vmatpush1.xpose.msra.mxu0 0.0
    %521 = vmatprep.subr.mxu0 0.0
    %522 = vmatpush1.xpose.msra.mxu0 0.0
    %523 = vmatprep.subr.mxu0 0.0
    %524 = vmatpush1.xpose.msra.mxu0 0.0
    %525 = vmatprep.subr.mxu0 0.0
    %526 = vmatpush1.xpose.msra.mxu0 0.0
    %527 = vmatprep.subr.mxu0 0.0
    %528 = vmatpush1.xpose.msra.mxu0 0.0
    %529 = vmatprep.subr.mxu0 0.0
    %530 = vmatpush1.xpose.msra.mxu0 0.0
    %531 = vmatprep.subr.mxu0 0.0
    %532 = vmatpush1.xpose.msra.mxu0 0.0
    %533 = vmatprep.subr.mxu0 0.0
    %534 = vmatpush1.xpose.msra.mxu0 0.0
    %535 = vmatprep.subr.mxu0 0.0
    %536 = vmatpush1.xpose.msra.mxu0 0.0
    %537 = vmatprep.subr.mxu0 0.0
    %538 = vmatpush1.xpose.msra.mxu0 0.0
    %539 = vmatprep.mubr.f32.mxu0 0.0
    %540 = vmatmul.mubr.f32.gmra.mrb[0].mxu0 %v471
    %v541 = vpop.f32.mrb[0].mxu0
    %v542 = vadd.f32 0.0, %v541
    %v543 = vpop.f32.mrb[0].mxu0
    %544 = vdwg.mxu0
    %545 = vrot.lane.b32.xlu0 %v308, 96
    %v546 = vpop.permute.xlu0 %545
    %v547 = vsel %vm318, %v308, 0
    %v549 = vsel %vm318, %v546, 0
    %551 = vmatprep.subr.mxu0 0.0
    %552 = vmatpush1.xpose.msra.mxu0 %v549
    %553 = vmatprep.subr.mxu0 0.0
    %554 = vmatpush1.xpose.msra.mxu0 0.0
    %555 = vmatprep.subr.mxu0 0.0
    %556 = vmatpush1.xpose.msra.mxu0 0.0
    %557 = vmatprep.subr.mxu0 0.0
    %558 = vmatpush1.xpose.msra.mxu0 0.0
    %559 = vmatprep.subr.mxu0 0.0
    %560 = vmatpush1.xpose.msra.mxu0 0.0
    %561 = vmatprep.subr.mxu0 0.0
    %562 = vmatpush1.xpose.msra.mxu0 0.0
    %563 = vmatprep.subr.mxu0 0.0
    %564 = vmatpush1.xpose.msra.mxu0 0.0
    %565 = vmatprep.subr.mxu0 0.0
    %566 = vmatpush1.xpose.msra.mxu0 0.0
    %567 = vmatprep.subr.mxu0 0.0
    %568 = vmatpush1.xpose.msra.mxu0 0.0
    %569 = vmatprep.subr.mxu0 0.0
    %570 = vmatpush1.xpose.msra.mxu0 0.0
    %571 = vmatprep.subr.mxu0 0.0
    %572 = vmatpush1.xpose.msra.mxu0 0.0
    %573 = vmatprep.subr.mxu0 0.0
    %574 = vmatpush1.xpose.msra.mxu0 0.0
    %575 = vmatprep.subr.mxu0 0.0
    %576 = vmatpush1.xpose.msra.mxu0 0.0
    %577 = vmatprep.subr.mxu0 0.0
    %578 = vmatpush1.xpose.msra.mxu0 0.0
    %579 = vmatprep.subr.mxu0 0.0
    %580 = vmatpush1.xpose.msra.mxu0 0.0
    %581 = vmatprep.subr.mxu0 0.0
    %582 = vmatpush1.xpose.msra.mxu0 0.0
    %583 = vmatprep.subr.mxu0 0.0
    %584 = vmatpush1.xpose.msra.mxu0 0.0
    %585 = vmatprep.subr.mxu0 0.0
    %586 = vmatpush1.xpose.msra.mxu0 0.0
    %587 = vmatprep.subr.mxu0 0.0
    %588 = vmatpush1.xpose.msra.mxu0 0.0
    %589 = vmatprep.subr.mxu0 0.0
    %590 = vmatpush1.xpose.msra.mxu0 0.0
    %591 = vmatprep.subr.mxu0 0.0
    %592 = vmatpush1.xpose.msra.mxu0 0.0
    %593 = vmatprep.subr.mxu0 0.0
    %594 = vmatpush1.xpose.msra.mxu0 0.0
    %595 = vmatprep.subr.mxu0 0.0
    %596 = vmatpush1.xpose.msra.mxu0 0.0
    %597 = vmatprep.subr.mxu0 0.0
    %598 = vmatpush1.xpose.msra.mxu0 0.0
    %599 = vmatprep.subr.mxu0 0.0
    %600 = vmatpush1.xpose.msra.mxu0 0.0
    %601 = vmatprep.subr.mxu0 0.0
    %602 = vmatpush1.xpose.msra.mxu0 0.0
    %603 = vmatprep.subr.mxu0 0.0
    %604 = vmatpush1.xpose.msra.mxu0 0.0
    %605 = vmatprep.subr.mxu0 0.0
    %606 = vmatpush1.xpose.msra.mxu0 0.0
    %607 = vmatprep.subr.mxu0 0.0
    %608 = vmatpush1.xpose.msra.mxu0 0.0
    %609 = vmatprep.subr.mxu0 0.0
    %610 = vmatpush1.xpose.msra.mxu0 0.0
    %611 = vmatprep.subr.mxu0 0.0
    %612 = vmatpush1.xpose.msra.mxu0 0.0
    %613 = vmatprep.subr.mxu0 0.0
    %614 = vmatpush1.xpose.msra.mxu0 0.0
    %615 = vmatprep.mubr.f32.mxu0 0.0
    %616 = vmatmul.mubr.f32.gmra.mrb[0].mxu0 %v547
    %v617 = vpop.f32.mrb[0].mxu0
    %v618 = vadd.f32 0.0, %v617
    %v619 = vpop.f32.mrb[0].mxu0
    %620 = vdwg.mxu0
    %621 = vrot.lane.b32.xlu0 %v299, 96
    %v622 = vpop.permute.xlu0 %621
    %v623 = vsel %vm318, %v299, 0
    %v625 = vsel %vm318, %v622, 0
    %627 = vmatprep.subr.mxu0 0.0
    %628 = vmatpush1.xpose.msra.mxu0 %v625
    %629 = vmatprep.subr.mxu0 0.0
    %630 = vmatpush1.xpose.msra.mxu0 0.0
    %631 = vmatprep.subr.mxu0 0.0
    %632 = vmatpush1.xpose.msra.mxu0 0.0
    %633 = vmatprep.subr.mxu0 0.0
    %634 = vmatpush1.xpose.msra.mxu0 0.0
    %635 = vmatprep.subr.mxu0 0.0
    %636 = vmatpush1.xpose.msra.mxu0 0.0
    %637 = vmatprep.subr.mxu0 0.0
    %638 = vmatpush1.xpose.msra.mxu0 0.0
    %639 = vmatprep.subr.mxu0 0.0
    %640 = vmatpush1.xpose.msra.mxu0 0.0
    %641 = vmatprep.subr.mxu0 0.0
    %642 = vmatpush1.xpose.msra.mxu0 0.0
    %643 = vmatprep.subr.mxu0 0.0
    %644 = vmatpush1.xpose.msra.mxu0 0.0
    %645 = vmatprep.subr.mxu0 0.0
    %646 = vmatpush1.xpose.msra.mxu0 0.0
    %647 = vmatprep.subr.mxu0 0.0
    %648 = vmatpush1.xpose.msra.mxu0 0.0
    %649 = vmatprep.subr.mxu0 0.0
    %650 = vmatpush1.xpose.msra.mxu0 0.0
    %651 = vmatprep.subr.mxu0 0.0
    %652 = vmatpush1.xpose.msra.mxu0 0.0
    %653 = vmatprep.subr.mxu0 0.0
    %654 = vmatpush1.xpose.msra.mxu0 0.0
    %655 = vmatprep.subr.mxu0 0.0
    %656 = vmatpush1.xpose.msra.mxu0 0.0
    %657 = vmatprep.subr.mxu0 0.0
    %658 = vmatpush1.xpose.msra.mxu0 0.0
    %659 = vmatprep.subr.mxu0 0.0
    %660 = vmatpush1.xpose.msra.mxu0 0.0
    %661 = vmatprep.subr.mxu0 0.0
    %662 = vmatpush1.xpose.msra.mxu0 0.0
    %663 = vmatprep.subr.mxu0 0.0
    %664 = vmatpush1.xpose.msra.mxu0 0.0
    %665 = vmatprep.subr.mxu0 0.0
    %666 = vmatpush1.xpose.msra.mxu0 0.0
    %667 = vmatprep.subr.mxu0 0.0
    %668 = vmatpush1.xpose.msra.mxu0 0.0
    %669 = vmatprep.subr.mxu0 0.0
    %670 = vmatpush1.xpose.msra.mxu0 0.0
    %671 = vmatprep.subr.mxu0 0.0
    %672 = vmatpush1.xpose.msra.mxu0 0.0
    %673 = vmatprep.subr.mxu0 0.0
    %674 = vmatpush1.xpose.msra.mxu0 0.0
    %675 = vmatprep.subr.mxu0 0.0
    %676 = vmatpush1.xpose.msra.mxu0 0.0
    %677 = vmatprep.subr.mxu0 0.0
    %678 = vmatpush1.xpose.msra.mxu0 0.0
    %679 = vmatprep.subr.mxu0 0.0
    %680 = vmatpush1.xpose.msra.mxu0 0.0
    %681 = vmatprep.subr.mxu0 0.0
    %682 = vmatpush1.xpose.msra.mxu0 0.0
    %683 = vmatprep.subr.mxu0 0.0
    %684 = vmatpush1.xpose.msra.mxu0 0.0
    %685 = vmatprep.subr.mxu0 0.0
    %686 = vmatpush1.xpose.msra.mxu0 0.0
    %687 = vmatprep.subr.mxu0 0.0
    %688 = vmatpush1.xpose.msra.mxu0 0.0
    %689 = vmatprep.subr.mxu0 0.0
    %690 = vmatpush1.xpose.msra.mxu0 0.0
    %691 = vmatprep.mubr.f32.mxu0 0.0
    %692 = vmatmul.mubr.f32.gmra.mrb[0].mxu0 %v623
    %v693 = vpop.f32.mrb[0].mxu0
    %v694 = vadd.f32 0.0, %v693
    %v695 = vpop.f32.mrb[0].mxu0
    %696 = vdwg.mxu0
    %697 = vrot.lane.b32.xlu0 %v311, 96
    %v698 = vpop.permute.xlu0 %697
    %v699 = vsel %vm318, %v311, 0
    %v701 = vsel %vm318, %v698, 0
    %703 = vmatprep.subr.mxu0 0.0
    %704 = vmatpush1.xpose.msra.mxu0 %v701
    %705 = vmatprep.subr.mxu0 0.0
    %706 = vmatpush1.xpose.msra.mxu0 0.0
    %707 = vmatprep.subr.mxu0 0.0
    %708 = vmatpush1.xpose.msra.mxu0 0.0
    %709 = vmatprep.subr.mxu0 0.0
    %710 = vmatpush1.xpose.msra.mxu0 0.0
    %711 = vmatprep.subr.mxu0 0.0
    %712 = vmatpush1.xpose.msra.mxu0 0.0
    %713 = vmatprep.subr.mxu0 0.0
    %714 = vmatpush1.xpose.msra.mxu0 0.0
    %715 = vmatprep.subr.mxu0 0.0
    %716 = vmatpush1.xpose.msra.mxu0 0.0
    %717 = vmatprep.subr.mxu0 0.0
    %718 = vmatpush1.xpose.msra.mxu0 0.0
    %719 = vmatprep.subr.mxu0 0.0
    %720 = vmatpush1.xpose.msra.mxu0 0.0
    %721 = vmatprep.subr.mxu0 0.0
    %722 = vmatpush1.xpose.msra.mxu0 0.0
    %723 = vmatprep.subr.mxu0 0.0
    %724 = vmatpush1.xpose.msra.mxu0 0.0
    %725 = vmatprep.subr.mxu0 0.0
    %726 = vmatpush1.xpose.msra.mxu0 0.0
    %727 = vmatprep.subr.mxu0 0.0
    %728 = vmatpush1.xpose.msra.mxu0 0.0
    %729 = vmatprep.subr.mxu0 0.0
    %730 = vmatpush1.xpose.msra.mxu0 0.0
    %731 = vmatprep.subr.mxu0 0.0
    %732 = vmatpush1.xpose.msra.mxu0 0.0
    %733 = vmatprep.subr.mxu0 0.0
    %734 = vmatpush1.xpose.msra.mxu0 0.0
    %735 = vmatprep.subr.mxu0 0.0
    %736 = vmatpush1.xpose.msra.mxu0 0.0
    %737 = vmatprep.subr.mxu0 0.0
    %738 = vmatpush1.xpose.msra.mxu0 0.0
    %739 = vmatprep.subr.mxu0 0.0
    %740 = vmatpush1.xpose.msra.mxu0 0.0
    %741 = vmatprep.subr.mxu0 0.0
    %742 = vmatpush1.xpose.msra.mxu0 0.0
    %743 = vmatprep.subr.mxu0 0.0
    %744 = vmatpush1.xpose.msra.mxu0 0.0
    %745 = vmatprep.subr.mxu0 0.0
    %746 = vmatpush1.xpose.msra.mxu0 0.0
    %747 = vmatprep.subr.mxu0 0.0
    %748 = vmatpush1.xpose.msra.mxu0 0.0
    %749 = vmatprep.subr.mxu0 0.0
    %750 = vmatpush1.xpose.msra.mxu0 0.0
    %751 = vmatprep.subr.mxu0 0.0
    %752 = vmatpush1.xpose.msra.mxu0 0.0
    %753 = vmatprep.subr.mxu0 0.0
    %754 = vmatpush1.xpose.msra.mxu0 0.0
    %755 = vmatprep.subr.mxu0 0.0
    %756 = vmatpush1.xpose.msra.mxu0 0.0
    %757 = vmatprep.subr.mxu0 0.0
    %758 = vmatpush1.xpose.msra.mxu0 0.0
    %759 = vmatprep.subr.mxu0 0.0
    %760 = vmatpush1.xpose.msra.mxu0 0.0
    %761 = vmatprep.subr.mxu0 0.0
    %762 = vmatpush1.xpose.msra.mxu0 0.0
    %763 = vmatprep.subr.mxu0 0.0
    %764 = vmatpush1.xpose.msra.mxu0 0.0
    %765 = vmatprep.subr.mxu0 0.0
    %766 = vmatpush1.xpose.msra.mxu0 0.0
    %767 = vmatprep.mubr.f32.mxu0 0.0
    %768 = vmatmul.mubr.f32.gmra.mrb[0].mxu0 %v699
    %v769 = vpop.f32.mrb[0].mxu0
    %v770 = vadd.f32 0.0, %v769
    %v771 = vpop.f32.mrb[0].mxu0
    %772 = vdwg.mxu0
    %773 = vrot.lane.b32.xlu0 %v313, 96
    %v774 = vpop.permute.xlu0 %773
    %v775 = vsel %vm318, %v313, 0
    %v777 = vsel %vm318, %v774, 0
    %779 = vmatprep.subr.mxu0 0.0
    %780 = vmatpush1.xpose.msra.mxu0 %v777
    %781 = vmatprep.subr.mxu0 0.0
    %782 = vmatpush1.xpose.msra.mxu0 0.0
    %783 = vmatprep.subr.mxu0 0.0
    %784 = vmatpush1.xpose.msra.mxu0 0.0
    %785 = vmatprep.subr.mxu0 0.0
    %786 = vmatpush1.xpose.msra.mxu0 0.0
    %787 = vmatprep.subr.mxu0 0.0
    %788 = vmatpush1.xpose.msra.mxu0 0.0
    %789 = vmatprep.subr.mxu0 0.0
    %790 = vmatpush1.xpose.msra.mxu0 0.0
    %791 = vmatprep.subr.mxu0 0.0
    %792 = vmatpush1.xpose.msra.mxu0 0.0
    %793 = vmatprep.subr.mxu0 0.0
    %794 = vmatpush1.xpose.msra.mxu0 0.0
    %795 = vmatprep.subr.mxu0 0.0
    %796 = vmatpush1.xpose.msra.mxu0 0.0
    %797 = vmatprep.subr.mxu0 0.0
    %798 = vmatpush1.xpose.msra.mxu0 0.0
    %799 = vmatprep.subr.mxu0 0.0
    %800 = vmatpush1.xpose.msra.mxu0 0.0
    %801 = vmatprep.subr.mxu0 0.0
    %802 = vmatpush1.xpose.msra.mxu0 0.0
    %803 = vmatprep.subr.mxu0 0.0
    %804 = vmatpush1.xpose.msra.mxu0 0.0
    %805 = vmatprep.subr.mxu0 0.0
    %806 = vmatpush1.xpose.msra.mxu0 0.0
    %807 = vmatprep.subr.mxu0 0.0
    %808 = vmatpush1.xpose.msra.mxu0 0.0
    %809 = vmatprep.subr.mxu0 0.0
    %810 = vmatpush1.xpose.msra.mxu0 0.0
    %811 = vmatprep.subr.mxu0 0.0
    %812 = vmatpush1.xpose.msra.mxu0 0.0
    %813 = vmatprep.subr.mxu0 0.0
    %814 = vmatpush1.xpose.msra.mxu0 0.0
    %815 = vmatprep.subr.mxu0 0.0
    %816 = vmatpush1.xpose.msra.mxu0 0.0
    %817 = vmatprep.subr.mxu0 0.0
    %818 = vmatpush1.xpose.msra.mxu0 0.0
    %819 = vmatprep.subr.mxu0 0.0
    %820 = vmatpush1.xpose.msra.mxu0 0.0
    %821 = vmatprep.subr.mxu0 0.0
    %822 = vmatpush1.xpose.msra.mxu0 0.0
    %823 = vmatprep.subr.mxu0 0.0
    %824 = vmatpush1.xpose.msra.mxu0 0.0
    %825 = vmatprep.subr.mxu0 0.0
    %826 = vmatpush1.xpose.msra.mxu0 0.0
    %827 = vmatprep.subr.mxu0 0.0
    %828 = vmatpush1.xpose.msra.mxu0 0.0
    %829 = vmatprep.subr.mxu0 0.0
    %830 = vmatpush1.xpose.msra.mxu0 0.0
    %831 = vmatprep.subr.mxu0 0.0
    %832 = vmatpush1.xpose.msra.mxu0 0.0
    %833 = vmatprep.subr.mxu0 0.0
    %834 = vmatpush1.xpose.msra.mxu0 0.0
    %835 = vmatprep.subr.mxu0 0.0
    %836 = vmatpush1.xpose.msra.mxu0 0.0
    %837 = vmatprep.subr.mxu0 0.0
    %838 = vmatpush1.xpose.msra.mxu0 0.0
    %839 = vmatprep.subr.mxu0 0.0
    %840 = vmatpush1.xpose.msra.mxu0 0.0
    %841 = vmatprep.subr.mxu0 0.0
    %842 = vmatpush1.xpose.msra.mxu0 0.0
    %843 = vmatprep.mubr.f32.mxu0 0.0
    %844 = vmatmul.mubr.f32.gmra.mrb[0].mxu0 %v775
    %v845 = vpop.f32.mrb[0].mxu0
    %v846 = vadd.f32 0.0, %v845
    %v847 = vpop.f32.mrb[0].mxu0
    %848 = vdwg.mxu0
    %849 = vrot.lane.b32.xlu0 %v315, 96
    %v850 = vpop.permute.xlu0 %849
    %v851 = vsel %vm318, %v315, 0
    %v853 = vsel %vm318, %v850, 0
    %855 = vmatprep.subr.mxu0 0.0
    %856 = vmatpush1.xpose.msra.mxu0 %v853
    %857 = vmatprep.subr.mxu0 0.0
    %858 = vmatpush1.xpose.msra.mxu0 0.0
    %859 = vmatprep.subr.mxu0 0.0
    %860 = vmatpush1.xpose.msra.mxu0 0.0
    %861 = vmatprep.subr.mxu0 0.0
    %862 = vmatpush1.xpose.msra.mxu0 0.0
    %863 = vmatprep.subr.mxu0 0.0
    %864 = vmatpush1.xpose.msra.mxu0 0.0
    %865 = vmatprep.subr.mxu0 0.0
    %866 = vmatpush1.xpose.msra.mxu0 0.0
    %867 = vmatprep.subr.mxu0 0.0
    %868 = vmatpush1.xpose.msra.mxu0 0.0
    %869 = vmatprep.subr.mxu0 0.0
    %870 = vmatpush1.xpose.msra.mxu0 0.0
    %871 = vmatprep.subr.mxu0 0.0
    %872 = vmatpush1.xpose.msra.mxu0 0.0
    %873 = vmatprep.subr.mxu0 0.0
    %874 = vmatpush1.xpose.msra.mxu0 0.0
    %875 = vmatprep.subr.mxu0 0.0
    %876 = vmatpush1.xpose.msra.mxu0 0.0
    %877 = vmatprep.subr.mxu0 0.0
    %878 = vmatpush1.xpose.msra.mxu0 0.0
    %879 = vmatprep.subr.mxu0 0.0
    %880 = vmatpush1.xpose.msra.mxu0 0.0
    %881 = vmatprep.subr.mxu0 0.0
    %882 = vmatpush1.xpose.msra.mxu0 0.0
    %883 = vmatprep.subr.mxu0 0.0
    %884 = vmatpush1.xpose.msra.mxu0 0.0
    %885 = vmatprep.subr.mxu0 0.0
    %886 = vmatpush1.xpose.msra.mxu0 0.0
    %887 = vmatprep.subr.mxu0 0.0
    %888 = vmatpush1.xpose.msra.mxu0 0.0
    %889 = vmatprep.subr.mxu0 0.0
    %890 = vmatpush1.xpose.msra.mxu0 0.0
    %891 = vmatprep.subr.mxu0 0.0
    %892 = vmatpush1.xpose.msra.mxu0 0.0
    %893 = vmatprep.subr.mxu0 0.0
    %894 = vmatpush1.xpose.msra.mxu0 0.0
    %895 = vmatprep.subr.mxu0 0.0
    %896 = vmatpush1.xpose.msra.mxu0 0.0
    %897 = vmatprep.subr.mxu0 0.0
    %898 = vmatpush1.xpose.msra.mxu0 0.0
    %899 = vmatprep.subr.mxu0 0.0
    %900 = vmatpush1.xpose.msra.mxu0 0.0
    %901 = vmatprep.subr.mxu0 0.0
    %902 = vmatpush1.xpose.msra.mxu0 0.0
    %903 = vmatprep.subr.mxu0 0.0
    %904 = vmatpush1.xpose.msra.mxu0 0.0
    %905 = vmatprep.subr.mxu0 0.0
    %906 = vmatpush1.xpose.msra.mxu0 0.0
    %907 = vmatprep.subr.mxu0 0.0
    %908 = vmatpush1.xpose.msra.mxu0 0.0
    %909 = vmatprep.subr.mxu0 0.0
    %910 = vmatpush1.xpose.msra.mxu0 0.0
    %911 = vmatprep.subr.mxu0 0.0
    %912 = vmatpush1.xpose.msra.mxu0 0.0
    %913 = vmatprep.subr.mxu0 0.0
    %914 = vmatpush1.xpose.msra.mxu0 0.0
    %915 = vmatprep.subr.mxu0 0.0
    %916 = vmatpush1.xpose.msra.mxu0 0.0
    %917 = vmatprep.subr.mxu0 0.0
    %918 = vmatpush1.xpose.msra.mxu0 0.0
    %919 = vmatprep.mubr.f32.mxu0 0.0
    %920 = vmatmul.mubr.f32.gmra.mrb[0].mxu0 %v851
    %v921 = vpop.f32.mrb[0].mxu0
    %v922 = vadd.f32 0.0, %v921
    %v923 = vpop.f32.mrb[0].mxu0
    %924 = vdwg.mxu0
    %v925 = vmul.f32 %v390, 0.17677669
    %v926 = vmul.f32 %v466, 0.17677669
    %v927 = vmul.f32 %v542, 0.17677669
    %v928 = vmul.f32 %v618, 0.17677669
    %v929 = vmul.f32 %v694, 0.17677669
    %v930 = vmul.f32 %v770, 0.17677669
    %v931 = vmul.f32 %v846, 0.17677669
    %v932 = vmul.f32 %v922, 0.17677669
    %v933 = vsel %vm170, 1, 0
    %vm934 = vcmp.eq.s32.totalorder %v933, 1
    %v935 = vsel %vm934, %v925, -inf
    %v936 = vsel %vm934, %v926, -inf
    %v937 = vsel %vm934, %v927, -inf
    %v938 = vsel %vm934, %v928, -inf
    %v939 = vsel %vm934, %v929, -inf
    %v940 = vsel %vm934, %v930, -inf
    %v941 = vsel %vm934, %v931, -inf
    %v942 = vsel %vm934, %v932, -inf
    %v943 = vsel %vm318, %v935, -inf
    %944 = vmax.xlane.f32.xlu0 %v943
    %v945 = vpop.xlane.xlu0 %944
    %v946 = vsel %vm318, %v936, -inf
    %947 = vmax.xlane.f32.xlu0 %v946
    %v948 = vpop.xlane.xlu0 %947
    %v949 = vsel %vm318, %v937, -inf
    %950 = vmax.xlane.f32.xlu0 %v949
    %v951 = vpop.xlane.xlu0 %950
    %v952 = vsel %vm318, %v938, -inf
    %953 = vmax.xlane.f32.xlu0 %v952
    %v954 = vpop.xlane.xlu0 %953
    %v955 = vsel %vm318, %v939, -inf
    %956 = vmax.xlane.f32.xlu0 %v955
    %v957 = vpop.xlane.xlu0 %956
    %v958 = vsel %vm318, %v940, -inf
    %959 = vmax.xlane.f32.xlu0 %v958
    %v960 = vpop.xlane.xlu0 %959
    %v961 = vsel %vm318, %v941, -inf
    %962 = vmax.xlane.f32.xlu0 %v961
    %v963 = vpop.xlane.xlu0 %962
    %v964 = vsel %vm318, %v942, -inf
    %965 = vmax.xlane.f32.xlu0 %v964
    %v966 = vpop.xlane.xlu0 %965
    %v967 = vsub.f32 %v935, %v945
    %v968 = vsub.f32 %v936, %v948
    %v969 = vsub.f32 %v937, %v951
    %v970 = vsub.f32 %v938, %v954
    %v971 = vsub.f32 %v939, %v957
    %v972 = vsub.f32 %v940, %v960
    %v973 = vsub.f32 %v941, %v963
    %v974 = vsub.f32 %v942, %v966
    %v975 = vmul.f32 %v967, 1.442695
    %v976 = vpow.pop %v975
    %v977 = vmul.f32 %v968, 1.442695
    %v978 = vpow.pop %v977
    %v979 = vmul.f32 %v969, 1.442695
    %v980 = vpow.pop %v979
    %v981 = vmul.f32 %v970, 1.442695
    %v982 = vpow.pop %v981
    %v983 = vmul.f32 %v971, 1.442695
    %v984 = vpow.pop %v983
    %v985 = vmul.f32 %v972, 1.442695
    %v986 = vpow.pop %v985
    %v987 = vmul.f32 %v973, 1.442695
    %v988 = vpow.pop %v987
    %v989 = vmul.f32 %v974, 1.442695
    %v990 = vpow.pop %v989
    %v991 = vsel %vm318, %v976, 0.0
    %992 = vadd.xlane.f32.xlu0 %v991
    %v993 = vpop.xlane.xlu0 %992
    %v994 = vsel %vm318, %v978, 0.0
    %995 = vadd.xlane.f32.xlu0 %v994
    %v996 = vpop.xlane.xlu0 %995
    %v997 = vsel %vm318, %v980, 0.0
    %998 = vadd.xlane.f32.xlu0 %v997
    %v999 = vpop.xlane.xlu0 %998
    %v1000 = vsel %vm318, %v982, 0.0
    %1001 = vadd.xlane.f32.xlu0 %v1000
    %v1002 = vpop.xlane.xlu0 %1001
    %v1003 = vsel %vm318, %v984, 0.0
    %1004 = vadd.xlane.f32.xlu0 %v1003
    %v1005 = vpop.xlane.xlu0 %1004
    %v1006 = vsel %vm318, %v986, 0.0
    %1007 = vadd.xlane.f32.xlu0 %v1006
    %v1008 = vpop.xlane.xlu0 %1007
    %v1009 = vsel %vm318, %v988, 0.0
    %1010 = vadd.xlane.f32.xlu0 %v1009
    %v1011 = vpop.xlane.xlu0 %1010
    %v1012 = vsel %vm318, %v990, 0.0
    %1013 = vadd.xlane.f32.xlu0 %v1012
    %v1014 = vpop.xlane.xlu0 %1013
    %v1015 = vrcp.pop %v993
    %v1016 = vmul.f32 %v976, %v1015
    %v1017 = vrcp.pop %v996
    %v1018 = vmul.f32 %v978, %v1017
    %v1019 = vrcp.pop %v999
    %v1020 = vmul.f32 %v980, %v1019
    %v1021 = vrcp.pop %v1002
    %v1022 = vmul.f32 %v982, %v1021
    %v1023 = vrcp.pop %v1005
    %v1024 = vmul.f32 %v984, %v1023
    %v1025 = vrcp.pop %v1008
    %v1026 = vmul.f32 %v986, %v1025
    %v1027 = vrcp.pop %v1011
    %v1028 = vmul.f32 %v988, %v1027
    %v1029 = vrcp.pop %v1014
    %v1030 = vmul.f32 %v990, %v1029
    %1031 = vrot.lane.b32.xlu0 %v294, 64
    %v1032 = vpop.permute.xlu0 %1031
    %v1035 = vsel %vm318, %v1016, 0
    %1037 = vmatprep.subr.mxu0 0.0
    %1038 = vmatpush1.msra.mxu0 %v1032
    %1039 = vmatprep.subr.mxu0 0.0
    %1040 = vmatpush1.msra.mxu0 0.0
    %1041 = vmatprep.subr.mxu0 0.0
    %1042 = vmatpush1.msra.mxu0 0.0
    %1043 = vmatprep.subr.mxu0 0.0
    %1044 = vmatpush1.msra.mxu0 0.0
    %1045 = vmatprep.subr.mxu0 0.0
    %1046 = vmatpush1.msra.mxu0 0.0
    %1047 = vmatprep.subr.mxu0 0.0
    %1048 = vmatpush1.msra.mxu0 0.0
    %1049 = vmatprep.subr.mxu0 0.0
    %1050 = vmatpush1.msra.mxu0 0.0
    %1051 = vmatprep.subr.mxu0 0.0
    %1052 = vmatpush1.msra.mxu0 0.0
    %1053 = vmatprep.subr.mxu0 0.0
    %1054 = vmatpush1.msra.mxu0 0.0
    %1055 = vmatprep.subr.mxu0 0.0
    %1056 = vmatpush1.msra.mxu0 0.0
    %1057 = vmatprep.subr.mxu0 0.0
    %1058 = vmatpush1.msra.mxu0 0.0
    %1059 = vmatprep.subr.mxu0 0.0
    %1060 = vmatpush1.msra.mxu0 0.0
    %1061 = vmatprep.subr.mxu0 0.0
    %1062 = vmatpush1.msra.mxu0 0.0
    %1063 = vmatprep.subr.mxu0 0.0
    %1064 = vmatpush1.msra.mxu0 0.0
    %1065 = vmatprep.subr.mxu0 0.0
    %1066 = vmatpush1.msra.mxu0 0.0
    %1067 = vmatprep.subr.mxu0 0.0
    %1068 = vmatpush1.msra.mxu0 0.0
    %1069 = vmatprep.subr.mxu0 0.0
    %1070 = vmatpush1.msra.mxu0 0.0
    %1071 = vmatprep.subr.mxu0 0.0
    %1072 = vmatpush1.msra.mxu0 0.0
    %1073 = vmatprep.subr.mxu0 0.0
    %1074 = vmatpush1.msra.mxu0 0.0
    %1075 = vmatprep.subr.mxu0 0.0
    %1076 = vmatpush1.msra.mxu0 0.0
    %1077 = vmatprep.subr.mxu0 0.0
    %1078 = vmatpush1.msra.mxu0 0.0
    %1079 = vmatprep.subr.mxu0 0.0
    %1080 = vmatpush1.msra.mxu0 0.0
    %1081 = vmatprep.subr.mxu0 0.0
    %1082 = vmatpush1.msra.mxu0 0.0
    %1083 = vmatprep.subr.mxu0 0.0
    %1084 = vmatpush1.msra.mxu0 0.0
    %1085 = vmatprep.subr.mxu0 0.0
    %1086 = vmatpush1.msra.mxu0 0.0
    %1087 = vmatprep.subr.mxu0 0.0
    %1088 = vmatpush1.msra.mxu0 0.0
    %1089 = vmatprep.subr.mxu0 0.0
    %1090 = vmatpush1.msra.mxu0 0.0
    %1091 = vmatprep.subr.mxu0 0.0
    %1092 = vmatpush1.msra.mxu0 0.0
    %1093 = vmatprep.subr.mxu0 0.0
    %1094 = vmatpush1.msra.mxu0 0.0
    %1095 = vmatprep.subr.mxu0 0.0
    %1096 = vmatpush1.msra.mxu0 0.0
    %1097 = vmatprep.subr.mxu0 0.0
    %1098 = vmatpush1.msra.mxu0 0.0
    %1099 = vmatprep.subr.mxu0 0.0
    %1100 = vmatpush1.msra.mxu0 0.0
    %1101 = vmatprep.mubr.f32.mxu0 0.0
    %1102 = vmatmul.mubr.f32.gmra.mrb[0].mxu0 %v1035
    %v1103 = vpop.f32.mrb[0].mxu0
    %v1104 = vadd.f32 0.0, %v1103
    %v1105 = vpop.f32.mrb[0].mxu0
    %1106 = vdwg.mxu0
    %1107 = vrot.lane.b32.xlu0 %v304, 64
    %v1108 = vpop.permute.xlu0 %1107
    %v1111 = vsel %vm318, %v1018, 0
    %1113 = vmatprep.subr.mxu0 0.0
    %1114 = vmatpush1.msra.mxu0 %v1108
    %1115 = vmatprep.subr.mxu0 0.0
    %1116 = vmatpush1.msra.mxu0 0.0
    %1117 = vmatprep.subr.mxu0 0.0
    %1118 = vmatpush1.msra.mxu0 0.0
    %1119 = vmatprep.subr.mxu0 0.0
    %1120 = vmatpush1.msra.mxu0 0.0
    %1121 = vmatprep.subr.mxu0 0.0
    %1122 = vmatpush1.msra.mxu0 0.0
    %1123 = vmatprep.subr.mxu0 0.0
    %1124 = vmatpush1.msra.mxu0 0.0
    %1125 = vmatprep.subr.mxu0 0.0
    %1126 = vmatpush1.msra.mxu0 0.0
    %1127 = vmatprep.subr.mxu0 0.0
    %1128 = vmatpush1.msra.mxu0 0.0
    %1129 = vmatprep.subr.mxu0 0.0
    %1130 = vmatpush1.msra.mxu0 0.0
    %1131 = vmatprep.subr.mxu0 0.0
    %1132 = vmatpush1.msra.mxu0 0.0
    %1133 = vmatprep.subr.mxu0 0.0
    %1134 = vmatpush1.msra.mxu0 0.0
    %1135 = vmatprep.subr.mxu0 0.0
    %1136 = vmatpush1.msra.mxu0 0.0
    %1137 = vmatprep.subr.mxu0 0.0
    %1138 = vmatpush1.msra.mxu0 0.0
    %1139 = vmatprep.subr.mxu0 0.0
    %1140 = vmatpush1.msra.mxu0 0.0
    %1141 = vmatprep.subr.mxu0 0.0
    %1142 = vmatpush1.msra.mxu0 0.0
    %1143 = vmatprep.subr.mxu0 0.0
    %1144 = vmatpush1.msra.mxu0 0.0
    %1145 = vmatprep.subr.mxu0 0.0
    %1146 = vmatpush1.msra.mxu0 0.0
    %1147 = vmatprep.subr.mxu0 0.0
    %1148 = vmatpush1.msra.mxu0 0.0
    %1149 = vmatprep.subr.mxu0 0.0
    %1150 = vmatpush1.msra.mxu0 0.0
    %1151 = vmatprep.subr.mxu0 0.0
    %1152 = vmatpush1.msra.mxu0 0.0
    %1153 = vmatprep.subr.mxu0 0.0
    %1154 = vmatpush1.msra.mxu0 0.0
    %1155 = vmatprep.subr.mxu0 0.0
    %1156 = vmatpush1.msra.mxu0 0.0
    %1157 = vmatprep.subr.mxu0 0.0
    %1158 = vmatpush1.msra.mxu0 0.0
    %1159 = vmatprep.subr.mxu0 0.0
    %1160 = vmatpush1.msra.mxu0 0.0
    %1161 = vmatprep.subr.mxu0 0.0
    %1162 = vmatpush1.msra.mxu0 0.0
    %1163 = vmatprep.subr.mxu0 0.0
    %1164 = vmatpush1.msra.mxu0 0.0
    %1165 = vmatprep.subr.mxu0 0.0
    %1166 = vmatpush1.msra.mxu0 0.0
    %1167 = vmatprep.subr.mxu0 0.0
    %1168 = vmatpush1.msra.mxu0 0.0
    %1169 = vmatprep.subr.mxu0 0.0
    %1170 = vmatpush1.msra.mxu0 0.0
    %1171 = vmatprep.subr.mxu0 0.0
    %1172 = vmatpush1.msra.mxu0 0.0
    %1173 = vmatprep.subr.mxu0 0.0
    %1174 = vmatpush1.msra.mxu0 0.0
    %1175 = vmatprep.subr.mxu0 0.0
    %1176 = vmatpush1.msra.mxu0 0.0
    %1177 = vmatprep.mubr.f32.mxu0 0.0
    %1178 = vmatmul.mubr.f32.gmra.mrb[0].mxu0 %v1111
    %v1179 = vpop.f32.mrb[0].mxu0
    %v1180 = vadd.f32 0.0, %v1179
    %v1181 = vpop.f32.mrb[0].mxu0
    %1182 = vdwg.mxu0
    %1183 = vrot.lane.b32.xlu0 %v306, 64
    %v1184 = vpop.permute.xlu0 %1183
    %v1187 = vsel %vm318, %v1020, 0
    %1189 = vmatprep.subr.mxu0 0.0
    %1190 = vmatpush1.msra.mxu0 %v1184
    %1191 = vmatprep.subr.mxu0 0.0
    %1192 = vmatpush1.msra.mxu0 0.0
    %1193 = vmatprep.subr.mxu0 0.0
    %1194 = vmatpush1.msra.mxu0 0.0
    %1195 = vmatprep.subr.mxu0 0.0
    %1196 = vmatpush1.msra.mxu0 0.0
    %1197 = vmatprep.subr.mxu0 0.0
    %1198 = vmatpush1.msra.mxu0 0.0
    %1199 = vmatprep.subr.mxu0 0.0
    %1200 = vmatpush1.msra.mxu0 0.0
    %1201 = vmatprep.subr.mxu0 0.0
    %1202 = vmatpush1.msra.mxu0 0.0
    %1203 = vmatprep.subr.mxu0 0.0
    %1204 = vmatpush1.msra.mxu0 0.0
    %1205 = vmatprep.subr.mxu0 0.0
    %1206 = vmatpush1.msra.mxu0 0.0
    %1207 = vmatprep.subr.mxu0 0.0
    %1208 = vmatpush1.msra.mxu0 0.0
    %1209 = vmatprep.subr.mxu0 0.0
    %1210 = vmatpush1.msra.mxu0 0.0
    %1211 = vmatprep.subr.mxu0 0.0
    %1212 = vmatpush1.msra.mxu0 0.0
    %1213 = vmatprep.subr.mxu0 0.0
    %1214 = vmatpush1.msra.mxu0 0.0
    %1215 = vmatprep.subr.mxu0 0.0
    %1216 = vmatpush1.msra.mxu0 0.0
    %1217 = vmatprep.subr.mxu0 0.0
    %1218 = vmatpush1.msra.mxu0 0.0
    %1219 = vmatprep.subr.mxu0 0.0
    %1220 = vmatpush1.msra.mxu0 0.0
    %1221 = vmatprep.subr.mxu0 0.0
    %1222 = vmatpush1.msra.mxu0 0.0
    %1223 = vmatprep.subr.mxu0 0.0
    %1224 = vmatpush1.msra.mxu0 0.0
    %1225 = vmatprep.subr.mxu0 0.0
    %1226 = vmatpush1.msra.mxu0 0.0
    %1227 = vmatprep.subr.mxu0 0.0
    %1228 = vmatpush1.msra.mxu0 0.0
    %1229 = vmatprep.subr.mxu0 0.0
    %1230 = vmatpush1.msra.mxu0 0.0
    %1231 = vmatprep.subr.mxu0 0.0
    %1232 = vmatpush1.msra.mxu0 0.0
    %1233 = vmatprep.subr.mxu0 0.0
    %1234 = vmatpush1.msra.mxu0 0.0
    %1235 = vmatprep.subr.mxu0 0.0
    %1236 = vmatpush1.msra.mxu0 0.0
    %1237 = vmatprep.subr.mxu0 0.0
    %1238 = vmatpush1.msra.mxu0 0.0
    %1239 = vmatprep.subr.mxu0 0.0
    %1240 = vmatpush1.msra.mxu0 0.0
    %1241 = vmatprep.subr.mxu0 0.0
    %1242 = vmatpush1.msra.mxu0 0.0
    %1243 = vmatprep.subr.mxu0 0.0
    %1244 = vmatpush1.msra.mxu0 0.0
    %1245 = vmatprep.subr.mxu0 0.0
    %1246 = vmatpush1.msra.mxu0 0.0
    %1247 = vmatprep.subr.mxu0 0.0
    %1248 = vmatpush1.msra.mxu0 0.0
    %1249 = vmatprep.subr.mxu0 0.0
    %1250 = vmatpush1.msra.mxu0 0.0
    %1251 = vmatprep.subr.mxu0 0.0
    %1252 = vmatpush1.msra.mxu0 0.0
    %1253 = vmatprep.mubr.f32.mxu0 0.0
    %1254 = vmatmul.mubr.f32.gmra.mrb[0].mxu0 %v1187
    %v1255 = vpop.f32.mrb[0].mxu0
    %v1256 = vadd.f32 0.0, %v1255
    %v1257 = vpop.f32.mrb[0].mxu0
    %1258 = vdwg.mxu0
    %1259 = vrot.lane.b32.xlu0 %v308, 64
    %v1260 = vpop.permute.xlu0 %1259
    %v1263 = vsel %vm318, %v1022, 0
    %1265 = vmatprep.subr.mxu0 0.0
    %1266 = vmatpush1.msra.mxu0 %v1260
    %1267 = vmatprep.subr.mxu0 0.0
    %1268 = vmatpush1.msra.mxu0 0.0
    %1269 = vmatprep.subr.mxu0 0.0
    %1270 = vmatpush1.msra.mxu0 0.0
    %1271 = vmatprep.subr.mxu0 0.0
    %1272 = vmatpush1.msra.mxu0 0.0
    %1273 = vmatprep.subr.mxu0 0.0
    %1274 = vmatpush1.msra.mxu0 0.0
    %1275 = vmatprep.subr.mxu0 0.0
    %1276 = vmatpush1.msra.mxu0 0.0
    %1277 = vmatprep.subr.mxu0 0.0
    %1278 = vmatpush1.msra.mxu0 0.0
    %1279 = vmatprep.subr.mxu0 0.0
    %1280 = vmatpush1.msra.mxu0 0.0
    %1281 = vmatprep.subr.mxu0 0.0
    %1282 = vmatpush1.msra.mxu0 0.0
    %1283 = vmatprep.subr.mxu0 0.0
    %1284 = vmatpush1.msra.mxu0 0.0
    %1285 = vmatprep.subr.mxu0 0.0
    %1286 = vmatpush1.msra.mxu0 0.0
    %1287 = vmatprep.subr.mxu0 0.0
    %1288 = vmatpush1.msra.mxu0 0.0
    %1289 = vmatprep.subr.mxu0 0.0
    %1290 = vmatpush1.msra.mxu0 0.0
    %1291 = vmatprep.subr.mxu0 0.0
    %1292 = vmatpush1.msra.mxu0 0.0
    %1293 = vmatprep.subr.mxu0 0.0
    %1294 = vmatpush1.msra.mxu0 0.0
    %1295 = vmatprep.subr.mxu0 0.0
    %1296 = vmatpush1.msra.mxu0 0.0
    %1297 = vmatprep.subr.mxu0 0.0
    %1298 = vmatpush1.msra.mxu0 0.0
    %1299 = vmatprep.subr.mxu0 0.0
    %1300 = vmatpush1.msra.mxu0 0.0
    %1301 = vmatprep.subr.mxu0 0.0
    %1302 = vmatpush1.msra.mxu0 0.0
    %1303 = vmatprep.subr.mxu0 0.0
    %1304 = vmatpush1.msra.mxu0 0.0
    %1305 = vmatprep.subr.mxu0 0.0
    %1306 = vmatpush1.msra.mxu0 0.0
    %1307 = vmatprep.subr.mxu0 0.0
    %1308 = vmatpush1.msra.mxu0 0.0
    %1309 = vmatprep.subr.mxu0 0.0
    %1310 = vmatpush1.msra.mxu0 0.0
    %1311 = vmatprep.subr.mxu0 0.0
    %1312 = vmatpush1.msra.mxu0 0.0
    %1313 = vmatprep.subr.mxu0 0.0
    %1314 = vmatpush1.msra.mxu0 0.0
    %1315 = vmatprep.subr.mxu0 0.0
    %1316 = vmatpush1.msra.mxu0 0.0
    %1317 = vmatprep.subr.mxu0 0.0
    %1318 = vmatpush1.msra.mxu0 0.0
    %1319 = vmatprep.subr.mxu0 0.0
    %1320 = vmatpush1.msra.mxu0 0.0
    %1321 = vmatprep.subr.mxu0 0.0
    %1322 = vmatpush1.msra.mxu0 0.0
    %1323 = vmatprep.subr.mxu0 0.0
    %1324 = vmatpush1.msra.mxu0 0.0
    %1325 = vmatprep.subr.mxu0 0.0
    %1326 = vmatpush1.msra.mxu0 0.0
    %1327 = vmatprep.subr.mxu0 0.0
    %1328 = vmatpush1.msra.mxu0 0.0
    %1329 = vmatprep.mubr.f32.mxu0 0.0
    %1330 = vmatmul.mubr.f32.gmra.mrb[0].mxu0 %v1263
    %v1331 = vpop.f32.mrb[0].mxu0
    %v1332 = vadd.f32 0.0, %v1331
    %v1333 = vpop.f32.mrb[0].mxu0
    %1334 = vdwg.mxu0
    %1335 = vrot.lane.b32.xlu0 %v299, 64
    %v1336 = vpop.permute.xlu0 %1335
    %v1339 = vsel %vm318, %v1024, 0
    %1341 = vmatprep.subr.mxu0 0.0
    %1342 = vmatpush1.msra.mxu0 %v1336
    %1343 = vmatprep.subr.mxu0 0.0
    %1344 = vmatpush1.msra.mxu0 0.0
    %1345 = vmatprep.subr.mxu0 0.0
    %1346 = vmatpush1.msra.mxu0 0.0
    %1347 = vmatprep.subr.mxu0 0.0
    %1348 = vmatpush1.msra.mxu0 0.0
    %1349 = vmatprep.subr.mxu0 0.0
    %1350 = vmatpush1.msra.mxu0 0.0
    %1351 = vmatprep.subr.mxu0 0.0
    %1352 = vmatpush1.msra.mxu0 0.0
    %1353 = vmatprep.subr.mxu0 0.0
    %1354 = vmatpush1.msra.mxu0 0.0
    %1355 = vmatprep.subr.mxu0 0.0
    %1356 = vmatpush1.msra.mxu0 0.0
    %1357 = vmatprep.subr.mxu0 0.0
    %1358 = vmatpush1.msra.mxu0 0.0
    %1359 = vmatprep.subr.mxu0 0.0
    %1360 = vmatpush1.msra.mxu0 0.0
    %1361 = vmatprep.subr.mxu0 0.0
    %1362 = vmatpush1.msra.mxu0 0.0
    %1363 = vmatprep.subr.mxu0 0.0
    %1364 = vmatpush1.msra.mxu0 0.0
    %1365 = vmatprep.subr.mxu0 0.0
    %1366 = vmatpush1.msra.mxu0 0.0
    %1367 = vmatprep.subr.mxu0 0.0
    %1368 = vmatpush1.msra.mxu0 0.0
    %1369 = vmatprep.subr.mxu0 0.0
    %1370 = vmatpush1.msra.mxu0 0.0
    %1371 = vmatprep.subr.mxu0 0.0
    %1372 = vmatpush1.msra.mxu0 0.0
    %1373 = vmatprep.subr.mxu0 0.0
    %1374 = vmatpush1.msra.mxu0 0.0
    %1375 = vmatprep.subr.mxu0 0.0
    %1376 = vmatpush1.msra.mxu0 0.0
    %1377 = vmatprep.subr.mxu0 0.0
    %1378 = vmatpush1.msra.mxu0 0.0
    %1379 = vmatprep.subr.mxu0 0.0
    %1380 = vmatpush1.msra.mxu0 0.0
    %1381 = vmatprep.subr.mxu0 0.0
    %1382 = vmatpush1.msra.mxu0 0.0
    %1383 = vmatprep.subr.mxu0 0.0
    %1384 = vmatpush1.msra.mxu0 0.0
    %1385 = vmatprep.subr.mxu0 0.0
    %1386 = vmatpush1.msra.mxu0 0.0
    %1387 = vmatprep.subr.mxu0 0.0
    %1388 = vmatpush1.msra.mxu0 0.0
    %1389 = vmatprep.subr.mxu0 0.0
    %1390 = vmatpush1.msra.mxu0 0.0
    %1391 = vmatprep.subr.mxu0 0.0
    %1392 = vmatpush1.msra.mxu0 0.0
    %1393 = vmatprep.subr.mxu0 0.0
    %1394 = vmatpush1.msra.mxu0 0.0
    %1395 = vmatprep.subr.mxu0 0.0
    %1396 = vmatpush1.msra.mxu0 0.0
    %1397 = vmatprep.subr.mxu0 0.0
    %1398 = vmatpush1.msra.mxu0 0.0
    %1399 = vmatprep.subr.mxu0 0.0
    %1400 = vmatpush1.msra.mxu0 0.0
    %1401 = vmatprep.subr.mxu0 0.0
    %1402 = vmatpush1.msra.mxu0 0.0
    %1403 = vmatprep.subr.mxu0 0.0
    %1404 = vmatpush1.msra.mxu0 0.0
    %1405 = vmatprep.mubr.f32.mxu0 0.0
    %1406 = vmatmul.mubr.f32.gmra.mrb[0].mxu0 %v1339
    %v1407 = vpop.f32.mrb[0].mxu0
    %v1408 = vadd.f32 0.0, %v1407
    %v1409 = vpop.f32.mrb[0].mxu0
    %1410 = vdwg.mxu0
    %1411 = vrot.lane.b32.xlu0 %v311, 64
    %v1412 = vpop.permute.xlu0 %1411
    %v1415 = vsel %vm318, %v1026, 0
    %1417 = vmatprep.subr.mxu0 0.0
    %1418 = vmatpush1.msra.mxu0 %v1412
    %1419 = vmatprep.subr.mxu0 0.0
    %1420 = vmatpush1.msra.mxu0 0.0
    %1421 = vmatprep.subr.mxu0 0.0
    %1422 = vmatpush1.msra.mxu0 0.0
    %1423 = vmatprep.subr.mxu0 0.0
    %1424 = vmatpush1.msra.mxu0 0.0
    %1425 = vmatprep.subr.mxu0 0.0
    %1426 = vmatpush1.msra.mxu0 0.0
    %1427 = vmatprep.subr.mxu0 0.0
    %1428 = vmatpush1.msra.mxu0 0.0
    %1429 = vmatprep.subr.mxu0 0.0
    %1430 = vmatpush1.msra.mxu0 0.0
    %1431 = vmatprep.subr.mxu0 0.0
    %1432 = vmatpush1.msra.mxu0 0.0
    %1433 = vmatprep.subr.mxu0 0.0
    %1434 = vmatpush1.msra.mxu0 0.0
    %1435 = vmatprep.subr.mxu0 0.0
    %1436 = vmatpush1.msra.mxu0 0.0
    %1437 = vmatprep.subr.mxu0 0.0
    %1438 = vmatpush1.msra.mxu0 0.0
    %1439 = vmatprep.subr.mxu0 0.0
    %1440 = vmatpush1.msra.mxu0 0.0
    %1441 = vmatprep.subr.mxu0 0.0
    %1442 = vmatpush1.msra.mxu0 0.0
    %1443 = vmatprep.subr.mxu0 0.0
    %1444 = vmatpush1.msra.mxu0 0.0
    %1445 = vmatprep.subr.mxu0 0.0
    %1446 = vmatpush1.msra.mxu0 0.0
    %1447 = vmatprep.subr.mxu0 0.0
    %1448 = vmatpush1.msra.mxu0 0.0
    %1449 = vmatprep.subr.mxu0 0.0
    %1450 = vmatpush1.msra.mxu0 0.0
    %1451 = vmatprep.subr.mxu0 0.0
    %1452 = vmatpush1.msra.mxu0 0.0
    %1453 = vmatprep.subr.mxu0 0.0
    %1454 = vmatpush1.msra.mxu0 0.0
    %1455 = vmatprep.subr.mxu0 0.0
    %1456 = vmatpush1.msra.mxu0 0.0
    %1457 = vmatprep.subr.mxu0 0.0
    %1458 = vmatpush1.msra.mxu0 0.0
    %1459 = vmatprep.subr.mxu0 0.0
    %1460 = vmatpush1.msra.mxu0 0.0
    %1461 = vmatprep.subr.mxu0 0.0
    %1462 = vmatpush1.msra.mxu0 0.0
    %1463 = vmatprep.subr.mxu0 0.0
    %1464 = vmatpush1.msra.mxu0 0.0
    %1465 = vmatprep.subr.mxu0 0.0
    %1466 = vmatpush1.msra.mxu0 0.0
    %1467 = vmatprep.subr.mxu0 0.0
    %1468 = vmatpush1.msra.mxu0 0.0
    %1469 = vmatprep.subr.mxu0 0.0
    %1470 = vmatpush1.msra.mxu0 0.0
    %1471 = vmatprep.subr.mxu0 0.0
    %1472 = vmatpush1.msra.mxu0 0.0
    %1473 = vmatprep.subr.mxu0 0.0
    %1474 = vmatpush1.msra.mxu0 0.0
    %1475 = vmatprep.subr.mxu0 0.0
    %1476 = vmatpush1.msra.mxu0 0.0
    %1477 = vmatprep.subr.mxu0 0.0
    %1478 = vmatpush1.msra.mxu0 0.0
    %1479 = vmatprep.subr.mxu0 0.0
    %1480 = vmatpush1.msra.mxu0 0.0
    %1481 = vmatprep.mubr.f32.mxu0 0.0
    %1482 = vmatmul.mubr.f32.gmra.mrb[0].mxu0 %v1415
    %v1483 = vpop.f32.mrb[0].mxu0
    %v1484 = vadd.f32 0.0, %v1483
    %v1485 = vpop.f32.mrb[0].mxu0
    %1486 = vdwg.mxu0
    %1487 = vrot.lane.b32.xlu0 %v313, 64
    %v1488 = vpop.permute.xlu0 %1487
    %v1491 = vsel %vm318, %v1028, 0
    %1493 = vmatprep.subr.mxu0 0.0
    %1494 = vmatpush1.msra.mxu0 %v1488
    %1495 = vmatprep.subr.mxu0 0.0
    %1496 = vmatpush1.msra.mxu0 0.0
    %1497 = vmatprep.subr.mxu0 0.0
    %1498 = vmatpush1.msra.mxu0 0.0
    %1499 = vmatprep.subr.mxu0 0.0
    %1500 = vmatpush1.msra.mxu0 0.0
    %1501 = vmatprep.subr.mxu0 0.0
    %1502 = vmatpush1.msra.mxu0 0.0
    %1503 = vmatprep.subr.mxu0 0.0
    %1504 = vmatpush1.msra.mxu0 0.0
    %1505 = vmatprep.subr.mxu0 0.0
    %1506 = vmatpush1.msra.mxu0 0.0
    %1507 = vmatprep.subr.mxu0 0.0
    %1508 = vmatpush1.msra.mxu0 0.0
    %1509 = vmatprep.subr.mxu0 0.0
    %1510 = vmatpush1.msra.mxu0 0.0
    %1511 = vmatprep.subr.mxu0 0.0
    %1512 = vmatpush1.msra.mxu0 0.0
    %1513 = vmatprep.subr.mxu0 0.0
    %1514 = vmatpush1.msra.mxu0 0.0
    %1515 = vmatprep.subr.mxu0 0.0
    %1516 = vmatpush1.msra.mxu0 0.0
    %1517 = vmatprep.subr.mxu0 0.0
    %1518 = vmatpush1.msra.mxu0 0.0
    %1519 = vmatprep.subr.mxu0 0.0
    %1520 = vmatpush1.msra.mxu0 0.0
    %1521 = vmatprep.subr.mxu0 0.0
    %1522 = vmatpush1.msra.mxu0 0.0
    %1523 = vmatprep.subr.mxu0 0.0
    %1524 = vmatpush1.msra.mxu0 0.0
    %1525 = vmatprep.subr.mxu0 0.0
    %1526 = vmatpush1.msra.mxu0 0.0
    %1527 = vmatprep.subr.mxu0 0.0
    %1528 = vmatpush1.msra.mxu0 0.0
    %1529 = vmatprep.subr.mxu0 0.0
    %1530 = vmatpush1.msra.mxu0 0.0
    %1531 = vmatprep.subr.mxu0 0.0
    %1532 = vmatpush1.msra.mxu0 0.0
    %1533 = vmatprep.subr.mxu0 0.0
    %1534 = vmatpush1.msra.mxu0 0.0
    %1535 = vmatprep.subr.mxu0 0.0
    %1536 = vmatpush1.msra.mxu0 0.0
    %1537 = vmatprep.subr.mxu0 0.0
    %1538 = vmatpush1.msra.mxu0 0.0
    %1539 = vmatprep.subr.mxu0 0.0
    %1540 = vmatpush1.msra.mxu0 0.0
    %1541 = vmatprep.subr.mxu0 0.0
    %1542 = vmatpush1.msra.mxu0 0.0
    %1543 = vmatprep.subr.mxu0 0.0
    %1544 = vmatpush1.msra.mxu0 0.0
    %1545 = vmatprep.subr.mxu0 0.0
    %1546 = vmatpush1.msra.mxu0 0.0
    %1547 = vmatprep.subr.mxu0 0.0
    %1548 = vmatpush1.msra.mxu0 0.0
    %1549 = vmatprep.subr.mxu0 0.0
    %1550 = vmatpush1.msra.mxu0 0.0
    %1551 = vmatprep.subr.mxu0 0.0
    %1552 = vmatpush1.msra.mxu0 0.0
    %1553 = vmatprep.subr.mxu0 0.0
    %1554 = vmatpush1.msra.mxu0 0.0
    %1555 = vmatprep.subr.mxu0 0.0
    %1556 = vmatpush1.msra.mxu0 0.0
    %1557 = vmatprep.mubr.f32.mxu0 0.0
    %1558 = vmatmul.mubr.f32.gmra.mrb[0].mxu0 %v1491
    %v1559 = vpop.f32.mrb[0].mxu0
    %v1560 = vadd.f32 0.0, %v1559
    %v1561 = vpop.f32.mrb[0].mxu0
    %1562 = vdwg.mxu0
    %1563 = vrot.lane.b32.xlu0 %v315, 64
    %v1564 = vpop.permute.xlu0 %1563
    %v1567 = vsel %vm318, %v1030, 0
    %1569 = vmatprep.subr.mxu0 0.0
    %1570 = vmatpush1.msra.mxu0 %v1564
    %1571 = vmatprep.subr.mxu0 0.0
    %1572 = vmatpush1.msra.mxu0 0.0
    %1573 = vmatprep.subr.mxu0 0.0
    %1574 = vmatpush1.msra.mxu0 0.0
    %1575 = vmatprep.subr.mxu0 0.0
    %1576 = vmatpush1.msra.mxu0 0.0
    %1577 = vmatprep.subr.mxu0 0.0
    %1578 = vmatpush1.msra.mxu0 0.0
    %1579 = vmatprep.subr.mxu0 0.0
    %1580 = vmatpush1.msra.mxu0 0.0
    %1581 = vmatprep.subr.mxu0 0.0
    %1582 = vmatpush1.msra.mxu0 0.0
    %1583 = vmatprep.subr.mxu0 0.0
    %1584 = vmatpush1.msra.mxu0 0.0
    %1585 = vmatprep.subr.mxu0 0.0
    %1586 = vmatpush1.msra.mxu0 0.0
    %1587 = vmatprep.subr.mxu0 0.0
    %1588 = vmatpush1.msra.mxu0 0.0
    %1589 = vmatprep.subr.mxu0 0.0
    %1590 = vmatpush1.msra.mxu0 0.0
    %1591 = vmatprep.subr.mxu0 0.0
    %1592 = vmatpush1.msra.mxu0 0.0
    %1593 = vmatprep.subr.mxu0 0.0
    %1594 = vmatpush1.msra.mxu0 0.0
    %1595 = vmatprep.subr.mxu0 0.0
    %1596 = vmatpush1.msra.mxu0 0.0
    %1597 = vmatprep.subr.mxu0 0.0
    %1598 = vmatpush1.msra.mxu0 0.0
    %1599 = vmatprep.subr.mxu0 0.0
    %1600 = vmatpush1.msra.mxu0 0.0
    %1601 = vmatprep.subr.mxu0 0.0
    %1602 = vmatpush1.msra.mxu0 0.0
    %1603 = vmatprep.subr.mxu0 0.0
    %1604 = vmatpush1.msra.mxu0 0.0
    %1605 = vmatprep.subr.mxu0 0.0
    %1606 = vmatpush1.msra.mxu0 0.0
    %1607 = vmatprep.subr.mxu0 0.0
    %1608 = vmatpush1.msra.mxu0 0.0
    %1609 = vmatprep.subr.mxu0 0.0
    %1610 = vmatpush1.msra.mxu0 0.0
    %1611 = vmatprep.subr.mxu0 0.0
    %1612 = vmatpush1.msra.mxu0 0.0
    %1613 = vmatprep.subr.mxu0 0.0
    %1614 = vmatpush1.msra.mxu0 0.0
    %1615 = vmatprep.subr.mxu0 0.0
    %1616 = vmatpush1.msra.mxu0 0.0
    %1617 = vmatprep.subr.mxu0 0.0
    %1618 = vmatpush1.msra.mxu0 0.0
    %1619 = vmatprep.subr.mxu0 0.0
    %1620 = vmatpush1.msra.mxu0 0.0
    %1621 = vmatprep.subr.mxu0 0.0
    %1622 = vmatpush1.msra.mxu0 0.0
    %1623 = vmatprep.subr.mxu0 0.0
    %1624 = vmatpush1.msra.mxu0 0.0
    %1625 = vmatprep.subr.mxu0 0.0
    %1626 = vmatpush1.msra.mxu0 0.0
    %1627 = vmatprep.subr.mxu0 0.0
    %1628 = vmatpush1.msra.mxu0 0.0
    %1629 = vmatprep.subr.mxu0 0.0
    %1630 = vmatpush1.msra.mxu0 0.0
    %1631 = vmatprep.subr.mxu0 0.0
    %1632 = vmatpush1.msra.mxu0 0.0
    %1633 = vmatprep.mubr.f32.mxu0 0.0
    %1634 = vmatmul.mubr.f32.gmra.mrb[0].mxu0 %v1567
    %v1635 = vpop.f32.mrb[0].mxu0
    %v1636 = vadd.f32 0.0, %v1635
    %v1637 = vpop.f32.mrb[0].mxu0
    %1638 = vdwg.mxu0
    %1640 = vrot.lane.b32.xlu0 %v1180, 8
    %v1641 = vpop.permute.xlu0 %1640
    %1644 = vrot.lane.b32.xlu0 %v1256, 16
    %v1645 = vpop.permute.xlu0 %1644
    %1648 = vrot.lane.b32.xlu0 %v1332, 24
    %v1649 = vpop.permute.xlu0 %1648
    %v1651 = vsel %vm318, %v1104, %v1641
    %vm1652 = vcmask 130048
    %v1653 = vsel %vm1652, %v1651, %v1645
    %vm1654 = vcmask 195584
    %v1655 = vsel %vm1654, %v1653, %v1649
    %1657 = vrot.lane.b32.xlu0 %v1484, 8
    %v1658 = vpop.permute.xlu0 %1657
    %1661 = vrot.lane.b32.xlu0 %v1560, 16
    %v1662 = vpop.permute.xlu0 %1661
    %1665 = vrot.lane.b32.xlu0 %v1636, 24
    %v1666 = vpop.permute.xlu0 %1665
    %v1668 = vsel %vm318, %v1408, %v1658
    %v1669 = vsel %vm1652, %v1668, %v1662
    %v1670 = vsel %vm1654, %v1669, %v1666
    %v1671 = vld [vmem:[%s4] sm:$0xff]
    %v1672 = vld [vmem:[%s4 + $0x8] sm:$0xff]
    %v1673 = vld [vmem:[%s4 + $0x10] sm:$0xff]
    %v1674 = vld [vmem:[%s4 + $0x18] sm:$0xff]
    %v1676 = vsel %vm173, %v1655, 0
    %v1679 = vsel %vm173, %v1670, 0
    %1681 = vmatprep.subr.mxu0 0.0
    %1682 = vmatpush1.msra.mxu0 %v1671
    %1683 = vmatprep.subr.mxu0 0.0
    %1684 = vmatpush1.msra.mxu0 %v1672
    %1685 = vmatprep.subr.mxu0 0.0
    %1686 = vmatpush1.msra.mxu0 %v1673
    %1687 = vmatprep.subr.mxu0 0.0
    %1688 = vmatpush1.msra.mxu0 %v1674
    %1689 = vmatprep.subr.mxu0 0.0
    %1690 = vmatpush1.msra.mxu0 0.0
    %1691 = vmatprep.subr.mxu0 0.0
    %1692 = vmatpush1.msra.mxu0 0.0
    %1693 = vmatprep.subr.mxu0 0.0
    %1694 = vmatpush1.msra.mxu0 0.0
    %1695 = vmatprep.subr.mxu0 0.0
    %1696 = vmatpush1.msra.mxu0 0.0
    %1697 = vmatprep.subr.mxu0 0.0
    %1698 = vmatpush1.msra.mxu0 0.0
    %1699 = vmatprep.subr.mxu0 0.0
    %1700 = vmatpush1.msra.mxu0 0.0
    %1701 = vmatprep.subr.mxu0 0.0
    %1702 = vmatpush1.msra.mxu0 0.0
    %1703 = vmatprep.subr.mxu0 0.0
    %1704 = vmatpush1.msra.mxu0 0.0
    %1705 = vmatprep.subr.mxu0 0.0
    %1706 = vmatpush1.msra.mxu0 0.0
    %1707 = vmatprep.subr.mxu0 0.0
    %1708 = vmatpush1.msra.mxu0 0.0
    %1709 = vmatprep.subr.mxu0 0.0
    %1710 = vmatpush1.msra.mxu0 0.0
    %1711 = vmatprep.subr.mxu0 0.0
    %1712 = vmatpush1.msra.mxu0 0.0
    %1713 = vmatprep.subr.mxu0 0.0
    %1714 = vmatpush1.msra.mxu0 0.0
    %1715 = vmatprep.subr.mxu0 0.0
    %1716 = vmatpush1.msra.mxu0 0.0
    %1717 = vmatprep.subr.mxu0 0.0
    %1718 = vmatpush1.msra.mxu0 0.0
    %1719 = vmatprep.subr.mxu0 0.0
    %1720 = vmatpush1.msra.mxu0 0.0
    %1721 = vmatprep.subr.mxu0 0.0
    %1722 = vmatpush1.msra.mxu0 0.0
    %1723 = vmatprep.subr.mxu0 0.0
    %1724 = vmatpush1.msra.mxu0 0.0
    %1725 = vmatprep.subr.mxu0 0.0
    %1726 = vmatpush1.msra.mxu0 0.0
    %1727 = vmatprep.subr.mxu0 0.0
    %1728 = vmatpush1.msra.mxu0 0.0
    %1729 = vmatprep.subr.mxu0 0.0
    %1730 = vmatpush1.msra.mxu0 0.0
    %1731 = vmatprep.subr.mxu0 0.0
    %1732 = vmatpush1.msra.mxu0 0.0
    %1733 = vmatprep.subr.mxu0 0.0
    %1734 = vmatpush1.msra.mxu0 0.0
    %1735 = vmatprep.subr.mxu0 0.0
    %1736 = vmatpush1.msra.mxu0 0.0
    %1737 = vmatprep.subr.mxu0 0.0
    %1738 = vmatpush1.msra.mxu0 0.0
    %1739 = vmatprep.subr.mxu0 0.0
    %1740 = vmatpush1.msra.mxu0 0.0
    %1741 = vmatprep.subr.mxu0 0.0
    %1742 = vmatpush1.msra.mxu0 0.0
    %1743 = vmatprep.subr.mxu0 0.0
    %1744 = vmatpush1.msra.mxu0 0.0
    %1745 = vmatprep.mubr.f32.mxu0 0.0
    %1746 = vmatmul.mubr.f32.gmra.mrb[0].mxu0 %v1676
    %v1747 = vpop.f32.mrb[0].mxu0
    %v1748 = vadd.f32 0.0, %v1747
    %v1749 = vpop.f32.mrb[0].mxu0
    %1750 = vmatprep.mubr.f32.mxu0 0.0
    %1751 = vmatmul.mubr.f32.gmra.mrb[0].mxu0 %v1679
    %v1752 = vpop.f32.mrb[0].mxu0
    %v1753 = vadd.f32 0.0, %v1752
    %v1754 = vpop.f32.mrb[0].mxu0
    %1755 = vdwg.mxu0
    %v1756 = vadd.f32 %v160, %v1748
    %v1757 = vadd.f32 %v165, %v1753
    %v1758 = vld [vmem:[%s5] sm:$0x1]
    %v1760 = vlaneseq
    %v1761 = vshrl.u32 %v1760, 7
    %v1762 = vsub.s32 0, %v1761
    %v1763 = vrot.slane %v1758, %v1762
    %v1765 = vadd.f32 %v1756, %v1763
    %v1766 = vadd.f32 %v1757, %v1763
    %v1767 = vld [vmem:[%s8] sm:$0x1]
    %v1768 = vld [vmem:[%s9] sm:$0x1]
    %v1769 = vsel %vm173, %v1765, 0.0
    %1770 = vadd.xlane.f32.xlu0 %v1769
    %v1771 = vpop.xlane.xlu0 %1770
    %v1772 = vsel %vm173, %v1766, 0.0
    %1773 = vadd.xlane.f32.xlu0 %v1772
    %v1774 = vpop.xlane.xlu0 %1773
    %v1775 = vmul.f32 %v1771, %v180
    %v1776 = vmul.f32 %v1774, %v180
    %v1777 = vsub.f32 %v1765, %v1775
    %v1778 = vsub.f32 %v1766, %v1776
    %v1779 = vmul.f32 %v1777, %v1777
    %v1780 = vmul.f32 %v1778, %v1778
    %v1781 = vsel %vm173, %v1779, 0.0
    %1782 = vadd.xlane.f32.xlu0 %v1781
    %v1783 = vpop.xlane.xlu0 %1782
    %v1784 = vsel %vm173, %v1780, 0.0
    %1785 = vadd.xlane.f32.xlu0 %v1784
    %v1786 = vpop.xlane.xlu0 %1785
    %v1787 = vmul.f32 %v1783, %v180
    %v1788 = vmul.f32 %v1786, %v180
    %v1789 = vadd.f32 %v1787, 1e-05
    %v1790 = vadd.f32 %v1788, 1e-05
    %v1791 = vrsqrt.pop %v1789
    %v1792 = vrsqrt.pop %v1790
    %v1793 = vmul.f32 %v1777, %v1791
    %v1794 = vmul.f32 %v1778, %v1792
    %v1796 = vlaneseq
    %v1797 = vshrl.u32 %v1796, 7
    %v1798 = vsub.s32 0, %v1797
    %v1799 = vrot.slane %v1767, %v1798
    %v1801 = vmul.f32 %v1793, %v1799
    %v1802 = vmul.f32 %v1794, %v1799
    %v1804 = vlaneseq
    %v1805 = vshrl.u32 %v1804, 7
    %v1806 = vsub.s32 0, %v1805
    %v1807 = vrot.slane %v1768, %v1806
    %v1809 = vadd.f32 %v1801, %v1807
    %v1810 = vadd.f32 %v1802, %v1807
    %v1811 = vld [vmem:[%s10] sm:$0xff]
    %v1812 = vld [vmem:[%s10 + $0x8] sm:$0xff]
    %v1813 = vld [vmem:[%s10 + $0x10] sm:$0xff]
    %v1814 = vld [vmem:[%s10 + $0x18] sm:$0xff]
    %v1815 = vld [vmem:[%s11] sm:$0x1]
    %v1817 = vlaneseq
    %v1818 = vshrl.u32 %v1817, 7
    %v1819 = vsub.s32 0, %v1818
    %v1820 = vrot.slane %v1815, %v1819
    %v1823 = vsel %vm173, %v1809, 0
    %v1826 = vsel %vm173, %v1810, 0
    %1828 = vmatprep.subr.mxu0 0.0
    %1829 = vmatpush1.msra.mxu0 %v1811
    %1830 = vmatprep.subr.mxu0 0.0
    %1831 = vmatpush1.msra.mxu0 %v1812
    %1832 = vmatprep.subr.mxu0 0.0
    %1833 = vmatpush1.msra.mxu0 %v1813
    %1834 = vmatprep.subr.mxu0 0.0
    %1835 = vmatpush1.msra.mxu0 %v1814
    %1836 = vmatprep.subr.mxu0 0.0
    %1837 = vmatpush1.msra.mxu0 0.0
    %1838 = vmatprep.subr.mxu0 0.0
    %1839 = vmatpush1.msra.mxu0 0.0
    %1840 = vmatprep.subr.mxu0 0.0
    %1841 = vmatpush1.msra.mxu0 0.0
    %1842 = vmatprep.subr.mxu0 0.0
    %1843 = vmatpush1.msra.mxu0 0.0
    %1844 = vmatprep.subr.mxu0 0.0
    %1845 = vmatpush1.msra.mxu0 0.0
    %1846 = vmatprep.subr.mxu0 0.0
    %1847 = vmatpush1.msra.mxu0 0.0
    %1848 = vmatprep.subr.mxu0 0.0
    %1849 = vmatpush1.msra.mxu0 0.0
    %1850 = vmatprep.subr.mxu0 0.0
    %1851 = vmatpush1.msra.mxu0 0.0
    %1852 = vmatprep.subr.mxu0 0.0
    %1853 = vmatpush1.msra.mxu0 0.0
    %1854 = vmatprep.subr.mxu0 0.0
    %1855 = vmatpush1.msra.mxu0 0.0
    %1856 = vmatprep.subr.mxu0 0.0
    %1857 = vmatpush1.msra.mxu0 0.0
    %1858 = vmatprep.subr.mxu0 0.0
    %1859 = vmatpush1.msra.mxu0 0.0
    %1860 = vmatprep.subr.mxu0 0.0
    %1861 = vmatpush1.msra.mxu0 0.0
    %1862 = vmatprep.subr.mxu0 0.0
    %1863 = vmatpush1.msra.mxu0 0.0
    %1864 = vmatprep.subr.mxu0 0.0
    %1865 = vmatpush1.msra.mxu0 0.0
    %1866 = vmatprep.subr.mxu0 0.0
    %1867 = vmatpush1.msra.mxu0 0.0
    %1868 = vmatprep.subr.mxu0 0.0
    %1869 = vmatpush1.msra.mxu0 0.0
    %1870 = vmatprep.subr.mxu0 0.0
    %1871 = vmatpush1.msra.mxu0 0.0
    %1872 = vmatprep.subr.mxu0 0.0
    %1873 = vmatpush1.msra.mxu0 0.0
    %1874 = vmatprep.subr.mxu0 0.0
    %1875 = vmatpush1.msra.mxu0 0.0
    %1876 = vmatprep.subr.mxu0 0.0
    %1877 = vmatpush1.msra.mxu0 0.0
    %1878 = vmatprep.subr.mxu0 0.0
    %1879 = vmatpush1.msra.mxu0 0.0
    %1880 = vmatprep.subr.mxu0 0.0
    %1881 = vmatpush1.msra.mxu0 0.0
    %1882 = vmatprep.subr.mxu0 0.0
    %1883 = vmatpush1.msra.mxu0 0.0
    %1884 = vmatprep.subr.mxu0 0.0
    %1885 = vmatpush1.msra.mxu0 0.0
    %1886 = vmatprep.subr.mxu0 0.0
    %1887 = vmatpush1.msra.mxu0 0.0
    %1888 = vmatprep.subr.mxu0 0.0
    %1889 = vmatpush1.msra.mxu0 0.0
    %1890 = vmatprep.subr.mxu0 0.0
    %1891 = vmatpush1.msra.mxu0 0.0
    %1892 = vmatprep.mubr.f32.mxu0 0.0
    %1893 = vmatmul.mubr.f32.gmra.mrb[0].mxu0 %v1823
    %v1894 = vpop.f32.mrb[0].mxu0
    %v1895 = vadd.f32 %v1820, %v1894
    %v1896 = vpop.f32.mrb[0].mxu0
    %1897 = vmatprep.mubr.f32.mxu0 0.0
    %1898 = vmatmul.mubr.f32.gmra.mrb[0].mxu0 %v1826
    %v1899 = vpop.f32.mrb[0].mxu0
    %v1900 = vadd.f32 %v1820, %v1899
    %v1901 = vpop.f32.mrb[0].mxu0
    %1902 = vdwg.mxu0
    %v1903 = vmax.f32 %v1895, 0.0
    %v1904 = vmax.f32 %v1900, 0.0
    %v1905 = vld [vmem:[%s12] sm:$0xff]
    %v1906 = vld [vmem:[%s12 + $0x8] sm:$0xff]
    %v1907 = vld [vmem:[%s12 + $0x10] sm:$0xff]
    %v1908 = vld [vmem:[%s12 + $0x18] sm:$0xff]
    %v1909 = vld [vmem:[%s12 + $0x20] sm:$0xff]
    %v1910 = vld [vmem:[%s12 + $0x28] sm:$0xff]
    %v1911 = vld [vmem:[%s12 + $0x30] sm:$0xff]
    %v1912 = vld [vmem:[%s12 + $0x38] sm:$0xff]
    %v1913 = vld [vmem:[%s12 + $0x40] sm:$0xff]
    %v1914 = vld [vmem:[%s12 + $0x48] sm:$0xff]
    %v1915 = vld [vmem:[%s12 + $0x50] sm:$0xff]
    %v1916 = vld [vmem:[%s12 + $0x58] sm:$0xff]
    %v1917 = vld [vmem:[%s12 + $0x60] sm:$0xff]
    %v1918 = vld [vmem:[%s12 + $0x68] sm:$0xff]
    %v1919 = vld [vmem:[%s12 + $0x70] sm:$0xff]
    %v1920 = vld [vmem:[%s12 + $0x78] sm:$0xff]
    %1921 = vmatprep.subr.mxu0 0.0
    %1922 = vmatpush1.msra.mxu0 %v1905
    %1923 = vmatprep.subr.mxu0 0.0
    %1924 = vmatpush1.msra.mxu0 %v1906
    %1925 = vmatprep.subr.mxu0 0.0
    %1926 = vmatpush1.msra.mxu0 %v1907
    %1927 = vmatprep.subr.mxu0 0.0
    %1928 = vmatpush1.msra.mxu0 %v1908
    %1929 = vmatprep.subr.mxu0 0.0
    %1930 = vmatpush1.msra.mxu0 %v1909
    %1931 = vmatprep.subr.mxu0 0.0
    %1932 = vmatpush1.msra.mxu0 %v1910
    %1933 = vmatprep.subr.mxu0 0.0
    %1934 = vmatpush1.msra.mxu0 %v1911
    %1935 = vmatprep.subr.mxu0 0.0
    %1936 = vmatpush1.msra.mxu0 %v1912
    %1937 = vmatprep.subr.mxu0 0.0
    %1938 = vmatpush1.msra.mxu0 %v1913
    %1939 = vmatprep.subr.mxu0 0.0
    %1940 = vmatpush1.msra.mxu0 %v1914
    %1941 = vmatprep.subr.mxu0 0.0
    %1942 = vmatpush1.msra.mxu0 %v1915
    %1943 = vmatprep.subr.mxu0 0.0
    %1944 = vmatpush1.msra.mxu0 %v1916
    %1945 = vmatprep.subr.mxu0 0.0
    %1946 = vmatpush1.msra.mxu0 %v1917
    %1947 = vmatprep.subr.mxu0 0.0
    %1948 = vmatpush1.msra.mxu0 %v1918
    %1949 = vmatprep.subr.mxu0 0.0
    %1950 = vmatpush1.msra.mxu0 %v1919
    %1951 = vmatprep.subr.mxu0 0.0
    %1952 = vmatpush1.msra.mxu0 %v1920
    %1953 = vmatprep.subr.mxu0 0.0
    %1954 = vmatpush1.msra.mxu0 0.0
    %1955 = vmatprep.subr.mxu0 0.0
    %1956 = vmatpush1.msra.mxu0 0.0
    %1957 = vmatprep.subr.mxu0 0.0
    %1958 = vmatpush1.msra.mxu0 0.0
    %1959 = vmatprep.subr.mxu0 0.0
    %1960 = vmatpush1.msra.mxu0 0.0
    %1961 = vmatprep.subr.mxu0 0.0
    %1962 = vmatpush1.msra.mxu0 0.0
    %1963 = vmatprep.subr.mxu0 0.0
    %1964 = vmatpush1.msra.mxu0 0.0
    %1965 = vmatprep.subr.mxu0 0.0
    %1966 = vmatpush1.msra.mxu0 0.0
    %1967 = vmatprep.subr.mxu0 0.0
    %1968 = vmatpush1.msra.mxu0 0.0
    %1969 = vmatprep.subr.mxu0 0.0
    %1970 = vmatpush1.msra.mxu0 0.0
    %1971 = vmatprep.subr.mxu0 0.0
    %1972 = vmatpush1.msra.mxu0 0.0
    %1973 = vmatprep.subr.mxu0 0.0
    %1974 = vmatpush1.msra.mxu0 0.0
    %1975 = vmatprep.subr.mxu0 0.0
    %1976 = vmatpush1.msra.mxu0 0.0
    %1977 = vmatprep.subr.mxu0 0.0
    %1978 = vmatpush1.msra.mxu0 0.0
    %1979 = vmatprep.subr.mxu0 0.0
    %1980 = vmatpush1.msra.mxu0 0.0
    %1981 = vmatprep.subr.mxu0 0.0
    %1982 = vmatpush1.msra.mxu0 0.0
    %1983 = vmatprep.subr.mxu0 0.0
    %1984 = vmatpush1.msra.mxu0 0.0
    %1985 = vmatprep.mubr.f32.mxu0 0.0
    %1986 = vmatmul.mubr.f32.gmra.mrb[0].mxu0 %v1903
    %v1987 = vpop.f32.mrb[0].mxu0
    %v1988 = vadd.f32 0.0, %v1987
    %v1989 = vpop.f32.mrb[0].mxu0
    %1990 = vmatprep.mubr.f32.mxu0 0.0
    %1991 = vmatmul.mubr.f32.gmra.mrb[0].mxu0 %v1904
    %v1992 = vpop.f32.mrb[0].mxu0
    %v1993 = vadd.f32 0.0, %v1992
    %v1994 = vpop.f32.mrb[0].mxu0
    %1995 = vdwg.mxu0
    %v1996 = vadd.f32 %v1765, %v1988
    %v1997 = vadd.f32 %v1766, %v1993
    %v1998 = vld [vmem:[%s13] sm:$0x1]
    %v2000 = vlaneseq
    %v2001 = vshrl.u32 %v2000, 7
    %v2002 = vsub.s32 0, %v2001
    %v2003 = vrot.slane %v1998, %v2002
    %v2005 = vadd.f32 %v1996, %v2003
    %v2006 = vadd.f32 %v1997, %v2003
    %s2007 = scalar_lea.vmem %s6, 1
    %v2008 = vld [vmem:[%s2007] sm:$0x1]
    %s2009 = scalar_lea.vmem %s7, 1
    %v2010 = vld [vmem:[%s2009] sm:$0x1]
    %v2011 = vsel %vm173, %v2005, 0.0
    %2012 = vadd.xlane.f32.xlu0 %v2011
    %v2013 = vpop.xlane.xlu0 %2012
    %v2014 = vsel %vm173, %v2006, 0.0
    %2015 = vadd.xlane.f32.xlu0 %v2014
    %v2016 = vpop.xlane.xlu0 %2015
    %v2017 = vmul.f32 %v2013, %v180
    %v2018 = vmul.f32 %v2016, %v180
    %v2019 = vsub.f32 %v2005, %v2017
    %v2020 = vsub.f32 %v2006, %v2018
    %v2021 = vmul.f32 %v2019, %v2019
    %v2022 = vmul.f32 %v2020, %v2020
    %v2023 = vsel %vm173, %v2021, 0.0
    %2024 = vadd.xlane.f32.xlu0 %v2023
    %v2025 = vpop.xlane.xlu0 %2024
    %v2026 = vsel %vm173, %v2022, 0.0
    %2027 = vadd.xlane.f32.xlu0 %v2026
    %v2028 = vpop.xlane.xlu0 %2027
    %v2029 = vmul.f32 %v2025, %v180
    %v2030 = vmul.f32 %v2028, %v180
    %v2031 = vadd.f32 %v2029, 1e-05
    %v2032 = vadd.f32 %v2030, 1e-05
    %v2033 = vrsqrt.pop %v2031
    %v2034 = vrsqrt.pop %v2032
    %v2035 = vmul.f32 %v2019, %v2033
    %v2036 = vmul.f32 %v2020, %v2034
    %v2038 = vlaneseq
    %v2039 = vshrl.u32 %v2038, 7
    %v2040 = vsub.s32 0, %v2039
    %v2041 = vrot.slane %v2008, %v2040
    %v2043 = vmul.f32 %v2035, %v2041
    %v2044 = vmul.f32 %v2036, %v2041
    %v2046 = vlaneseq
    %v2047 = vshrl.u32 %v2046, 7
    %v2048 = vsub.s32 0, %v2047
    %v2049 = vrot.slane %v2010, %v2048
    %v2051 = vadd.f32 %v2043, %v2049
    %v2052 = vadd.f32 %v2044, %v2049
    %s2053 = scalar_lea.vmem %s3, 32
    %v2054 = vld [vmem:[%s2053] sm:$0xff]
    %v2055 = vld [vmem:[%s2053 + $0x8] sm:$0xff]
    %v2056 = vld [vmem:[%s2053 + $0x10] sm:$0xff]
    %v2057 = vld [vmem:[%s2053 + $0x18] sm:$0xff]
    %v2059 = vsel %vm173, %v2051, 0
    %v2062 = vsel %vm173, %v2052, 0
    %2064 = vmatprep.subr.mxu0 0.0
    %2065 = vmatpush1.msra.mxu0 %v2054
    %2066 = vmatprep.subr.mxu0 0.0
    %2067 = vmatpush1.msra.mxu0 %v2055
    %2068 = vmatprep.subr.mxu0 0.0
    %2069 = vmatpush1.msra.mxu0 %v2056
    %2070 = vmatprep.subr.mxu0 0.0
    %2071 = vmatpush1.msra.mxu0 %v2057
    %2072 = vmatprep.subr.mxu0 0.0
    %2073 = vmatpush1.msra.mxu0 0.0
    %2074 = vmatprep.subr.mxu0 0.0
    %2075 = vmatpush1.msra.mxu0 0.0
    %2076 = vmatprep.subr.mxu0 0.0
    %2077 = vmatpush1.msra.mxu0 0.0
    %2078 = vmatprep.subr.mxu0 0.0
    %2079 = vmatpush1.msra.mxu0 0.0
    %2080 = vmatprep.subr.mxu0 0.0
    %2081 = vmatpush1.msra.mxu0 0.0
    %2082 = vmatprep.subr.mxu0 0.0
    %2083 = vmatpush1.msra.mxu0 0.0
    %2084 = vmatprep.subr.mxu0 0.0
    %2085 = vmatpush1.msra.mxu0 0.0
    %2086 = vmatprep.subr.mxu0 0.0
    %2087 = vmatpush1.msra.mxu0 0.0
    %2088 = vmatprep.subr.mxu0 0.0
    %2089 = vmatpush1.msra.mxu0 0.0
    %2090 = vmatprep.subr.mxu0 0.0
    %2091 = vmatpush1.msra.mxu0 0.0
    %2092 = vmatprep.subr.mxu0 0.0
    %2093 = vmatpush1.msra.mxu0 0.0
    %2094 = vmatprep.subr.mxu0 0.0
    %2095 = vmatpush1.msra.mxu0 0.0
    %2096 = vmatprep.subr.mxu0 0.0
    %2097 = vmatpush1.msra.mxu0 0.0
    %2098 = vmatprep.subr.mxu0 0.0
    %2099 = vmatpush1.msra.mxu0 0.0
    %2100 = vmatprep.subr.mxu0 0.0
    %2101 = vmatpush1.msra.mxu0 0.0
    %2102 = vmatprep.subr.mxu0 0.0
    %2103 = vmatpush1.msra.mxu0 0.0
    %2104 = vmatprep.subr.mxu0 0.0
    %2105 = vmatpush1.msra.mxu0 0.0
    %2106 = vmatprep.subr.mxu0 0.0
    %2107 = vmatpush1.msra.mxu0 0.0
    %2108 = vmatprep.subr.mxu0 0.0
    %2109 = vmatpush1.msra.mxu0 0.0
    %2110 = vmatprep.subr.mxu0 0.0
    %2111 = vmatpush1.msra.mxu0 0.0
    %2112 = vmatprep.subr.mxu0 0.0
    %2113 = vmatpush1.msra.mxu0 0.0
    %2114 = vmatprep.subr.mxu0 0.0
    %2115 = vmatpush1.msra.mxu0 0.0
    %2116 = vmatprep.subr.mxu0 0.0
    %2117 = vmatpush1.msra.mxu0 0.0
    %2118 = vmatprep.subr.mxu0 0.0
    %2119 = vmatpush1.msra.mxu0 0.0
    %2120 = vmatprep.subr.mxu0 0.0
    %2121 = vmatpush1.msra.mxu0 0.0
    %2122 = vmatprep.subr.mxu0 0.0
    %2123 = vmatpush1.msra.mxu0 0.0
    %2124 = vmatprep.subr.mxu0 0.0
    %2125 = vmatpush1.msra.mxu0 0.0
    %2126 = vmatprep.subr.mxu0 0.0
    %2127 = vmatpush1.msra.mxu0 0.0
    %2128 = vmatprep.mubr.f32.mxu0 0.0
    %2129 = vmatmul.mubr.f32.gmra.mrb[0].mxu0 %v2059
    %v2130 = vpop.f32.mrb[0].mxu0
    %v2131 = vadd.f32 0.0, %v2130
    %v2132 = vpop.f32.mrb[0].mxu0
    %2133 = vmatprep.mubr.f32.mxu0 0.0
    %2134 = vmatmul.mubr.f32.gmra.mrb[0].mxu0 %v2062
    %v2135 = vpop.f32.mrb[0].mxu0
    %v2136 = vadd.f32 0.0, %v2135
    %v2137 = vpop.f32.mrb[0].mxu0
    %2138 = vdwg.mxu0
    %2140 = vrot.lane.b32.xlu0 %v2131, 120
    %v2141 = vpop.permute.xlu0 %2140
    %2142 = vrot.lane.b32.xlu0 %v2131, 112
    %v2143 = vpop.permute.xlu0 %2142
    %2144 = vrot.lane.b32.xlu0 %v2131, 104
    %v2145 = vpop.permute.xlu0 %2144
    %2147 = vrot.lane.b32.xlu0 %v2136, 120
    %v2148 = vpop.permute.xlu0 %2147
    %2149 = vrot.lane.b32.xlu0 %v2136, 112
    %v2150 = vpop.permute.xlu0 %2149
    %2151 = vrot.lane.b32.xlu0 %v2136, 104
    %v2152 = vpop.permute.xlu0 %2151
    %2153 = vrot.lane.b32.xlu0 %v2131, 96
    %v2154 = vpop.permute.xlu0 %2153
    %v2155 = vsel %vm318, %v2131, 0
    %v2157 = vsel %vm318, %v2154, 0
    %2159 = vmatprep.subr.mxu0 0.0
    %2160 = vmatpush1.xpose.msra.mxu0 %v2157
    %2161 = vmatprep.subr.mxu0 0.0
    %2162 = vmatpush1.xpose.msra.mxu0 0.0
    %2163 = vmatprep.subr.mxu0 0.0
    %2164 = vmatpush1.xpose.msra.mxu0 0.0
    %2165 = vmatprep.subr.mxu0 0.0
    %2166 = vmatpush1.xpose.msra.mxu0 0.0
    %2167 = vmatprep.subr.mxu0 0.0
    %2168 = vmatpush1.xpose.msra.mxu0 0.0
    %2169 = vmatprep.subr.mxu0 0.0
    %2170 = vmatpush1.xpose.msra.mxu0 0.0
    %2171 = vmatprep.subr.mxu0 0.0
    %2172 = vmatpush1.xpose.msra.mxu0 0.0
    %2173 = vmatprep.subr.mxu0 0.0
    %2174 = vmatpush1.xpose.msra.mxu0 0.0
    %2175 = vmatprep.subr.mxu0 0.0
    %2176 = vmatpush1.xpose.msra.mxu0 0.0
    %2177 = vmatprep.subr.mxu0 0.0
    %2178 = vmatpush1.xpose.msra.mxu0 0.0
    %2179 = vmatprep.subr.mxu0 0.0
    %2180 = vmatpush1.xpose.msra.mxu0 0.0
    %2181 = vmatprep.subr.mxu0 0.0
    %2182 = vmatpush1.xpose.msra.mxu0 0.0
    %2183 = vmatprep.subr.mxu0 0.0
    %2184 = vmatpush1.xpose.msra.mxu0 0.0
    %2185 = vmatprep.subr.mxu0 0.0
    %2186 = vmatpush1.xpose.msra.mxu0 0.0
    %2187 = vmatprep.subr.mxu0 0.0
    %2188 = vmatpush1.xpose.msra.mxu0 0.0
    %2189 = vmatprep.subr.mxu0 0.0
    %2190 = vmatpush1.xpose.msra.mxu0 0.0
    %2191 = vmatprep.subr.mxu0 0.0
    %2192 = vmatpush1.xpose.msra.mxu0 0.0
    %2193 = vmatprep.subr.mxu0 0.0
    %2194 = vmatpush1.xpose.msra.mxu0 0.0
    %2195 = vmatprep.subr.mxu0 0.0
    %2196 = vmatpush1.xpose.msra.mxu0 0.0
    %2197 = vmatprep.subr.mxu0 0.0
    %2198 = vmatpush1.xpose.msra.mxu0 0.0
    %2199 = vmatprep.subr.mxu0 0.0
    %2200 = vmatpush1.xpose.msra.mxu0 0.0
    %2201 = vmatprep.subr.mxu0 0.0
    %2202 = vmatpush1.xpose.msra.mxu0 0.0
    %2203 = vmatprep.subr.mxu0 0.0
    %2204 = vmatpush1.xpose.msra.mxu0 0.0
    %2205 = vmatprep.subr.mxu0 0.0
    %2206 = vmatpush1.xpose.msra.mxu0 0.0
    %2207 = vmatprep.subr.mxu0 0.0
    %2208 = vmatpush1.xpose.msra.mxu0 0.0
    %2209 = vmatprep.subr.mxu0 0.0
    %2210 = vmatpush1.xpose.msra.mxu0 0.0
    %2211 = vmatprep.subr.mxu0 0.0
    %2212 = vmatpush1.xpose.msra.mxu0 0.0
    %2213 = vmatprep.subr.mxu0 0.0
    %2214 = vmatpush1.xpose.msra.mxu0 0.0
    %2215 = vmatprep.subr.mxu0 0.0
    %2216 = vmatpush1.xpose.msra.mxu0 0.0
    %2217 = vmatprep.subr.mxu0 0.0
    %2218 = vmatpush1.xpose.msra.mxu0 0.0
    %2219 = vmatprep.subr.mxu0 0.0
    %2220 = vmatpush1.xpose.msra.mxu0 0.0
    %2221 = vmatprep.subr.mxu0 0.0
    %2222 = vmatpush1.xpose.msra.mxu0 0.0
    %2223 = vmatprep.mubr.f32.mxu0 0.0
    %2224 = vmatmul.mubr.f32.gmra.mrb[0].mxu0 %v2155
    %v2225 = vpop.f32.mrb[0].mxu0
    %v2226 = vadd.f32 0.0, %v2225
    %v2227 = vpop.f32.mrb[0].mxu0
    %2228 = vdwg.mxu0
    %2229 = vrot.lane.b32.xlu0 %v2141, 96
    %v2230 = vpop.permute.xlu0 %2229
    %v2231 = vsel %vm318, %v2141, 0
    %v2233 = vsel %vm318, %v2230, 0
    %2235 = vmatprep.subr.mxu0 0.0
    %2236 = vmatpush1.xpose.msra.mxu0 %v2233
    %2237 = vmatprep.subr.mxu0 0.0
    %2238 = vmatpush1.xpose.msra.mxu0 0.0
    %2239 = vmatprep.subr.mxu0 0.0
    %2240 = vmatpush1.xpose.msra.mxu0 0.0
    %2241 = vmatprep.subr.mxu0 0.0
    %2242 = vmatpush1.xpose.msra.mxu0 0.0
    %2243 = vmatprep.subr.mxu0 0.0
    %2244 = vmatpush1.xpose.msra.mxu0 0.0
    %2245 = vmatprep.subr.mxu0 0.0
    %2246 = vmatpush1.xpose.msra.mxu0 0.0
    %2247 = vmatprep.subr.mxu0 0.0
    %2248 = vmatpush1.xpose.msra.mxu0 0.0
    %2249 = vmatprep.subr.mxu0 0.0
    %2250 = vmatpush1.xpose.msra.mxu0 0.0
    %2251 = vmatprep.subr.mxu0 0.0
    %2252 = vmatpush1.xpose.msra.mxu0 0.0
    %2253 = vmatprep.subr.mxu0 0.0
    %2254 = vmatpush1.xpose.msra.mxu0 0.0
    %2255 = vmatprep.subr.mxu0 0.0
    %2256 = vmatpush1.xpose.msra.mxu0 0.0
    %2257 = vmatprep.subr.mxu0 0.0
    %2258 = vmatpush1.xpose.msra.mxu0 0.0
    %2259 = vmatprep.subr.mxu0 0.0
    %2260 = vmatpush1.xpose.msra.mxu0 0.0
    %2261 = vmatprep.subr.mxu0 0.0
    %2262 = vmatpush1.xpose.msra.mxu0 0.0
    %2263 = vmatprep.subr.mxu0 0.0
    %2264 = vmatpush1.xpose.msra.mxu0 0.0
    %2265 = vmatprep.subr.mxu0 0.0
    %2266 = vmatpush1.xpose.msra.mxu0 0.0
    %2267 = vmatprep.subr.mxu0 0.0
    %2268 = vmatpush1.xpose.msra.mxu0 0.0
    %2269 = vmatprep.subr.mxu0 0.0
    %2270 = vmatpush1.xpose.msra.mxu0 0.0
    %2271 = vmatprep.subr.mxu0 0.0
    %2272 = vmatpush1.xpose.msra.mxu0 0.0
    %2273 = vmatprep.subr.mxu0 0.0
    %2274 = vmatpush1.xpose.msra.mxu0 0.0
    %2275 = vmatprep.subr.mxu0 0.0
    %2276 = vmatpush1.xpose.msra.mxu0 0.0
    %2277 = vmatprep.subr.mxu0 0.0
    %2278 = vmatpush1.xpose.msra.mxu0 0.0
    %2279 = vmatprep.subr.mxu0 0.0
    %2280 = vmatpush1.xpose.msra.mxu0 0.0
    %2281 = vmatprep.subr.mxu0 0.0
    %2282 = vmatpush1.xpose.msra.mxu0 0.0
    %2283 = vmatprep.subr.mxu0 0.0
    %2284 = vmatpush1.xpose.msra.mxu0 0.0
    %2285 = vmatprep.subr.mxu0 0.0
    %2286 = vmatpush1.xpose.msra.mxu0 0.0
    %2287 = vmatprep.subr.mxu0 0.0
    %2288 = vmatpush1.xpose.msra.mxu0 0.0
    %2289 = vmatprep.subr.mxu0 0.0
    %2290 = vmatpush1.xpose.msra.mxu0 0.0
    %2291 = vmatprep.subr.mxu0 0.0
    %2292 = vmatpush1.xpose.msra.mxu0 0.0
    %2293 = vmatprep.subr.mxu0 0.0
    %2294 = vmatpush1.xpose.msra.mxu0 0.0
    %2295 = vmatprep.subr.mxu0 0.0
    %2296 = vmatpush1.xpose.msra.mxu0 0.0
    %2297 = vmatprep.subr.mxu0 0.0
    %2298 = vmatpush1.xpose.msra.mxu0 0.0
    %2299 = vmatprep.mubr.f32.mxu0 0.0
    %2300 = vmatmul.mubr.f32.gmra.mrb[0].mxu0 %v2231
    %v2301 = vpop.f32.mrb[0].mxu0
    %v2302 = vadd.f32 0.0, %v2301
    %v2303 = vpop.f32.mrb[0].mxu0
    %2304 = vdwg.mxu0
    %2305 = vrot.lane.b32.xlu0 %v2143, 96
    %v2306 = vpop.permute.xlu0 %2305
    %v2307 = vsel %vm318, %v2143, 0
    %v2309 = vsel %vm318, %v2306, 0
    %2311 = vmatprep.subr.mxu0 0.0
    %2312 = vmatpush1.xpose.msra.mxu0 %v2309
    %2313 = vmatprep.subr.mxu0 0.0
    %2314 = vmatpush1.xpose.msra.mxu0 0.0
    %2315 = vmatprep.subr.mxu0 0.0
    %2316 = vmatpush1.xpose.msra.mxu0 0.0
    %2317 = vmatprep.subr.mxu0 0.0
    %2318 = vmatpush1.xpose.msra.mxu0 0.0
    %2319 = vmatprep.subr.mxu0 0.0
    %2320 = vmatpush1.xpose.msra.mxu0 0.0
    %2321 = vmatprep.subr.mxu0 0.0
    %2322 = vmatpush1.xpose.msra.mxu0 0.0
    %2323 = vmatprep.subr.mxu0 0.0
    %2324 = vmatpush1.xpose.msra.mxu0 0.0
    %2325 = vmatprep.subr.mxu0 0.0
    %2326 = vmatpush1.xpose.msra.mxu0 0.0
    %2327 = vmatprep.subr.mxu0 0.0
    %2328 = vmatpush1.xpose.msra.mxu0 0.0
    %2329 = vmatprep.subr.mxu0 0.0
    %2330 = vmatpush1.xpose.msra.mxu0 0.0
    %2331 = vmatprep.subr.mxu0 0.0
    %2332 = vmatpush1.xpose.msra.mxu0 0.0
    %2333 = vmatprep.subr.mxu0 0.0
    %2334 = vmatpush1.xpose.msra.mxu0 0.0
    %2335 = vmatprep.subr.mxu0 0.0
    %2336 = vmatpush1.xpose.msra.mxu0 0.0
    %2337 = vmatprep.subr.mxu0 0.0
    %2338 = vmatpush1.xpose.msra.mxu0 0.0
    %2339 = vmatprep.subr.mxu0 0.0
    %2340 = vmatpush1.xpose.msra.mxu0 0.0
    %2341 = vmatprep.subr.mxu0 0.0
    %2342 = vmatpush1.xpose.msra.mxu0 0.0
    %2343 = vmatprep.subr.mxu0 0.0
    %2344 = vmatpush1.xpose.msra.mxu0 0.0
    %2345 = vmatprep.subr.mxu0 0.0
    %2346 = vmatpush1.xpose.msra.mxu0 0.0
    %2347 = vmatprep.subr.mxu0 0.0
    %2348 = vmatpush1.xpose.msra.mxu0 0.0
    %2349 = vmatprep.subr.mxu0 0.0
    %2350 = vmatpush1.xpose.msra.mxu0 0.0
    %2351 = vmatprep.subr.mxu0 0.0
    %2352 = vmatpush1.xpose.msra.mxu0 0.0
    %2353 = vmatprep.subr.mxu0 0.0
    %2354 = vmatpush1.xpose.msra.mxu0 0.0
    %2355 = vmatprep.subr.mxu0 0.0
    %2356 = vmatpush1.xpose.msra.mxu0 0.0
    %2357 = vmatprep.subr.mxu0 0.0
    %2358 = vmatpush1.xpose.msra.mxu0 0.0
    %2359 = vmatprep.subr.mxu0 0.0
    %2360 = vmatpush1.xpose.msra.mxu0 0.0
    %2361 = vmatprep.subr.mxu0 0.0
    %2362 = vmatpush1.xpose.msra.mxu0 0.0
    %2363 = vmatprep.subr.mxu0 0.0
    %2364 = vmatpush1.xpose.msra.mxu0 0.0
    %2365 = vmatprep.subr.mxu0 0.0
    %2366 = vmatpush1.xpose.msra.mxu0 0.0
    %2367 = vmatprep.subr.mxu0 0.0
    %2368 = vmatpush1.xpose.msra.mxu0 0.0
    %2369 = vmatprep.subr.mxu0 0.0
    %2370 = vmatpush1.xpose.msra.mxu0 0.0
    %2371 = vmatprep.subr.mxu0 0.0
    %2372 = vmatpush1.xpose.msra.mxu0 0.0
    %2373 = vmatprep.subr.mxu0 0.0
    %2374 = vmatpush1.xpose.msra.mxu0 0.0
    %2375 = vmatprep.mubr.f32.mxu0 0.0
    %2376 = vmatmul.mubr.f32.gmra.mrb[0].mxu0 %v2307
    %v2377 = vpop.f32.mrb[0].mxu0
    %v2378 = vadd.f32 0.0, %v2377
    %v2379 = vpop.f32.mrb[0].mxu0
    %2380 = vdwg.mxu0
    %2381 = vrot.lane.b32.xlu0 %v2145, 96
    %v2382 = vpop.permute.xlu0 %2381
    %v2383 = vsel %vm318, %v2145, 0
    %v2385 = vsel %vm318, %v2382, 0
    %2387 = vmatprep.subr.mxu0 0.0
    %2388 = vmatpush1.xpose.msra.mxu0 %v2385
    %2389 = vmatprep.subr.mxu0 0.0
    %2390 = vmatpush1.xpose.msra.mxu0 0.0
    %2391 = vmatprep.subr.mxu0 0.0
    %2392 = vmatpush1.xpose.msra.mxu0 0.0
    %2393 = vmatprep.subr.mxu0 0.0
    %2394 = vmatpush1.xpose.msra.mxu0 0.0
    %2395 = vmatprep.subr.mxu0 0.0
    %2396 = vmatpush1.xpose.msra.mxu0 0.0
    %2397 = vmatprep.subr.mxu0 0.0
    %2398 = vmatpush1.xpose.msra.mxu0 0.0
    %2399 = vmatprep.subr.mxu0 0.0
    %2400 = vmatpush1.xpose.msra.mxu0 0.0
    %2401 = vmatprep.subr.mxu0 0.0
    %2402 = vmatpush1.xpose.msra.mxu0 0.0
    %2403 = vmatprep.subr.mxu0 0.0
    %2404 = vmatpush1.xpose.msra.mxu0 0.0
    %2405 = vmatprep.subr.mxu0 0.0
    %2406 = vmatpush1.xpose.msra.mxu0 0.0
    %2407 = vmatprep.subr.mxu0 0.0
    %2408 = vmatpush1.xpose.msra.mxu0 0.0
    %2409 = vmatprep.subr.mxu0 0.0
    %2410 = vmatpush1.xpose.msra.mxu0 0.0
    %2411 = vmatprep.subr.mxu0 0.0
    %2412 = vmatpush1.xpose.msra.mxu0 0.0
    %2413 = vmatprep.subr.mxu0 0.0
    %2414 = vmatpush1.xpose.msra.mxu0 0.0
    %2415 = vmatprep.subr.mxu0 0.0
    %2416 = vmatpush1.xpose.msra.mxu0 0.0
    %2417 = vmatprep.subr.mxu0 0.0
    %2418 = vmatpush1.xpose.msra.mxu0 0.0
    %2419 = vmatprep.subr.mxu0 0.0
    %2420 = vmatpush1.xpose.msra.mxu0 0.0
    %2421 = vmatprep.subr.mxu0 0.0
    %2422 = vmatpush1.xpose.msra.mxu0 0.0
    %2423 = vmatprep.subr.mxu0 0.0
    %2424 = vmatpush1.xpose.msra.mxu0 0.0
    %2425 = vmatprep.subr.mxu0 0.0
    %2426 = vmatpush1.xpose.msra.mxu0 0.0
    %2427 = vmatprep.subr.mxu0 0.0
    %2428 = vmatpush1.xpose.msra.mxu0 0.0
    %2429 = vmatprep.subr.mxu0 0.0
    %2430 = vmatpush1.xpose.msra.mxu0 0.0
    %2431 = vmatprep.subr.mxu0 0.0
    %2432 = vmatpush1.xpose.msra.mxu0 0.0
    %2433 = vmatprep.subr.mxu0 0.0
    %2434 = vmatpush1.xpose.msra.mxu0 0.0
    %2435 = vmatprep.subr.mxu0 0.0
    %2436 = vmatpush1.xpose.msra.mxu0 0.0
    %2437 = vmatprep.subr.mxu0 0.0
    %2438 = vmatpush1.xpose.msra.mxu0 0.0
    %2439 = vmatprep.subr.mxu0 0.0
    %2440 = vmatpush1.xpose.msra.mxu0 0.0
    %2441 = vmatprep.subr.mxu0 0.0
    %2442 = vmatpush1.xpose.msra.mxu0 0.0
    %2443 = vmatprep.subr.mxu0 0.0
    %2444 = vmatpush1.xpose.msra.mxu0 0.0
    %2445 = vmatprep.subr.mxu0 0.0
    %2446 = vmatpush1.xpose.msra.mxu0 0.0
    %2447 = vmatprep.subr.mxu0 0.0
    %2448 = vmatpush1.xpose.msra.mxu0 0.0
    %2449 = vmatprep.subr.mxu0 0.0
    %2450 = vmatpush1.xpose.msra.mxu0 0.0
    %2451 = vmatprep.mubr.f32.mxu0 0.0
    %2452 = vmatmul.mubr.f32.gmra.mrb[0].mxu0 %v2383
    %v2453 = vpop.f32.mrb[0].mxu0
    %v2454 = vadd.f32 0.0, %v2453
    %v2455 = vpop.f32.mrb[0].mxu0
    %2456 = vdwg.mxu0
    %2457 = vrot.lane.b32.xlu0 %v2136, 96
    %v2458 = vpop.permute.xlu0 %2457
    %v2459 = vsel %vm318, %v2136, 0
    %v2461 = vsel %vm318, %v2458, 0
    %2463 = vmatprep.subr.mxu0 0.0
    %2464 = vmatpush1.xpose.msra.mxu0 %v2461
    %2465 = vmatprep.subr.mxu0 0.0
    %2466 = vmatpush1.xpose.msra.mxu0 0.0
    %2467 = vmatprep.subr.mxu0 0.0
    %2468 = vmatpush1.xpose.msra.mxu0 0.0
    %2469 = vmatprep.subr.mxu0 0.0
    %2470 = vmatpush1.xpose.msra.mxu0 0.0
    %2471 = vmatprep.subr.mxu0 0.0
    %2472 = vmatpush1.xpose.msra.mxu0 0.0
    %2473 = vmatprep.subr.mxu0 0.0
    %2474 = vmatpush1.xpose.msra.mxu0 0.0
    %2475 = vmatprep.subr.mxu0 0.0
    %2476 = vmatpush1.xpose.msra.mxu0 0.0
    %2477 = vmatprep.subr.mxu0 0.0
    %2478 = vmatpush1.xpose.msra.mxu0 0.0
    %2479 = vmatprep.subr.mxu0 0.0
    %2480 = vmatpush1.xpose.msra.mxu0 0.0
    %2481 = vmatprep.subr.mxu0 0.0
    %2482 = vmatpush1.xpose.msra.mxu0 0.0
    %2483 = vmatprep.subr.mxu0 0.0
    %2484 = vmatpush1.xpose.msra.mxu0 0.0
    %2485 = vmatprep.subr.mxu0 0.0
    %2486 = vmatpush1.xpose.msra.mxu0 0.0
    %2487 = vmatprep.subr.mxu0 0.0
    %2488 = vmatpush1.xpose.msra.mxu0 0.0
    %2489 = vmatprep.subr.mxu0 0.0
    %2490 = vmatpush1.xpose.msra.mxu0 0.0
    %2491 = vmatprep.subr.mxu0 0.0
    %2492 = vmatpush1.xpose.msra.mxu0 0.0
    %2493 = vmatprep.subr.mxu0 0.0
    %2494 = vmatpush1.xpose.msra.mxu0 0.0
    %2495 = vmatprep.subr.mxu0 0.0
    %2496 = vmatpush1.xpose.msra.mxu0 0.0
    %2497 = vmatprep.subr.mxu0 0.0
    %2498 = vmatpush1.xpose.msra.mxu0 0.0
    %2499 = vmatprep.subr.mxu0 0.0
    %2500 = vmatpush1.xpose.msra.mxu0 0.0
    %2501 = vmatprep.subr.mxu0 0.0
    %2502 = vmatpush1.xpose.msra.mxu0 0.0
    %2503 = vmatprep.subr.mxu0 0.0
    %2504 = vmatpush1.xpose.msra.mxu0 0.0
    %2505 = vmatprep.subr.mxu0 0.0
    %2506 = vmatpush1.xpose.msra.mxu0 0.0
    %2507 = vmatprep.subr.mxu0 0.0
    %2508 = vmatpush1.xpose.msra.mxu0 0.0
    %2509 = vmatprep.subr.mxu0 0.0
    %2510 = vmatpush1.xpose.msra.mxu0 0.0
    %2511 = vmatprep.subr.mxu0 0.0
    %2512 = vmatpush1.xpose.msra.mxu0 0.0
    %2513 = vmatprep.subr.mxu0 0.0
    %2514 = vmatpush1.xpose.msra.mxu0 0.0
    %2515 = vmatprep.subr.mxu0 0.0
    %2516 = vmatpush1.xpose.msra.mxu0 0.0
    %2517 = vmatprep.subr.mxu0 0.0
    %2518 = vmatpush1.xpose.msra.mxu0 0.0
    %2519 = vmatprep.subr.mxu0 0.0
    %2520 = vmatpush1.xpose.msra.mxu0 0.0
    %2521 = vmatprep.subr.mxu0 0.0
    %2522 = vmatpush1.xpose.msra.mxu0 0.0
    %2523 = vmatprep.subr.mxu0 0.0
    %2524 = vmatpush1.xpose.msra.mxu0 0.0
    %2525 = vmatprep.subr.mxu0 0.0
    %2526 = vmatpush1.xpose.msra.mxu0 0.0
    %2527 = vmatprep.mubr.f32.mxu0 0.0
    %2528 = vmatmul.mubr.f32.gmra.mrb[0].mxu0 %v2459
    %v2529 = vpop.f32.mrb[0].mxu0
    %v2530 = vadd.f32 0.0, %v2529
    %v2531 = vpop.f32.mrb[0].mxu0
    %2532 = vdwg.mxu0
    %2533 = vrot.lane.b32.xlu0 %v2148, 96
    %v2534 = vpop.permute.xlu0 %2533
    %v2535 = vsel %vm318, %v2148, 0
    %v2537 = vsel %vm318, %v2534, 0
    %2539 = vmatprep.subr.mxu0 0.0
    %2540 = vmatpush1.xpose.msra.mxu0 %v2537
    %2541 = vmatprep.subr.mxu0 0.0
    %2542 = vmatpush1.xpose.msra.mxu0 0.0
    %2543 = vmatprep.subr.mxu0 0.0
    %2544 = vmatpush1.xpose.msra.mxu0 0.0
    %2545 = vmatprep.subr.mxu0 0.0
    %2546 = vmatpush1.xpose.msra.mxu0 0.0
    %2547 = vmatprep.subr.mxu0 0.0
    %2548 = vmatpush1.xpose.msra.mxu0 0.0
    %2549 = vmatprep.subr.mxu0 0.0
    %2550 = vmatpush1.xpose.msra.mxu0 0.0
    %2551 = vmatprep.subr.mxu0 0.0
    %2552 = vmatpush1.xpose.msra.mxu0 0.0
    %2553 = vmatprep.subr.mxu0 0.0
    %2554 = vmatpush1.xpose.msra.mxu0 0.0
    %2555 = vmatprep.subr.mxu0 0.0
    %2556 = vmatpush1.xpose.msra.mxu0 0.0
    %2557 = vmatprep.subr.mxu0 0.0
    %2558 = vmatpush1.xpose.msra.mxu0 0.0
    %2559 = vmatprep.subr.mxu0 0.0
    %2560 = vmatpush1.xpose.msra.mxu0 0.0
    %2561 = vmatprep.subr.mxu0 0.0
    %2562 = vmatpush1.xpose.msra.mxu0 0.0
    %2563 = vmatprep.subr.mxu0 0.0
    %2564 = vmatpush1.xpose.msra.mxu0 0.0
    %2565 = vmatprep.subr.mxu0 0.0
    %2566 = vmatpush1.xpose.msra.mxu0 0.0
    %2567 = vmatprep.subr.mxu0 0.0
    %2568 = vmatpush1.xpose.msra.mxu0 0.0
    %2569 = vmatprep.subr.mxu0 0.0
    %2570 = vmatpush1.xpose.msra.mxu0 0.0
    %2571 = vmatprep.subr.mxu0 0.0
    %2572 = vmatpush1.xpose.msra.mxu0 0.0
    %2573 = vmatprep.subr.mxu0 0.0
    %2574 = vmatpush1.xpose.msra.mxu0 0.0
    %2575 = vmatprep.subr.mxu0 0.0
    %2576 = vmatpush1.xpose.msra.mxu0 0.0
    %2577 = vmatprep.subr.mxu0 0.0
    %2578 = vmatpush1.xpose.msra.mxu0 0.0
    %2579 = vmatprep.subr.mxu0 0.0
    %2580 = vmatpush1.xpose.msra.mxu0 0.0
    %2581 = vmatprep.subr.mxu0 0.0
    %2582 = vmatpush1.xpose.msra.mxu0 0.0
    %2583 = vmatprep.subr.mxu0 0.0
    %2584 = vmatpush1.xpose.msra.mxu0 0.0
    %2585 = vmatprep.subr.mxu0 0.0
    %2586 = vmatpush1.xpose.msra.mxu0 0.0
    %2587 = vmatprep.subr.mxu0 0.0
    %2588 = vmatpush1.xpose.msra.mxu0 0.0
    %2589 = vmatprep.subr.mxu0 0.0
    %2590 = vmatpush1.xpose.msra.mxu0 0.0
    %2591 = vmatprep.subr.mxu0 0.0
    %2592 = vmatpush1.xpose.msra.mxu0 0.0
    %2593 = vmatprep.subr.mxu0 0.0
    %2594 = vmatpush1.xpose.msra.mxu0 0.0
    %2595 = vmatprep.subr.mxu0 0.0
    %2596 = vmatpush1.xpose.msra.mxu0 0.0
    %2597 = vmatprep.subr.mxu0 0.0
    %2598 = vmatpush1.xpose.msra.mxu0 0.0
    %2599 = vmatprep.subr.mxu0 0.0
    %2600 = vmatpush1.xpose.msra.mxu0 0.0
    %2601 = vmatprep.subr.mxu0 0.0
    %2602 = vmatpush1.xpose.msra.mxu0 0.0
    %2603 = vmatprep.mubr.f32.mxu0 0.0
    %2604 = vmatmul.mubr.f32.gmra.mrb[0].mxu0 %v2535
    %v2605 = vpop.f32.mrb[0].mxu0
    %v2606 = vadd.f32 0.0, %v2605
    %v2607 = vpop.f32.mrb[0].mxu0
    %2608 = vdwg.mxu0
    %2609 = vrot.lane.b32.xlu0 %v2150, 96
    %v2610 = vpop.permute.xlu0 %2609
    %v2611 = vsel %vm318, %v2150, 0
    %v2613 = vsel %vm318, %v2610, 0
    %2615 = vmatprep.subr.mxu0 0.0
    %2616 = vmatpush1.xpose.msra.mxu0 %v2613
    %2617 = vmatprep.subr.mxu0 0.0
    %2618 = vmatpush1.xpose.msra.mxu0 0.0
    %2619 = vmatprep.subr.mxu0 0.0
    %2620 = vmatpush1.xpose.msra.mxu0 0.0
    %2621 = vmatprep.subr.mxu0 0.0
    %2622 = vmatpush1.xpose.msra.mxu0 0.0
    %2623 = vmatprep.subr.mxu0 0.0
    %2624 = vmatpush1.xpose.msra.mxu0 0.0
    %2625 = vmatprep.subr.mxu0 0.0
    %2626 = vmatpush1.xpose.msra.mxu0 0.0
    %2627 = vmatprep.subr.mxu0 0.0
    %2628 = vmatpush1.xpose.msra.mxu0 0.0
    %2629 = vmatprep.subr.mxu0 0.0
    %2630 = vmatpush1.xpose.msra.mxu0 0.0
    %2631 = vmatprep.subr.mxu0 0.0
    %2632 = vmatpush1.xpose.msra.mxu0 0.0
    %2633 = vmatprep.subr.mxu0 0.0
    %2634 = vmatpush1.xpose.msra.mxu0 0.0
    %2635 = vmatprep.subr.mxu0 0.0
    %2636 = vmatpush1.xpose.msra.mxu0 0.0
    %2637 = vmatprep.subr.mxu0 0.0
    %2638 = vmatpush1.xpose.msra.mxu0 0.0
    %2639 = vmatprep.subr.mxu0 0.0
    %2640 = vmatpush1.xpose.msra.mxu0 0.0
    %2641 = vmatprep.subr.mxu0 0.0
    %2642 = vmatpush1.xpose.msra.mxu0 0.0
    %2643 = vmatprep.subr.mxu0 0.0
    %2644 = vmatpush1.xpose.msra.mxu0 0.0
    %2645 = vmatprep.subr.mxu0 0.0
    %2646 = vmatpush1.xpose.msra.mxu0 0.0
    %2647 = vmatprep.subr.mxu0 0.0
    %2648 = vmatpush1.xpose.msra.mxu0 0.0
    %2649 = vmatprep.subr.mxu0 0.0
    %2650 = vmatpush1.xpose.msra.mxu0 0.0
    %2651 = vmatprep.subr.mxu0 0.0
    %2652 = vmatpush1.xpose.msra.mxu0 0.0
    %2653 = vmatprep.subr.mxu0 0.0
    %2654 = vmatpush1.xpose.msra.mxu0 0.0
    %2655 = vmatprep.subr.mxu0 0.0
    %2656 = vmatpush1.xpose.msra.mxu0 0.0
    %2657 = vmatprep.subr.mxu0 0.0
    %2658 = vmatpush1.xpose.msra.mxu0 0.0
    %2659 = vmatprep.subr.mxu0 0.0
    %2660 = vmatpush1.xpose.msra.mxu0 0.0
    %2661 = vmatprep.subr.mxu0 0.0
    %2662 = vmatpush1.xpose.msra.mxu0 0.0
    %2663 = vmatprep.subr.mxu0 0.0
    %2664 = vmatpush1.xpose.msra.mxu0 0.0
    %2665 = vmatprep.subr.mxu0 0.0
    %2666 = vmatpush1.xpose.msra.mxu0 0.0
    %2667 = vmatprep.subr.mxu0 0.0
    %2668 = vmatpush1.xpose.msra.mxu0 0.0
    %2669 = vmatprep.subr.mxu0 0.0
    %2670 = vmatpush1.xpose.msra.mxu0 0.0
    %2671 = vmatprep.subr.mxu0 0.0
    %2672 = vmatpush1.xpose.msra.mxu0 0.0
    %2673 = vmatprep.subr.mxu0 0.0
    %2674 = vmatpush1.xpose.msra.mxu0 0.0
    %2675 = vmatprep.subr.mxu0 0.0
    %2676 = vmatpush1.xpose.msra.mxu0 0.0
    %2677 = vmatprep.subr.mxu0 0.0
    %2678 = vmatpush1.xpose.msra.mxu0 0.0
    %2679 = vmatprep.mubr.f32.mxu0 0.0
    %2680 = vmatmul.mubr.f32.gmra.mrb[0].mxu0 %v2611
    %v2681 = vpop.f32.mrb[0].mxu0
    %v2682 = vadd.f32 0.0, %v2681
    %v2683 = vpop.f32.mrb[0].mxu0
    %2684 = vdwg.mxu0
    %2685 = vrot.lane.b32.xlu0 %v2152, 96
    %v2686 = vpop.permute.xlu0 %2685
    %v2687 = vsel %vm318, %v2152, 0
    %v2689 = vsel %vm318, %v2686, 0
    %2691 = vmatprep.subr.mxu0 0.0
    %2692 = vmatpush1.xpose.msra.mxu0 %v2689
    %2693 = vmatprep.subr.mxu0 0.0
    %2694 = vmatpush1.xpose.msra.mxu0 0.0
    %2695 = vmatprep.subr.mxu0 0.0
    %2696 = vmatpush1.xpose.msra.mxu0 0.0
    %2697 = vmatprep.subr.mxu0 0.0
    %2698 = vmatpush1.xpose.msra.mxu0 0.0
    %2699 = vmatprep.subr.mxu0 0.0
    %2700 = vmatpush1.xpose.msra.mxu0 0.0
    %2701 = vmatprep.subr.mxu0 0.0
    %2702 = vmatpush1.xpose.msra.mxu0 0.0
    %2703 = vmatprep.subr.mxu0 0.0
    %2704 = vmatpush1.xpose.msra.mxu0 0.0
    %2705 = vmatprep.subr.mxu0 0.0
    %2706 = vmatpush1.xpose.msra.mxu0 0.0
    %2707 = vmatprep.subr.mxu0 0.0
    %2708 = vmatpush1.xpose.msra.mxu0 0.0
    %2709 = vmatprep.subr.mxu0 0.0
    %2710 = vmatpush1.xpose.msra.mxu0 0.0
    %2711 = vmatprep.subr.mxu0 0.0
    %2712 = vmatpush1.xpose.msra.mxu0 0.0
    %2713 = vmatprep.subr.mxu0 0.0
    %2714 = vmatpush1.xpose.msra.mxu0 0.0
    %2715 = vmatprep.subr.mxu0 0.0
    %2716 = vmatpush1.xpose.msra.mxu0 0.0
    %2717 = vmatprep.subr.mxu0 0.0
    %2718 = vmatpush1.xpose.msra.mxu0 0.0
    %2719 = vmatprep.subr.mxu0 0.0
    %2720 = vmatpush1.xpose.msra.mxu0 0.0
    %2721 = vmatprep.subr.mxu0 0.0
    %2722 = vmatpush1.xpose.msra.mxu0 0.0
    %2723 = vmatprep.subr.mxu0 0.0
    %2724 = vmatpush1.xpose.msra.mxu0 0.0
    %2725 = vmatprep.subr.mxu0 0.0
    %2726 = vmatpush1.xpose.msra.mxu0 0.0
    %2727 = vmatprep.subr.mxu0 0.0
    %2728 = vmatpush1.xpose.msra.mxu0 0.0
    %2729 = vmatprep.subr.mxu0 0.0
    %2730 = vmatpush1.xpose.msra.mxu0 0.0
    %2731 = vmatprep.subr.mxu0 0.0
    %2732 = vmatpush1.xpose.msra.mxu0 0.0
    %2733 = vmatprep.subr.mxu0 0.0
    %2734 = vmatpush1.xpose.msra.mxu0 0.0
    %2735 = vmatprep.subr.mxu0 0.0
    %2736 = vmatpush1.xpose.msra.mxu0 0.0
    %2737 = vmatprep.subr.mxu0 0.0
    %2738 = vmatpush1.xpose.msra.mxu0 0.0
    %2739 = vmatprep.subr.mxu0 0.0
    %2740 = vmatpush1.xpose.msra.mxu0 0.0
    %2741 = vmatprep.subr.mxu0 0.0
    %2742 = vmatpush1.xpose.msra.mxu0 0.0
    %2743 = vmatprep.subr.mxu0 0.0
    %2744 = vmatpush1.xpose.msra.mxu0 0.0
    %2745 = vmatprep.subr.mxu0 0.0
    %2746 = vmatpush1.xpose.msra.mxu0 0.0
    %2747 = vmatprep.subr.mxu0 0.0
    %2748 = vmatpush1.xpose.msra.mxu0 0.0
    %2749 = vmatprep.subr.mxu0 0.0
    %2750 = vmatpush1.xpose.msra.mxu0 0.0
    %2751 = vmatprep.subr.mxu0 0.0
    %2752 = vmatpush1.xpose.msra.mxu0 0.0
    %2753 = vmatprep.subr.mxu0 0.0
    %2754 = vmatpush1.xpose.msra.mxu0 0.0
    %2755 = vmatprep.mubr.f32.mxu0 0.0
    %2756 = vmatmul.mubr.f32.gmra.mrb[0].mxu0 %v2687
    %v2757 = vpop.f32.mrb[0].mxu0
    %v2758 = vadd.f32 0.0, %v2757
    %v2759 = vpop.f32.mrb[0].mxu0
    %2760 = vdwg.mxu0
    %v2761 = vmul.f32 %v2226, 0.17677669
    %v2762 = vmul.f32 %v2302, 0.17677669
    %v2763 = vmul.f32 %v2378, 0.17677669
    %v2764 = vmul.f32 %v2454, 0.17677669
    %v2765 = vmul.f32 %v2530, 0.17677669
    %v2766 = vmul.f32 %v2606, 0.17677669
    %v2767 = vmul.f32 %v2682, 0.17677669
    %v2768 = vmul.f32 %v2758, 0.17677669
    %v2769 = vsel %vm934, %v2761, -inf
    %v2770 = vsel %vm934, %v2762, -inf
    %v2771 = vsel %vm934, %v2763, -inf
    %v2772 = vsel %vm934, %v2764, -inf
    %v2773 = vsel %vm934, %v2765, -inf
    %v2774 = vsel %vm934, %v2766, -inf
    %v2775 = vsel %vm934, %v2767, -inf
    %v2776 = vsel %vm934, %v2768, -inf
    %v2777 = vsel %vm318, %v2769, -inf
    %2778 = vmax.xlane.f32.xlu0 %v2777
    %v2779 = vpop.xlane.xlu0 %2778
    %v2780 = vsel %vm318, %v2770, -inf
    %2781 = vmax.xlane.f32.xlu0 %v2780
    %v2782 = vpop.xlane.xlu0 %2781
    %v2783 = vsel %vm318, %v2771, -inf
    %2784 = vmax.xlane.f32.xlu0 %v2783
    %v2785 = vpop.xlane.xlu0 %2784
    %v2786 = vsel %vm318, %v2772, -inf
    %2787 = vmax.xlane.f32.xlu0 %v2786
    %v2788 = vpop.xlane.xlu0 %2787
    %v2789 = vsel %vm318, %v2773, -inf
    %2790 = vmax.xlane.f32.xlu0 %v2789
    %v2791 = vpop.xlane.xlu0 %2790
    %v2792 = vsel %vm318, %v2774, -inf
    %2793 = vmax.xlane.f32.xlu0 %v2792
    %v2794 = vpop.xlane.xlu0 %2793
    %v2795 = vsel %vm318, %v2775, -inf
    %2796 = vmax.xlane.f32.xlu0 %v2795
    %v2797 = vpop.xlane.xlu0 %2796
    %v2798 = vsel %vm318, %v2776, -inf
    %2799 = vmax.xlane.f32.xlu0 %v2798
    %v2800 = vpop.xlane.xlu0 %2799
    %v2801 = vsub.f32 %v2769, %v2779
    %v2802 = vsub.f32 %v2770, %v2782
    %v2803 = vsub.f32 %v2771, %v2785
    %v2804 = vsub.f32 %v2772, %v2788
    %v2805 = vsub.f32 %v2773, %v2791
    %v2806 = vsub.f32 %v2774, %v2794
    %v2807 = vsub.f32 %v2775, %v2797
    %v2808 = vsub.f32 %v2776, %v2800
    %v2809 = vmul.f32 %v2801, 1.442695
    %v2810 = vpow.pop %v2809
    %v2811 = vmul.f32 %v2802, 1.442695
    %v2812 = vpow.pop %v2811
    %v2813 = vmul.f32 %v2803, 1.442695
    %v2814 = vpow.pop %v2813
    %v2815 = vmul.f32 %v2804, 1.442695
    %v2816 = vpow.pop %v2815
    %v2817 = vmul.f32 %v2805, 1.442695
    %v2818 = vpow.pop %v2817
    %v2819 = vmul.f32 %v2806, 1.442695
    %v2820 = vpow.pop %v2819
    %v2821 = vmul.f32 %v2807, 1.442695
    %v2822 = vpow.pop %v2821
    %v2823 = vmul.f32 %v2808, 1.442695
    %v2824 = vpow.pop %v2823
    %v2825 = vsel %vm318, %v2810, 0.0
    %2826 = vadd.xlane.f32.xlu0 %v2825
    %v2827 = vpop.xlane.xlu0 %2826
    %v2828 = vsel %vm318, %v2812, 0.0
    %2829 = vadd.xlane.f32.xlu0 %v2828
    %v2830 = vpop.xlane.xlu0 %2829
    %v2831 = vsel %vm318, %v2814, 0.0
    %2832 = vadd.xlane.f32.xlu0 %v2831
    %v2833 = vpop.xlane.xlu0 %2832
    %v2834 = vsel %vm318, %v2816, 0.0
    %2835 = vadd.xlane.f32.xlu0 %v2834
    %v2836 = vpop.xlane.xlu0 %2835
    %v2837 = vsel %vm318, %v2818, 0.0
    %2838 = vadd.xlane.f32.xlu0 %v2837
    %v2839 = vpop.xlane.xlu0 %2838
    %v2840 = vsel %vm318, %v2820, 0.0
    %2841 = vadd.xlane.f32.xlu0 %v2840
    %v2842 = vpop.xlane.xlu0 %2841
    %v2843 = vsel %vm318, %v2822, 0.0
    %2844 = vadd.xlane.f32.xlu0 %v2843
    %v2845 = vpop.xlane.xlu0 %2844
    %v2846 = vsel %vm318, %v2824, 0.0
    %2847 = vadd.xlane.f32.xlu0 %v2846
    %v2848 = vpop.xlane.xlu0 %2847
    %v2849 = vrcp.pop %v2827
    %v2850 = vmul.f32 %v2810, %v2849
    %v2851 = vrcp.pop %v2830
    %v2852 = vmul.f32 %v2812, %v2851
    %v2853 = vrcp.pop %v2833
    %v2854 = vmul.f32 %v2814, %v2853
    %v2855 = vrcp.pop %v2836
    %v2856 = vmul.f32 %v2816, %v2855
    %v2857 = vrcp.pop %v2839
    %v2858 = vmul.f32 %v2818, %v2857
    %v2859 = vrcp.pop %v2842
    %v2860 = vmul.f32 %v2820, %v2859
    %v2861 = vrcp.pop %v2845
    %v2862 = vmul.f32 %v2822, %v2861
    %v2863 = vrcp.pop %v2848
    %v2864 = vmul.f32 %v2824, %v2863
    %2865 = vrot.lane.b32.xlu0 %v2131, 64
    %v2866 = vpop.permute.xlu0 %2865
    %v2869 = vsel %vm318, %v2850, 0
    %2871 = vmatprep.subr.mxu0 0.0
    %2872 = vmatpush1.msra.mxu0 %v2866
    %2873 = vmatprep.subr.mxu0 0.0
    %2874 = vmatpush1.msra.mxu0 0.0
    %2875 = vmatprep.subr.mxu0 0.0
    %2876 = vmatpush1.msra.mxu0 0.0
    %2877 = vmatprep.subr.mxu0 0.0
    %2878 = vmatpush1.msra.mxu0 0.0
    %2879 = vmatprep.subr.mxu0 0.0
    %2880 = vmatpush1.msra.mxu0 0.0
    %2881 = vmatprep.subr.mxu0 0.0
    %2882 = vmatpush1.msra.mxu0 0.0
    %2883 = vmatprep.subr.mxu0 0.0
    %2884 = vmatpush1.msra.mxu0 0.0
    %2885 = vmatprep.subr.mxu0 0.0
    %2886 = vmatpush1.msra.mxu0 0.0
    %2887 = vmatprep.subr.mxu0 0.0
    %2888 = vmatpush1.msra.mxu0 0.0
    %2889 = vmatprep.subr.mxu0 0.0
    %2890 = vmatpush1.msra.mxu0 0.0
    %2891 = vmatprep.subr.mxu0 0.0
    %2892 = vmatpush1.msra.mxu0 0.0
    %2893 = vmatprep.subr.mxu0 0.0
    %2894 = vmatpush1.msra.mxu0 0.0
    %2895 = vmatprep.subr.mxu0 0.0
    %2896 = vmatpush1.msra.mxu0 0.0
    %2897 = vmatprep.subr.mxu0 0.0
    %2898 = vmatpush1.msra.mxu0 0.0
    %2899 = vmatprep.subr.mxu0 0.0
    %2900 = vmatpush1.msra.mxu0 0.0
    %2901 = vmatprep.subr.mxu0 0.0
    %2902 = vmatpush1.msra.mxu0 0.0
    %2903 = vmatprep.subr.mxu0 0.0
    %2904 = vmatpush1.msra.mxu0 0.0
    %2905 = vmatprep.subr.mxu0 0.0
    %2906 = vmatpush1.msra.mxu0 0.0
    %2907 = vmatprep.subr.mxu0 0.0
    %2908 = vmatpush1.msra.mxu0 0.0
    %2909 = vmatprep.subr.mxu0 0.0
    %2910 = vmatpush1.msra.mxu0 0.0
    %2911 = vmatprep.subr.mxu0 0.0
    %2912 = vmatpush1.msra.mxu0 0.0
    %2913 = vmatprep.subr.mxu0 0.0
    %2914 = vmatpush1.msra.mxu0 0.0
    %2915 = vmatprep.subr.mxu0 0.0
    %2916 = vmatpush1.msra.mxu0 0.0
    %2917 = vmatprep.subr.mxu0 0.0
    %2918 = vmatpush1.msra.mxu0 0.0
    %2919 = vmatprep.subr.mxu0 0.0
    %2920 = vmatpush1.msra.mxu0 0.0
    %2921 = vmatprep.subr.mxu0 0.0
    %2922 = vmatpush1.msra.mxu0 0.0
    %2923 = vmatprep.subr.mxu0 0.0
    %2924 = vmatpush1.msra.mxu0 0.0
    %2925 = vmatprep.subr.mxu0 0.0
    %2926 = vmatpush1.msra.mxu0 0.0
    %2927 = vmatprep.subr.mxu0 0.0
    %2928 = vmatpush1.msra.mxu0 0.0
    %2929 = vmatprep.subr.mxu0 0.0
    %2930 = vmatpush1.msra.mxu0 0.0
    %2931 = vmatprep.subr.mxu0 0.0
    %2932 = vmatpush1.msra.mxu0 0.0
    %2933 = vmatprep.subr.mxu0 0.0
    %2934 = vmatpush1.msra.mxu0 0.0
    %2935 = vmatprep.mubr.f32.mxu0 0.0
    %2936 = vmatmul.mubr.f32.gmra.mrb[0].mxu0 %v2869
    %v2937 = vpop.f32.mrb[0].mxu0
    %v2938 = vadd.f32 0.0, %v2937
    %v2939 = vpop.f32.mrb[0].mxu0
    %2940 = vdwg.mxu0
    %2941 = vrot.lane.b32.xlu0 %v2141, 64
    %v2942 = vpop.permute.xlu0 %2941
    %v2945 = vsel %vm318, %v2852, 0
    %2947 = vmatprep.subr.mxu0 0.0
    %2948 = vmatpush1.msra.mxu0 %v2942
    %2949 = vmatprep.subr.mxu0 0.0
    %2950 = vmatpush1.msra.mxu0 0.0
    %2951 = vmatprep.subr.mxu0 0.0
    %2952 = vmatpush1.msra.mxu0 0.0
    %2953 = vmatprep.subr.mxu0 0.0
    %2954 = vmatpush1.msra.mxu0 0.0
    %2955 = vmatprep.subr.mxu0 0.0
    %2956 = vmatpush1.msra.mxu0 0.0
    %2957 = vmatprep.subr.mxu0 0.0
    %2958 = vmatpush1.msra.mxu0 0.0
    %2959 = vmatprep.subr.mxu0 0.0
    %2960 = vmatpush1.msra.mxu0 0.0
    %2961 = vmatprep.subr.mxu0 0.0
    %2962 = vmatpush1.msra.mxu0 0.0
    %2963 = vmatprep.subr.mxu0 0.0
    %2964 = vmatpush1.msra.mxu0 0.0
    %2965 = vmatprep.subr.mxu0 0.0
    %2966 = vmatpush1.msra.mxu0 0.0
    %2967 = vmatprep.subr.mxu0 0.0
    %2968 = vmatpush1.msra.mxu0 0.0
    %2969 = vmatprep.subr.mxu0 0.0
    %2970 = vmatpush1.msra.mxu0 0.0
    %2971 = vmatprep.subr.mxu0 0.0
    %2972 = vmatpush1.msra.mxu0 0.0
    %2973 = vmatprep.subr.mxu0 0.0
    %2974 = vmatpush1.msra.mxu0 0.0
    %2975 = vmatprep.subr.mxu0 0.0
    %2976 = vmatpush1.msra.mxu0 0.0
    %2977 = vmatprep.subr.mxu0 0.0
    %2978 = vmatpush1.msra.mxu0 0.0
    %2979 = vmatprep.subr.mxu0 0.0
    %2980 = vmatpush1.msra.mxu0 0.0
    %2981 = vmatprep.subr.mxu0 0.0
    %2982 = vmatpush1.msra.mxu0 0.0
    %2983 = vmatprep.subr.mxu0 0.0
    %2984 = vmatpush1.msra.mxu0 0.0
    %2985 = vmatprep.subr.mxu0 0.0
    %2986 = vmatpush1.msra.mxu0 0.0
    %2987 = vmatprep.subr.mxu0 0.0
    %2988 = vmatpush1.msra.mxu0 0.0
    %2989 = vmatprep.subr.mxu0 0.0
    %2990 = vmatpush1.msra.mxu0 0.0
    %2991 = vmatprep.subr.mxu0 0.0
    %2992 = vmatpush1.msra.mxu0 0.0
    %2993 = vmatprep.subr.mxu0 0.0
    %2994 = vmatpush1.msra.mxu0 0.0
    %2995 = vmatprep.subr.mxu0 0.0
    %2996 = vmatpush1.msra.mxu0 0.0
    %2997 = vmatprep.subr.mxu0 0.0
    %2998 = vmatpush1.msra.mxu0 0.0
    %2999 = vmatprep.subr.mxu0 0.0
    %3000 = vmatpush1.msra.mxu0 0.0
    %3001 = vmatprep.subr.mxu0 0.0
    %3002 = vmatpush1.msra.mxu0 0.0
    %3003 = vmatprep.subr.mxu0 0.0
    %3004 = vmatpush1.msra.mxu0 0.0
    %3005 = vmatprep.subr.mxu0 0.0
    %3006 = vmatpush1.msra.mxu0 0.0
    %3007 = vmatprep.subr.mxu0 0.0
    %3008 = vmatpush1.msra.mxu0 0.0
    %3009 = vmatprep.subr.mxu0 0.0
    %3010 = vmatpush1.msra.mxu0 0.0
    %3011 = vmatprep.mubr.f32.mxu0 0.0
    %3012 = vmatmul.mubr.f32.gmra.mrb[0].mxu0 %v2945
    %v3013 = vpop.f32.mrb[0].mxu0
    %v3014 = vadd.f32 0.0, %v3013
    %v3015 = vpop.f32.mrb[0].mxu0
    %3016 = vdwg.mxu0
    %3017 = vrot.lane.b32.xlu0 %v2143, 64
    %v3018 = vpop.permute.xlu0 %3017
    %v3021 = vsel %vm318, %v2854, 0
    %3023 = vmatprep.subr.mxu0 0.0
    %3024 = vmatpush1.msra.mxu0 %v3018
    %3025 = vmatprep.subr.mxu0 0.0
    %3026 = vmatpush1.msra.mxu0 0.0
    %3027 = vmatprep.subr.mxu0 0.0
    %3028 = vmatpush1.msra.mxu0 0.0
    %3029 = vmatprep.subr.mxu0 0.0
    %3030 = vmatpush1.msra.mxu0 0.0
    %3031 = vmatprep.subr.mxu0 0.0
    %3032 = vmatpush1.msra.mxu0 0.0
    %3033 = vmatprep.subr.mxu0 0.0
    %3034 = vmatpush1.msra.mxu0 0.0
    %3035 = vmatprep.subr.mxu0 0.0
    %3036 = vmatpush1.msra.mxu0 0.0
    %3037 = vmatprep.subr.mxu0 0.0
    %3038 = vmatpush1.msra.mxu0 0.0
    %3039 = vmatprep.subr.mxu0 0.0
    %3040 = vmatpush1.msra.mxu0 0.0
    %3041 = vmatprep.subr.mxu0 0.0
    %3042 = vmatpush1.msra.mxu0 0.0
    %3043 = vmatprep.subr.mxu0 0.0
    %3044 = vmatpush1.msra.mxu0 0.0
    %3045 = vmatprep.subr.mxu0 0.0
    %3046 = vmatpush1.msra.mxu0 0.0
    %3047 = vmatprep.subr.mxu0 0.0
    %3048 = vmatpush1.msra.mxu0 0.0
    %3049 = vmatprep.subr.mxu0 0.0
    %3050 = vmatpush1.msra.mxu0 0.0
    %3051 = vmatprep.subr.mxu0 0.0
    %3052 = vmatpush1.msra.mxu0 0.0
    %3053 = vmatprep.subr.mxu0 0.0
    %3054 = vmatpush1.msra.mxu0 0.0
    %3055 = vmatprep.subr.mxu0 0.0
    %3056 = vmatpush1.msra.mxu0 0.0
    %3057 = vmatprep.subr.mxu0 0.0
    %3058 = vmatpush1.msra.mxu0 0.0
    %3059 = vmatprep.subr.mxu0 0.0
    %3060 = vmatpush1.msra.mxu0 0.0
    %3061 = vmatprep.subr.mxu0 0.0
    %3062 = vmatpush1.msra.mxu0 0.0
    %3063 = vmatprep.subr.mxu0 0.0
    %3064 = vmatpush1.msra.mxu0 0.0
    %3065 = vmatprep.subr.mxu0 0.0
    %3066 = vmatpush1.msra.mxu0 0.0
    %3067 = vmatprep.subr.mxu0 0.0
    %3068 = vmatpush1.msra.mxu0 0.0
    %3069 = vmatprep.subr.mxu0 0.0
    %3070 = vmatpush1.msra.mxu0 0.0
    %3071 = vmatprep.subr.mxu0 0.0
    %3072 = vmatpush1.msra.mxu0 0.0
    %3073 = vmatprep.subr.mxu0 0.0
    %3074 = vmatpush1.msra.mxu0 0.0
    %3075 = vmatprep.subr.mxu0 0.0
    %3076 = vmatpush1.msra.mxu0 0.0
    %3077 = vmatprep.subr.mxu0 0.0
    %3078 = vmatpush1.msra.mxu0 0.0
    %3079 = vmatprep.subr.mxu0 0.0
    %3080 = vmatpush1.msra.mxu0 0.0
    %3081 = vmatprep.subr.mxu0 0.0
    %3082 = vmatpush1.msra.mxu0 0.0
    %3083 = vmatprep.subr.mxu0 0.0
    %3084 = vmatpush1.msra.mxu0 0.0
    %3085 = vmatprep.subr.mxu0 0.0
    %3086 = vmatpush1.msra.mxu0 0.0
    %3087 = vmatprep.mubr.f32.mxu0 0.0
    %3088 = vmatmul.mubr.f32.gmra.mrb[0].mxu0 %v3021
    %v3089 = vpop.f32.mrb[0].mxu0
    %v3090 = vadd.f32 0.0, %v3089
    %v3091 = vpop.f32.mrb[0].mxu0
    %3092 = vdwg.mxu0
    %3093 = vrot.lane.b32.xlu0 %v2145, 64
    %v3094 = vpop.permute.xlu0 %3093
    %v3097 = vsel %vm318, %v2856, 0
    %3099 = vmatprep.subr.mxu0 0.0
    %3100 = vmatpush1.msra.mxu0 %v3094
    %3101 = vmatprep.subr.mxu0 0.0
    %3102 = vmatpush1.msra.mxu0 0.0
    %3103 = vmatprep.subr.mxu0 0.0
    %3104 = vmatpush1.msra.mxu0 0.0
    %3105 = vmatprep.subr.mxu0 0.0
    %3106 = vmatpush1.msra.mxu0 0.0
    %3107 = vmatprep.subr.mxu0 0.0
    %3108 = vmatpush1.msra.mxu0 0.0
    %3109 = vmatprep.subr.mxu0 0.0
    %3110 = vmatpush1.msra.mxu0 0.0
    %3111 = vmatprep.subr.mxu0 0.0
    %3112 = vmatpush1.msra.mxu0 0.0
    %3113 = vmatprep.subr.mxu0 0.0
    %3114 = vmatpush1.msra.mxu0 0.0
    %3115 = vmatprep.subr.mxu0 0.0
    %3116 = vmatpush1.msra.mxu0 0.0
    %3117 = vmatprep.subr.mxu0 0.0
    %3118 = vmatpush1.msra.mxu0 0.0
    %3119 = vmatprep.subr.mxu0 0.0
    %3120 = vmatpush1.msra.mxu0 0.0
    %3121 = vmatprep.subr.mxu0 0.0
    %3122 = vmatpush1.msra.mxu0 0.0
    %3123 = vmatprep.subr.mxu0 0.0
    %3124 = vmatpush1.msra.mxu0 0.0
    %3125 = vmatprep.subr.mxu0 0.0
    %3126 = vmatpush1.msra.mxu0 0.0
    %3127 = vmatprep.subr.mxu0 0.0
    %3128 = vmatpush1.msra.mxu0 0.0
    %3129 = vmatprep.subr.mxu0 0.0
    %3130 = vmatpush1.msra.mxu0 0.0
    %3131 = vmatprep.subr.mxu0 0.0
    %3132 = vmatpush1.msra.mxu0 0.0
    %3133 = vmatprep.subr.mxu0 0.0
    %3134 = vmatpush1.msra.mxu0 0.0
    %3135 = vmatprep.subr.mxu0 0.0
    %3136 = vmatpush1.msra.mxu0 0.0
    %3137 = vmatprep.subr.mxu0 0.0
    %3138 = vmatpush1.msra.mxu0 0.0
    %3139 = vmatprep.subr.mxu0 0.0
    %3140 = vmatpush1.msra.mxu0 0.0
    %3141 = vmatprep.subr.mxu0 0.0
    %3142 = vmatpush1.msra.mxu0 0.0
    %3143 = vmatprep.subr.mxu0 0.0
    %3144 = vmatpush1.msra.mxu0 0.0
    %3145 = vmatprep.subr.mxu0 0.0
    %3146 = vmatpush1.msra.mxu0 0.0
    %3147 = vmatprep.subr.mxu0 0.0
    %3148 = vmatpush1.msra.mxu0 0.0
    %3149 = vmatprep.subr.mxu0 0.0
    %3150 = vmatpush1.msra.mxu0 0.0
    %3151 = vmatprep.subr.mxu0 0.0
    %3152 = vmatpush1.msra.mxu0 0.0
    %3153 = vmatprep.subr.mxu0 0.0
    %3154 = vmatpush1.msra.mxu0 0.0
    %3155 = vmatprep.subr.mxu0 0.0
    %3156 = vmatpush1.msra.mxu0 0.0
    %3157 = vmatprep.subr.mxu0 0.0
    %3158 = vmatpush1.msra.mxu0 0.0
    %3159 = vmatprep.subr.mxu0 0.0
    %3160 = vmatpush1.msra.mxu0 0.0
    %3161 = vmatprep.subr.mxu0 0.0
    %3162 = vmatpush1.msra.mxu0 0.0
    %3163 = vmatprep.mubr.f32.mxu0 0.0
    %3164 = vmatmul.mubr.f32.gmra.mrb[0].mxu0 %v3097
    %v3165 = vpop.f32.mrb[0].mxu0
    %v3166 = vadd.f32 0.0, %v3165
    %v3167 = vpop.f32.mrb[0].mxu0
    %3168 = vdwg.mxu0
    %3169 = vrot.lane.b32.xlu0 %v2136, 64
    %v3170 = vpop.permute.xlu0 %3169
    %v3173 = vsel %vm318, %v2858, 0
    %3175 = vmatprep.subr.mxu0 0.0
    %3176 = vmatpush1.msra.mxu0 %v3170
    %3177 = vmatprep.subr.mxu0 0.0
    %3178 = vmatpush1.msra.mxu0 0.0
    %3179 = vmatprep.subr.mxu0 0.0
    %3180 = vmatpush1.msra.mxu0 0.0
    %3181 = vmatprep.subr.mxu0 0.0
    %3182 = vmatpush1.msra.mxu0 0.0
    %3183 = vmatprep.subr.mxu0 0.0
    %3184 = vmatpush1.msra.mxu0 0.0
    %3185 = vmatprep.subr.mxu0 0.0
    %3186 = vmatpush1.msra.mxu0 0.0
    %3187 = vmatprep.subr.mxu0 0.0
    %3188 = vmatpush1.msra.mxu0 0.0
    %3189 = vmatprep.subr.mxu0 0.0
    %3190 = vmatpush1.msra.mxu0 0.0
    %3191 = vmatprep.subr.mxu0 0.0
    %3192 = vmatpush1.msra.mxu0 0.0
    %3193 = vmatprep.subr.mxu0 0.0
    %3194 = vmatpush1.msra.mxu0 0.0
    %3195 = vmatprep.subr.mxu0 0.0
    %3196 = vmatpush1.msra.mxu0 0.0
    %3197 = vmatprep.subr.mxu0 0.0
    %3198 = vmatpush1.msra.mxu0 0.0
    %3199 = vmatprep.subr.mxu0 0.0
    %3200 = vmatpush1.msra.mxu0 0.0
    %3201 = vmatprep.subr.mxu0 0.0
    %3202 = vmatpush1.msra.mxu0 0.0
    %3203 = vmatprep.subr.mxu0 0.0
    %3204 = vmatpush1.msra.mxu0 0.0
    %3205 = vmatprep.subr.mxu0 0.0
    %3206 = vmatpush1.msra.mxu0 0.0
    %3207 = vmatprep.subr.mxu0 0.0
    %3208 = vmatpush1.msra.mxu0 0.0
    %3209 = vmatprep.subr.mxu0 0.0
    %3210 = vmatpush1.msra.mxu0 0.0
    %3211 = vmatprep.subr.mxu0 0.0
    %3212 = vmatpush1.msra.mxu0 0.0
    %3213 = vmatprep.subr.mxu0 0.0
    %3214 = vmatpush1.msra.mxu0 0.0
    %3215 = vmatprep.subr.mxu0 0.0
    %3216 = vmatpush1.msra.mxu0 0.0
    %3217 = vmatprep.subr.mxu0 0.0
    %3218 = vmatpush1.msra.mxu0 0.0
    %3219 = vmatprep.subr.mxu0 0.0
    %3220 = vmatpush1.msra.mxu0 0.0
    %3221 = vmatprep.subr.mxu0 0.0
    %3222 = vmatpush1.msra.mxu0 0.0
    %3223 = vmatprep.subr.mxu0 0.0
    %3224 = vmatpush1.msra.mxu0 0.0
    %3225 = vmatprep.subr.mxu0 0.0
    %3226 = vmatpush1.msra.mxu0 0.0
    %3227 = vmatprep.subr.mxu0 0.0
    %3228 = vmatpush1.msra.mxu0 0.0
    %3229 = vmatprep.subr.mxu0 0.0
    %3230 = vmatpush1.msra.mxu0 0.0
    %3231 = vmatprep.subr.mxu0 0.0
    %3232 = vmatpush1.msra.mxu0 0.0
    %3233 = vmatprep.subr.mxu0 0.0
    %3234 = vmatpush1.msra.mxu0 0.0
    %3235 = vmatprep.subr.mxu0 0.0
    %3236 = vmatpush1.msra.mxu0 0.0
    %3237 = vmatprep.subr.mxu0 0.0
    %3238 = vmatpush1.msra.mxu0 0.0
    %3239 = vmatprep.mubr.f32.mxu0 0.0
    %3240 = vmatmul.mubr.f32.gmra.mrb[0].mxu0 %v3173
    %v3241 = vpop.f32.mrb[0].mxu0
    %v3242 = vadd.f32 0.0, %v3241
    %v3243 = vpop.f32.mrb[0].mxu0
    %3244 = vdwg.mxu0
    %3245 = vrot.lane.b32.xlu0 %v2148, 64
    %v3246 = vpop.permute.xlu0 %3245
    %v3249 = vsel %vm318, %v2860, 0
    %3251 = vmatprep.subr.mxu0 0.0
    %3252 = vmatpush1.msra.mxu0 %v3246
    %3253 = vmatprep.subr.mxu0 0.0
    %3254 = vmatpush1.msra.mxu0 0.0
    %3255 = vmatprep.subr.mxu0 0.0
    %3256 = vmatpush1.msra.mxu0 0.0
    %3257 = vmatprep.subr.mxu0 0.0
    %3258 = vmatpush1.msra.mxu0 0.0
    %3259 = vmatprep.subr.mxu0 0.0
    %3260 = vmatpush1.msra.mxu0 0.0
    %3261 = vmatprep.subr.mxu0 0.0
    %3262 = vmatpush1.msra.mxu0 0.0
    %3263 = vmatprep.subr.mxu0 0.0
    %3264 = vmatpush1.msra.mxu0 0.0
    %3265 = vmatprep.subr.mxu0 0.0
    %3266 = vmatpush1.msra.mxu0 0.0
    %3267 = vmatprep.subr.mxu0 0.0
    %3268 = vmatpush1.msra.mxu0 0.0
    %3269 = vmatprep.subr.mxu0 0.0
    %3270 = vmatpush1.msra.mxu0 0.0
    %3271 = vmatprep.subr.mxu0 0.0
    %3272 = vmatpush1.msra.mxu0 0.0
    %3273 = vmatprep.subr.mxu0 0.0
    %3274 = vmatpush1.msra.mxu0 0.0
    %3275 = vmatprep.subr.mxu0 0.0
    %3276 = vmatpush1.msra.mxu0 0.0
    %3277 = vmatprep.subr.mxu0 0.0
    %3278 = vmatpush1.msra.mxu0 0.0
    %3279 = vmatprep.subr.mxu0 0.0
    %3280 = vmatpush1.msra.mxu0 0.0
    %3281 = vmatprep.subr.mxu0 0.0
    %3282 = vmatpush1.msra.mxu0 0.0
    %3283 = vmatprep.subr.mxu0 0.0
    %3284 = vmatpush1.msra.mxu0 0.0
    %3285 = vmatprep.subr.mxu0 0.0
    %3286 = vmatpush1.msra.mxu0 0.0
    %3287 = vmatprep.subr.mxu0 0.0
    %3288 = vmatpush1.msra.mxu0 0.0
    %3289 = vmatprep.subr.mxu0 0.0
    %3290 = vmatpush1.msra.mxu0 0.0
    %3291 = vmatprep.subr.mxu0 0.0
    %3292 = vmatpush1.msra.mxu0 0.0
    %3293 = vmatprep.subr.mxu0 0.0
    %3294 = vmatpush1.msra.mxu0 0.0
    %3295 = vmatprep.subr.mxu0 0.0
    %3296 = vmatpush1.msra.mxu0 0.0
    %3297 = vmatprep.subr.mxu0 0.0
    %3298 = vmatpush1.msra.mxu0 0.0
    %3299 = vmatprep.subr.mxu0 0.0
    %3300 = vmatpush1.msra.mxu0 0.0
    %3301 = vmatprep.subr.mxu0 0.0
    %3302 = vmatpush1.msra.mxu0 0.0
    %3303 = vmatprep.subr.mxu0 0.0
    %3304 = vmatpush1.msra.mxu0 0.0
    %3305 = vmatprep.subr.mxu0 0.0
    %3306 = vmatpush1.msra.mxu0 0.0
    %3307 = vmatprep.subr.mxu0 0.0
    %3308 = vmatpush1.msra.mxu0 0.0
    %3309 = vmatprep.subr.mxu0 0.0
    %3310 = vmatpush1.msra.mxu0 0.0
    %3311 = vmatprep.subr.mxu0 0.0
    %3312 = vmatpush1.msra.mxu0 0.0
    %3313 = vmatprep.subr.mxu0 0.0
    %3314 = vmatpush1.msra.mxu0 0.0
    %3315 = vmatprep.mubr.f32.mxu0 0.0
    %3316 = vmatmul.mubr.f32.gmra.mrb[0].mxu0 %v3249
    %v3317 = vpop.f32.mrb[0].mxu0
    %v3318 = vadd.f32 0.0, %v3317
    %v3319 = vpop.f32.mrb[0].mxu0
    %3320 = vdwg.mxu0
    %3321 = vrot.lane.b32.xlu0 %v2150, 64
    %v3322 = vpop.permute.xlu0 %3321
    %v3325 = vsel %vm318, %v2862, 0
    %3327 = vmatprep.subr.mxu0 0.0
    %3328 = vmatpush1.msra.mxu0 %v3322
    %3329 = vmatprep.subr.mxu0 0.0
    %3330 = vmatpush1.msra.mxu0 0.0
    %3331 = vmatprep.subr.mxu0 0.0
    %3332 = vmatpush1.msra.mxu0 0.0
    %3333 = vmatprep.subr.mxu0 0.0
    %3334 = vmatpush1.msra.mxu0 0.0
    %3335 = vmatprep.subr.mxu0 0.0
    %3336 = vmatpush1.msra.mxu0 0.0
    %3337 = vmatprep.subr.mxu0 0.0
    %3338 = vmatpush1.msra.mxu0 0.0
    %3339 = vmatprep.subr.mxu0 0.0
    %3340 = vmatpush1.msra.mxu0 0.0
    %3341 = vmatprep.subr.mxu0 0.0
    %3342 = vmatpush1.msra.mxu0 0.0
    %3343 = vmatprep.subr.mxu0 0.0
    %3344 = vmatpush1.msra.mxu0 0.0
    %3345 = vmatprep.subr.mxu0 0.0
    %3346 = vmatpush1.msra.mxu0 0.0
    %3347 = vmatprep.subr.mxu0 0.0
    %3348 = vmatpush1.msra.mxu0 0.0
    %3349 = vmatprep.subr.mxu0 0.0
    %3350 = vmatpush1.msra.mxu0 0.0
    %3351 = vmatprep.subr.mxu0 0.0
    %3352 = vmatpush1.msra.mxu0 0.0
    %3353 = vmatprep.subr.mxu0 0.0
    %3354 = vmatpush1.msra.mxu0 0.0
    %3355 = vmatprep.subr.mxu0 0.0
    %3356 = vmatpush1.msra.mxu0 0.0
    %3357 = vmatprep.subr.mxu0 0.0
    %3358 = vmatpush1.msra.mxu0 0.0
    %3359 = vmatprep.subr.mxu0 0.0
    %3360 = vmatpush1.msra.mxu0 0.0
    %3361 = vmatprep.subr.mxu0 0.0
    %3362 = vmatpush1.msra.mxu0 0.0
    %3363 = vmatprep.subr.mxu0 0.0
    %3364 = vmatpush1.msra.mxu0 0.0
    %3365 = vmatprep.subr.mxu0 0.0
    %3366 = vmatpush1.msra.mxu0 0.0
    %3367 = vmatprep.subr.mxu0 0.0
    %3368 = vmatpush1.msra.mxu0 0.0
    %3369 = vmatprep.subr.mxu0 0.0
    %3370 = vmatpush1.msra.mxu0 0.0
    %3371 = vmatprep.subr.mxu0 0.0
    %3372 = vmatpush1.msra.mxu0 0.0
    %3373 = vmatprep.subr.mxu0 0.0
    %3374 = vmatpush1.msra.mxu0 0.0
    %3375 = vmatprep.subr.mxu0 0.0
    %3376 = vmatpush1.msra.mxu0 0.0
    %3377 = vmatprep.subr.mxu0 0.0
    %3378 = vmatpush1.msra.mxu0 0.0
    %3379 = vmatprep.subr.mxu0 0.0
    %3380 = vmatpush1.msra.mxu0 0.0
    %3381 = vmatprep.subr.mxu0 0.0
    %3382 = vmatpush1.msra.mxu0 0.0
    %3383 = vmatprep.subr.mxu0 0.0
    %3384 = vmatpush1.msra.mxu0 0.0
    %3385 = vmatprep.subr.mxu0 0.0
    %3386 = vmatpush1.msra.mxu0 0.0
    %3387 = vmatprep.subr.mxu0 0.0
    %3388 = vmatpush1.msra.mxu0 0.0
    %3389 = vmatprep.subr.mxu0 0.0
    %3390 = vmatpush1.msra.mxu0 0.0
    %3391 = vmatprep.mubr.f32.mxu0 0.0
    %3392 = vmatmul.mubr.f32.gmra.mrb[0].mxu0 %v3325
    %v3393 = vpop.f32.mrb[0].mxu0
    %v3394 = vadd.f32 0.0, %v3393
    %v3395 = vpop.f32.mrb[0].mxu0
    %3396 = vdwg.mxu0
    %3397 = vrot.lane.b32.xlu0 %v2152, 64
    %v3398 = vpop.permute.xlu0 %3397
    %v3401 = vsel %vm318, %v2864, 0
    %3403 = vmatprep.subr.mxu0 0.0
    %3404 = vmatpush1.msra.mxu0 %v3398
    %3405 = vmatprep.subr.mxu0 0.0
    %3406 = vmatpush1.msra.mxu0 0.0
    %3407 = vmatprep.subr.mxu0 0.0
    %3408 = vmatpush1.msra.mxu0 0.0
    %3409 = vmatprep.subr.mxu0 0.0
    %3410 = vmatpush1.msra.mxu0 0.0
    %3411 = vmatprep.subr.mxu0 0.0
    %3412 = vmatpush1.msra.mxu0 0.0
    %3413 = vmatprep.subr.mxu0 0.0
    %3414 = vmatpush1.msra.mxu0 0.0
    %3415 = vmatprep.subr.mxu0 0.0
    %3416 = vmatpush1.msra.mxu0 0.0
    %3417 = vmatprep.subr.mxu0 0.0
    %3418 = vmatpush1.msra.mxu0 0.0
    %3419 = vmatprep.subr.mxu0 0.0
    %3420 = vmatpush1.msra.mxu0 0.0
    %3421 = vmatprep.subr.mxu0 0.0
    %3422 = vmatpush1.msra.mxu0 0.0
    %3423 = vmatprep.subr.mxu0 0.0
    %3424 = vmatpush1.msra.mxu0 0.0
    %3425 = vmatprep.subr.mxu0 0.0
    %3426 = vmatpush1.msra.mxu0 0.0
    %3427 = vmatprep.subr.mxu0 0.0
    %3428 = vmatpush1.msra.mxu0 0.0
    %3429 = vmatprep.subr.mxu0 0.0
    %3430 = vmatpush1.msra.mxu0 0.0
    %3431 = vmatprep.subr.mxu0 0.0
    %3432 = vmatpush1.msra.mxu0 0.0
    %3433 = vmatprep.subr.mxu0 0.0
    %3434 = vmatpush1.msra.mxu0 0.0
    %3435 = vmatprep.subr.mxu0 0.0
    %3436 = vmatpush1.msra.mxu0 0.0
    %3437 = vmatprep.subr.mxu0 0.0
    %3438 = vmatpush1.msra.mxu0 0.0
    %3439 = vmatprep.subr.mxu0 0.0
    %3440 = vmatpush1.msra.mxu0 0.0
    %3441 = vmatprep.subr.mxu0 0.0
    %3442 = vmatpush1.msra.mxu0 0.0
    %3443 = vmatprep.subr.mxu0 0.0
    %3444 = vmatpush1.msra.mxu0 0.0
    %3445 = vmatprep.subr.mxu0 0.0
    %3446 = vmatpush1.msra.mxu0 0.0
    %3447 = vmatprep.subr.mxu0 0.0
    %3448 = vmatpush1.msra.mxu0 0.0
    %3449 = vmatprep.subr.mxu0 0.0
    %3450 = vmatpush1.msra.mxu0 0.0
    %3451 = vmatprep.subr.mxu0 0.0
    %3452 = vmatpush1.msra.mxu0 0.0
    %3453 = vmatprep.subr.mxu0 0.0
    %3454 = vmatpush1.msra.mxu0 0.0
    %3455 = vmatprep.subr.mxu0 0.0
    %3456 = vmatpush1.msra.mxu0 0.0
    %3457 = vmatprep.subr.mxu0 0.0
    %3458 = vmatpush1.msra.mxu0 0.0
    %3459 = vmatprep.subr.mxu0 0.0
    %3460 = vmatpush1.msra.mxu0 0.0
    %3461 = vmatprep.subr.mxu0 0.0
    %3462 = vmatpush1.msra.mxu0 0.0
    %3463 = vmatprep.subr.mxu0 0.0
    %3464 = vmatpush1.msra.mxu0 0.0
    %3465 = vmatprep.subr.mxu0 0.0
    %3466 = vmatpush1.msra.mxu0 0.0
    %3467 = vmatprep.mubr.f32.mxu0 0.0
    %3468 = vmatmul.mubr.f32.gmra.mrb[0].mxu0 %v3401
    %v3469 = vpop.f32.mrb[0].mxu0
    %v3470 = vadd.f32 0.0, %v3469
    %v3471 = vpop.f32.mrb[0].mxu0
    %3472 = vdwg.mxu0
    %3474 = vrot.lane.b32.xlu0 %v3014, 8
    %v3475 = vpop.permute.xlu0 %3474
    %3478 = vrot.lane.b32.xlu0 %v3090, 16
    %v3479 = vpop.permute.xlu0 %3478
    %3482 = vrot.lane.b32.xlu0 %v3166, 24
    %v3483 = vpop.permute.xlu0 %3482
    %v3485 = vsel %vm318, %v2938, %v3475
    %v3486 = vsel %vm1652, %v3485, %v3479
    %v3487 = vsel %vm1654, %v3486, %v3483
    %3489 = vrot.lane.b32.xlu0 %v3318, 8
    %v3490 = vpop.permute.xlu0 %3489
    %3493 = vrot.lane.b32.xlu0 %v3394, 16
    %v3494 = vpop.permute.xlu0 %3493
    %3497 = vrot.lane.b32.xlu0 %v3470, 24
    %v3498 = vpop.permute.xlu0 %3497
    %v3500 = vsel %vm318, %v3242, %v3490
    %v3501 = vsel %vm1652, %v3500, %v3494
    %v3502 = vsel %vm1654, %v3501, %v3498
    %s3503 = scalar_lea.vmem %s4, 32
    %v3504 = vld [vmem:[%s3503] sm:$0xff]
    %v3505 = vld [vmem:[%s3503 + $0x8] sm:$0xff]
    %v3506 = vld [vmem:[%s3503 + $0x10] sm:$0xff]
    %v3507 = vld [vmem:[%s3503 + $0x18] sm:$0xff]
    %v3509 = vsel %vm173, %v3487, 0
    %v3512 = vsel %vm173, %v3502, 0
    %3514 = vmatprep.subr.mxu0 0.0
    %3515 = vmatpush1.msra.mxu0 %v3504
    %3516 = vmatprep.subr.mxu0 0.0
    %3517 = vmatpush1.msra.mxu0 %v3505
    %3518 = vmatprep.subr.mxu0 0.0
    %3519 = vmatpush1.msra.mxu0 %v3506
    %3520 = vmatprep.subr.mxu0 0.0
    %3521 = vmatpush1.msra.mxu0 %v3507
    %3522 = vmatprep.subr.mxu0 0.0
    %3523 = vmatpush1.msra.mxu0 0.0
    %3524 = vmatprep.subr.mxu0 0.0
    %3525 = vmatpush1.msra.mxu0 0.0
    %3526 = vmatprep.subr.mxu0 0.0
    %3527 = vmatpush1.msra.mxu0 0.0
    %3528 = vmatprep.subr.mxu0 0.0
    %3529 = vmatpush1.msra.mxu0 0.0
    %3530 = vmatprep.subr.mxu0 0.0
    %3531 = vmatpush1.msra.mxu0 0.0
    %3532 = vmatprep.subr.mxu0 0.0
    %3533 = vmatpush1.msra.mxu0 0.0
    %3534 = vmatprep.subr.mxu0 0.0
    %3535 = vmatpush1.msra.mxu0 0.0
    %3536 = vmatprep.subr.mxu0 0.0
    %3537 = vmatpush1.msra.mxu0 0.0
    %3538 = vmatprep.subr.mxu0 0.0
    %3539 = vmatpush1.msra.mxu0 0.0
    %3540 = vmatprep.subr.mxu0 0.0
    %3541 = vmatpush1.msra.mxu0 0.0
    %3542 = vmatprep.subr.mxu0 0.0
    %3543 = vmatpush1.msra.mxu0 0.0
    %3544 = vmatprep.subr.mxu0 0.0
    %3545 = vmatpush1.msra.mxu0 0.0
    %3546 = vmatprep.subr.mxu0 0.0
    %3547 = vmatpush1.msra.mxu0 0.0
    %3548 = vmatprep.subr.mxu0 0.0
    %3549 = vmatpush1.msra.mxu0 0.0
    %3550 = vmatprep.subr.mxu0 0.0
    %3551 = vmatpush1.msra.mxu0 0.0
    %3552 = vmatprep.subr.mxu0 0.0
    %3553 = vmatpush1.msra.mxu0 0.0
    %3554 = vmatprep.subr.mxu0 0.0
    %3555 = vmatpush1.msra.mxu0 0.0
    %3556 = vmatprep.subr.mxu0 0.0
    %3557 = vmatpush1.msra.mxu0 0.0
    %3558 = vmatprep.subr.mxu0 0.0
    %3559 = vmatpush1.msra.mxu0 0.0
    %3560 = vmatprep.subr.mxu0 0.0
    %3561 = vmatpush1.msra.mxu0 0.0
    %3562 = vmatprep.subr.mxu0 0.0
    %3563 = vmatpush1.msra.mxu0 0.0
    %3564 = vmatprep.subr.mxu0 0.0
    %3565 = vmatpush1.msra.mxu0 0.0
    %3566 = vmatprep.subr.mxu0 0.0
    %3567 = vmatpush1.msra.mxu0 0.0
    %3568 = vmatprep.subr.mxu0 0.0
    %3569 = vmatpush1.msra.mxu0 0.0
    %3570 = vmatprep.subr.mxu0 0.0
    %3571 = vmatpush1.msra.mxu0 0.0
    %3572 = vmatprep.subr.mxu0 0.0
    %3573 = vmatpush1.msra.mxu0 0.0
    %3574 = vmatprep.subr.mxu0 0.0
    %3575 = vmatpush1.msra.mxu0 0.0
    %3576 = vmatprep.subr.mxu0 0.0
    %3577 = vmatpush1.msra.mxu0 0.0
    %3578 = vmatprep.mubr.f32.mxu0 0.0
    %3579 = vmatmul.mubr.f32.gmra.mrb[0].mxu0 %v3509
    %v3580 = vpop.f32.mrb[0].mxu0
    %v3581 = vadd.f32 0.0, %v3580
    %v3582 = vpop.f32.mrb[0].mxu0
    %3583 = vmatprep.mubr.f32.mxu0 0.0
    %3584 = vmatmul.mubr.f32.gmra.mrb[0].mxu0 %v3512
    %v3585 = vpop.f32.mrb[0].mxu0
    %v3586 = vadd.f32 0.0, %v3585
    %v3587 = vpop.f32.mrb[0].mxu0
    %3588 = vdwg.mxu0
    %v3589 = vadd.f32 %v2005, %v3581
    %v3590 = vadd.f32 %v2006, %v3586
    %s3591 = scalar_lea.vmem %s5, 1
    %v3592 = vld [vmem:[%s3591] sm:$0x1]
    %v3594 = vlaneseq
    %v3595 = vshrl.u32 %v3594, 7
    %v3596 = vsub.s32 0, %v3595
    %v3597 = vrot.slane %v3592, %v3596
    %v3599 = vadd.f32 %v3589, %v3597
    %v3600 = vadd.f32 %v3590, %v3597
    %s3601 = scalar_lea.vmem %s8, 1
    %v3602 = vld [vmem:[%s3601] sm:$0x1]
    %s3603 = scalar_lea.vmem %s9, 1
    %v3604 = vld [vmem:[%s3603] sm:$0x1]
    %v3605 = vsel %vm173, %v3599, 0.0
    %3606 = vadd.xlane.f32.xlu0 %v3605
    %v3607 = vpop.xlane.xlu0 %3606
    %v3608 = vsel %vm173, %v3600, 0.0
    %3609 = vadd.xlane.f32.xlu0 %v3608
    %v3610 = vpop.xlane.xlu0 %3609
    %v3611 = vmul.f32 %v3607, %v180
    %v3612 = vmul.f32 %v3610, %v180
    %v3613 = vsub.f32 %v3599, %v3611
    %v3614 = vsub.f32 %v3600, %v3612
    %v3615 = vmul.f32 %v3613, %v3613
    %v3616 = vmul.f32 %v3614, %v3614
    %v3617 = vsel %vm173, %v3615, 0.0
    %3618 = vadd.xlane.f32.xlu0 %v3617
    %v3619 = vpop.xlane.xlu0 %3618
    %v3620 = vsel %vm173, %v3616, 0.0
    %3621 = vadd.xlane.f32.xlu0 %v3620
    %v3622 = vpop.xlane.xlu0 %3621
    %v3623 = vmul.f32 %v3619, %v180
    %v3624 = vmul.f32 %v3622, %v180
    %v3625 = vadd.f32 %v3623, 1e-05
    %v3626 = vadd.f32 %v3624, 1e-05
    %v3627 = vrsqrt.pop %v3625
    %v3628 = vrsqrt.pop %v3626
    %v3629 = vmul.f32 %v3613, %v3627
    %v3630 = vmul.f32 %v3614, %v3628
    %v3632 = vlaneseq
    %v3633 = vshrl.u32 %v3632, 7
    %v3634 = vsub.s32 0, %v3633
    %v3635 = vrot.slane %v3602, %v3634
    %v3637 = vmul.f32 %v3629, %v3635
    %v3638 = vmul.f32 %v3630, %v3635
    %v3640 = vlaneseq
    %v3641 = vshrl.u32 %v3640, 7
    %v3642 = vsub.s32 0, %v3641
    %v3643 = vrot.slane %v3604, %v3642
    %v3645 = vadd.f32 %v3637, %v3643
    %v3646 = vadd.f32 %v3638, %v3643
    %s3647 = scalar_lea.vmem %s10, 32
    %v3648 = vld [vmem:[%s3647] sm:$0xff]
    %v3649 = vld [vmem:[%s3647 + $0x8] sm:$0xff]
    %v3650 = vld [vmem:[%s3647 + $0x10] sm:$0xff]
    %v3651 = vld [vmem:[%s3647 + $0x18] sm:$0xff]
    %s3652 = scalar_lea.vmem %s11, 1
    %v3653 = vld [vmem:[%s3652] sm:$0x1]
    %v3655 = vlaneseq
    %v3656 = vshrl.u32 %v3655, 7
    %v3657 = vsub.s32 0, %v3656
    %v3658 = vrot.slane %v3653, %v3657
    %v3661 = vsel %vm173, %v3645, 0
    %v3664 = vsel %vm173, %v3646, 0
    %3666 = vmatprep.subr.mxu0 0.0
    %3667 = vmatpush1.msra.mxu0 %v3648
    %3668 = vmatprep.subr.mxu0 0.0
    %3669 = vmatpush1.msra.mxu0 %v3649
    %3670 = vmatprep.subr.mxu0 0.0
    %3671 = vmatpush1.msra.mxu0 %v3650
    %3672 = vmatprep.subr.mxu0 0.0
    %3673 = vmatpush1.msra.mxu0 %v3651
    %3674 = vmatprep.subr.mxu0 0.0
    %3675 = vmatpush1.msra.mxu0 0.0
    %3676 = vmatprep.subr.mxu0 0.0
    %3677 = vmatpush1.msra.mxu0 0.0
    %3678 = vmatprep.subr.mxu0 0.0
    %3679 = vmatpush1.msra.mxu0 0.0
    %3680 = vmatprep.subr.mxu0 0.0
    %3681 = vmatpush1.msra.mxu0 0.0
    %3682 = vmatprep.subr.mxu0 0.0
    %3683 = vmatpush1.msra.mxu0 0.0
    %3684 = vmatprep.subr.mxu0 0.0
    %3685 = vmatpush1.msra.mxu0 0.0
    %3686 = vmatprep.subr.mxu0 0.0
    %3687 = vmatpush1.msra.mxu0 0.0
    %3688 = vmatprep.subr.mxu0 0.0
    %3689 = vmatpush1.msra.mxu0 0.0
    %3690 = vmatprep.subr.mxu0 0.0
    %3691 = vmatpush1.msra.mxu0 0.0
    %3692 = vmatprep.subr.mxu0 0.0
    %3693 = vmatpush1.msra.mxu0 0.0
    %3694 = vmatprep.subr.mxu0 0.0
    %3695 = vmatpush1.msra.mxu0 0.0
    %3696 = vmatprep.subr.mxu0 0.0
    %3697 = vmatpush1.msra.mxu0 0.0
    %3698 = vmatprep.subr.mxu0 0.0
    %3699 = vmatpush1.msra.mxu0 0.0
    %3700 = vmatprep.subr.mxu0 0.0
    %3701 = vmatpush1.msra.mxu0 0.0
    %3702 = vmatprep.subr.mxu0 0.0
    %3703 = vmatpush1.msra.mxu0 0.0
    %3704 = vmatprep.subr.mxu0 0.0
    %3705 = vmatpush1.msra.mxu0 0.0
    %3706 = vmatprep.subr.mxu0 0.0
    %3707 = vmatpush1.msra.mxu0 0.0
    %3708 = vmatprep.subr.mxu0 0.0
    %3709 = vmatpush1.msra.mxu0 0.0
    %3710 = vmatprep.subr.mxu0 0.0
    %3711 = vmatpush1.msra.mxu0 0.0
    %3712 = vmatprep.subr.mxu0 0.0
    %3713 = vmatpush1.msra.mxu0 0.0
    %3714 = vmatprep.subr.mxu0 0.0
    %3715 = vmatpush1.msra.mxu0 0.0
    %3716 = vmatprep.subr.mxu0 0.0
    %3717 = vmatpush1.msra.mxu0 0.0
    %3718 = vmatprep.subr.mxu0 0.0
    %3719 = vmatpush1.msra.mxu0 0.0
    %3720 = vmatprep.subr.mxu0 0.0
    %3721 = vmatpush1.msra.mxu0 0.0
    %3722 = vmatprep.subr.mxu0 0.0
    %3723 = vmatpush1.msra.mxu0 0.0
    %3724 = vmatprep.subr.mxu0 0.0
    %3725 = vmatpush1.msra.mxu0 0.0
    %3726 = vmatprep.subr.mxu0 0.0
    %3727 = vmatpush1.msra.mxu0 0.0
    %3728 = vmatprep.subr.mxu0 0.0
    %3729 = vmatpush1.msra.mxu0 0.0
    %3730 = vmatprep.mubr.f32.mxu0 0.0
    %3731 = vmatmul.mubr.f32.gmra.mrb[0].mxu0 %v3661
    %v3732 = vpop.f32.mrb[0].mxu0
    %v3733 = vadd.f32 %v3658, %v3732
    %v3734 = vpop.f32.mrb[0].mxu0
    %3735 = vmatprep.mubr.f32.mxu0 0.0
    %3736 = vmatmul.mubr.f32.gmra.mrb[0].mxu0 %v3664
    %v3737 = vpop.f32.mrb[0].mxu0
    %v3738 = vadd.f32 %v3658, %v3737
    %v3739 = vpop.f32.mrb[0].mxu0
    %3740 = vdwg.mxu0
    %v3741 = vmax.f32 %v3733, 0.0
    %v3742 = vmax.f32 %v3738, 0.0
    %s3743 = scalar_lea.vmem %s12, 128
    %v3744 = vld [vmem:[%s3743] sm:$0xff]
    %v3745 = vld [vmem:[%s3743 + $0x8] sm:$0xff]
    %v3746 = vld [vmem:[%s3743 + $0x10] sm:$0xff]
    %v3747 = vld [vmem:[%s3743 + $0x18] sm:$0xff]
    %v3748 = vld [vmem:[%s3743 + $0x20] sm:$0xff]
    %v3749 = vld [vmem:[%s3743 + $0x28] sm:$0xff]
    %v3750 = vld [vmem:[%s3743 + $0x30] sm:$0xff]
    %v3751 = vld [vmem:[%s3743 + $0x38] sm:$0xff]
    %v3752 = vld [vmem:[%s3743 + $0x40] sm:$0xff]
    %v3753 = vld [vmem:[%s3743 + $0x48] sm:$0xff]
    %v3754 = vld [vmem:[%s3743 + $0x50] sm:$0xff]
    %v3755 = vld [vmem:[%s3743 + $0x58] sm:$0xff]
    %v3756 = vld [vmem:[%s3743 + $0x60] sm:$0xff]
    %v3757 = vld [vmem:[%s3743 + $0x68] sm:$0xff]
    %v3758 = vld [vmem:[%s3743 + $0x70] sm:$0xff]
    %v3759 = vld [vmem:[%s3743 + $0x78] sm:$0xff]
    %3760 = vmatprep.subr.mxu0 0.0
    %3761 = vmatpush1.msra.mxu0 %v3744
    %3762 = vmatprep.subr.mxu0 0.0
    %3763 = vmatpush1.msra.mxu0 %v3745
    %3764 = vmatprep.subr.mxu0 0.0
    %3765 = vmatpush1.msra.mxu0 %v3746
    %3766 = vmatprep.subr.mxu0 0.0
    %3767 = vmatpush1.msra.mxu0 %v3747
    %3768 = vmatprep.subr.mxu0 0.0
    %3769 = vmatpush1.msra.mxu0 %v3748
    %3770 = vmatprep.subr.mxu0 0.0
    %3771 = vmatpush1.msra.mxu0 %v3749
    %3772 = vmatprep.subr.mxu0 0.0
    %3773 = vmatpush1.msra.mxu0 %v3750
    %3774 = vmatprep.subr.mxu0 0.0
    %3775 = vmatpush1.msra.mxu0 %v3751
    %3776 = vmatprep.subr.mxu0 0.0
    %3777 = vmatpush1.msra.mxu0 %v3752
    %3778 = vmatprep.subr.mxu0 0.0
    %3779 = vmatpush1.msra.mxu0 %v3753
    %3780 = vmatprep.subr.mxu0 0.0
    %3781 = vmatpush1.msra.mxu0 %v3754
    %3782 = vmatprep.subr.mxu0 0.0
    %3783 = vmatpush1.msra.mxu0 %v3755
    %3784 = vmatprep.subr.mxu0 0.0
    %3785 = vmatpush1.msra.mxu0 %v3756
    %3786 = vmatprep.subr.mxu0 0.0
    %3787 = vmatpush1.msra.mxu0 %v3757
    %3788 = vmatprep.subr.mxu0 0.0
    %3789 = vmatpush1.msra.mxu0 %v3758
    %3790 = vmatprep.subr.mxu0 0.0
    %3791 = vmatpush1.msra.mxu0 %v3759
    %3792 = vmatprep.subr.mxu0 0.0
    %3793 = vmatpush1.msra.mxu0 0.0
    %3794 = vmatprep.subr.mxu0 0.0
    %3795 = vmatpush1.msra.mxu0 0.0
    %3796 = vmatprep.subr.mxu0 0.0
    %3797 = vmatpush1.msra.mxu0 0.0
    %3798 = vmatprep.subr.mxu0 0.0
    %3799 = vmatpush1.msra.mxu0 0.0
    %3800 = vmatprep.subr.mxu0 0.0
    %3801 = vmatpush1.msra.mxu0 0.0
    %3802 = vmatprep.subr.mxu0 0.0
    %3803 = vmatpush1.msra.mxu0 0.0
    %3804 = vmatprep.subr.mxu0 0.0
    %3805 = vmatpush1.msra.mxu0 0.0
    %3806 = vmatprep.subr.mxu0 0.0
    %3807 = vmatpush1.msra.mxu0 0.0
    %3808 = vmatprep.subr.mxu0 0.0
    %3809 = vmatpush1.msra.mxu0 0.0
    %3810 = vmatprep.subr.mxu0 0.0
    %3811 = vmatpush1.msra.mxu0 0.0
    %3812 = vmatprep.subr.mxu0 0.0
    %3813 = vmatpush1.msra.mxu0 0.0
    %3814 = vmatprep.subr.mxu0 0.0
    %3815 = vmatpush1.msra.mxu0 0.0
    %3816 = vmatprep.subr.mxu0 0.0
    %3817 = vmatpush1.msra.mxu0 0.0
    %3818 = vmatprep.subr.mxu0 0.0
    %3819 = vmatpush1.msra.mxu0 0.0
    %3820 = vmatprep.subr.mxu0 0.0
    %3821 = vmatpush1.msra.mxu0 0.0
    %3822 = vmatprep.subr.mxu0 0.0
    %3823 = vmatpush1.msra.mxu0 0.0
    %3824 = vmatprep.mubr.f32.mxu0 0.0
    %3825 = vmatmul.mubr.f32.gmra.mrb[0].mxu0 %v3741
    %v3826 = vpop.f32.mrb[0].mxu0
    %v3827 = vadd.f32 0.0, %v3826
    %v3828 = vpop.f32.mrb[0].mxu0
    %3829 = vmatprep.mubr.f32.mxu0 0.0
    %3830 = vmatmul.mubr.f32.gmra.mrb[0].mxu0 %v3742
    %v3831 = vpop.f32.mrb[0].mxu0
    %v3832 = vadd.f32 0.0, %v3831
    %v3833 = vpop.f32.mrb[0].mxu0
    %3834 = vdwg.mxu0
    %v3835 = vadd.f32 %v3599, %v3827
    %v3836 = vadd.f32 %v3600, %v3832
    %s3837 = scalar_lea.vmem %s13, 1
    %v3838 = vld [vmem:[%s3837] sm:$0x1]
    %v3840 = vlaneseq
    %v3841 = vshrl.u32 %v3840, 7
    %v3842 = vsub.s32 0, %v3841
    %v3843 = vrot.slane %v3838, %v3842
    %v3845 = vadd.f32 %v3835, %v3843
    %v3846 = vadd.f32 %v3836, %v3843
    %v3847 = vld [vmem:[%s14] sm:$0x1]
    %v3848 = vld [vmem:[%s15] sm:$0x1]
    %v3849 = vsel %vm173, %v3845, 0.0
    %3850 = vadd.xlane.f32.xlu0 %v3849
    %v3851 = vpop.xlane.xlu0 %3850
    %v3852 = vsel %vm173, %v3846, 0.0
    %3853 = vadd.xlane.f32.xlu0 %v3852
    %v3854 = vpop.xlane.xlu0 %3853
    %v3855 = vmul.f32 %v3851, %v180
    %v3856 = vmul.f32 %v3854, %v180
    %v3857 = vsub.f32 %v3845, %v3855
    %v3858 = vsub.f32 %v3846, %v3856
    %v3859 = vmul.f32 %v3857, %v3857
    %v3860 = vmul.f32 %v3858, %v3858
    %v3861 = vsel %vm173, %v3859, 0.0
    %3862 = vadd.xlane.f32.xlu0 %v3861
    %v3863 = vpop.xlane.xlu0 %3862
    %v3864 = vsel %vm173, %v3860, 0.0
    %3865 = vadd.xlane.f32.xlu0 %v3864
    %v3866 = vpop.xlane.xlu0 %3865
    %v3867 = vmul.f32 %v3863, %v180
    %v3868 = vmul.f32 %v3866, %v180
    %v3869 = vadd.f32 %v3867, 1e-05
    %v3870 = vadd.f32 %v3868, 1e-05
    %v3871 = vrsqrt.pop %v3869
    %v3872 = vrsqrt.pop %v3870
    %v3873 = vmul.f32 %v3857, %v3871
    %v3874 = vmul.f32 %v3858, %v3872
    %v3876 = vlaneseq
    %v3877 = vshrl.u32 %v3876, 7
    %v3878 = vsub.s32 0, %v3877
    %v3879 = vrot.slane %v3847, %v3878
    %v3881 = vmul.f32 %v3873, %v3879
    %v3882 = vmul.f32 %v3874, %v3879
    %v3884 = vlaneseq
    %v3885 = vshrl.u32 %v3884, 7
    %v3886 = vsub.s32 0, %v3885
    %v3887 = vrot.slane %v3848, %v3886
    %v3889 = vadd.f32 %v3881, %v3887
    %v3890 = vadd.f32 %v3882, %v3887
    %v3891 = vld [vmem:[%s16] sm:$0xff]
    %v3892 = vld [vmem:[%s16 + $0x8] sm:$0xff]
    %v3893 = vld [vmem:[%s16 + $0x10] sm:$0xff]
    %v3894 = vld [vmem:[%s16 + $0x18] sm:$0xff]
    %v3895 = vld [vmem:[%s17] sm:$0x1]
    %v3897 = vlaneseq
    %v3898 = vshrl.u32 %v3897, 7
    %v3899 = vsub.s32 0, %v3898
    %v3900 = vrot.slane %v3895, %v3899
    %v3903 = vsel %vm173, %v3889, 0
    %v3906 = vsel %vm173, %v3890, 0
    %3908 = vmatprep.subr.mxu0 0.0
    %3909 = vmatpush1.msra.mxu0 %v3891
    %3910 = vmatprep.subr.mxu0 0.0
    %3911 = vmatpush1.msra.mxu0 %v3892
    %3912 = vmatprep.subr.mxu0 0.0
    %3913 = vmatpush1.msra.mxu0 %v3893
    %3914 = vmatprep.subr.mxu0 0.0
    %3915 = vmatpush1.msra.mxu0 %v3894
    %3916 = vmatprep.subr.mxu0 0.0
    %3917 = vmatpush1.msra.mxu0 0.0
    %3918 = vmatprep.subr.mxu0 0.0
    %3919 = vmatpush1.msra.mxu0 0.0
    %3920 = vmatprep.subr.mxu0 0.0
    %3921 = vmatpush1.msra.mxu0 0.0
    %3922 = vmatprep.subr.mxu0 0.0
    %3923 = vmatpush1.msra.mxu0 0.0
    %3924 = vmatprep.subr.mxu0 0.0
    %3925 = vmatpush1.msra.mxu0 0.0
    %3926 = vmatprep.subr.mxu0 0.0
    %3927 = vmatpush1.msra.mxu0 0.0
    %3928 = vmatprep.subr.mxu0 0.0
    %3929 = vmatpush1.msra.mxu0 0.0
    %3930 = vmatprep.subr.mxu0 0.0
    %3931 = vmatpush1.msra.mxu0 0.0
    %3932 = vmatprep.subr.mxu0 0.0
    %3933 = vmatpush1.msra.mxu0 0.0
    %3934 = vmatprep.subr.mxu0 0.0
    %3935 = vmatpush1.msra.mxu0 0.0
    %3936 = vmatprep.subr.mxu0 0.0
    %3937 = vmatpush1.msra.mxu0 0.0
    %3938 = vmatprep.subr.mxu0 0.0
    %3939 = vmatpush1.msra.mxu0 0.0
    %3940 = vmatprep.subr.mxu0 0.0
    %3941 = vmatpush1.msra.mxu0 0.0
    %3942 = vmatprep.subr.mxu0 0.0
    %3943 = vmatpush1.msra.mxu0 0.0
    %3944 = vmatprep.subr.mxu0 0.0
    %3945 = vmatpush1.msra.mxu0 0.0
    %3946 = vmatprep.subr.mxu0 0.0
    %3947 = vmatpush1.msra.mxu0 0.0
    %3948 = vmatprep.subr.mxu0 0.0
    %3949 = vmatpush1.msra.mxu0 0.0
    %3950 = vmatprep.subr.mxu0 0.0
    %3951 = vmatpush1.msra.mxu0 0.0
    %3952 = vmatprep.subr.mxu0 0.0
    %3953 = vmatpush1.msra.mxu0 0.0
    %3954 = vmatprep.subr.mxu0 0.0
    %3955 = vmatpush1.msra.mxu0 0.0
    %3956 = vmatprep.subr.mxu0 0.0
    %3957 = vmatpush1.msra.mxu0 0.0
    %3958 = vmatprep.subr.mxu0 0.0
    %3959 = vmatpush1.msra.mxu0 0.0
    %3960 = vmatprep.subr.mxu0 0.0
    %3961 = vmatpush1.msra.mxu0 0.0
    %3962 = vmatprep.subr.mxu0 0.0
    %3963 = vmatpush1.msra.mxu0 0.0
    %3964 = vmatprep.subr.mxu0 0.0
    %3965 = vmatpush1.msra.mxu0 0.0
    %3966 = vmatprep.subr.mxu0 0.0
    %3967 = vmatpush1.msra.mxu0 0.0
    %3968 = vmatprep.subr.mxu0 0.0
    %3969 = vmatpush1.msra.mxu0 0.0
    %3970 = vmatprep.subr.mxu0 0.0
    %3971 = vmatpush1.msra.mxu0 0.0
    %3972 = vmatprep.mubr.f32.mxu0 0.0
    %3973 = vmatmul.mubr.f32.gmra.mrb[0].mxu0 %v3903
    %v3974 = vpop.f32.mrb[0].mxu0
    %v3975 = vadd.f32 %v3900, %v3974
    %v3976 = vpop.f32.mrb[0].mxu0
    %3977 = vmatprep.mubr.f32.mxu0 0.0
    %3978 = vmatmul.mubr.f32.gmra.mrb[0].mxu0 %v3906
    %v3979 = vpop.f32.mrb[0].mxu0
    %v3980 = vadd.f32 %v3900, %v3979
    %v3981 = vpop.f32.mrb[0].mxu0
    %3982 = vdwg.mxu0
    %3983 = vst [vmem:[#allocation2] sm:$0xff] %v3975
    %3984 = vst [vmem:[#allocation2 + $0x8] sm:$0xff] %v3980
    // Predicated region
    $region74: #{gpt_forward_pallas.1} parent=1 // pred_check
      _
    $region75: #{gpt_forward_pallas.1} parent=1 // pred_check_branch
      %3986 = sbr.rel (0) target = $region77
    $region76: #{gpt_forward_pallas.1} parent=1 // pred_region
      %s3988 = ssub.s32 256, 256
      %3989 = vsyncadd [#allocation3], %s3988
      %s3990 = sshll.u32 [#allocation2], 4
      %s3991 = int_to_ptr.vmem [resolvable:$true] %s3990
      %3996 = dma.vmem_to_hbm [thread:$0]  %s3991, 256, %s18, [#allocation3], 128, 128, 8
    $region77: #{gpt_forward_pallas.1} parent=1 // pred_fallthru
      _
    // Predicated region
    $region78: #{gpt_forward_pallas.1} parent=1 // pred_check
      _
    $region79: #{gpt_forward_pallas.1} parent=1 // pred_check_branch
      %3998 = sbr.rel (0) target = $region81
    $region80: #{gpt_forward_pallas.1} parent=1 // pred_region
      %3999 = dma.done [#allocation3], 256
    $region81: #{gpt_forward_pallas.1} parent=1 // pred_fallthru
      _
    %4000 = vsyncpa [#allocation3], 1

</llo_original>
